<compile_context>
chip_gen: v6e
topology: v6e:2x2x1
jax: 0.10.0
libtpu: 0.0.40
codegen_flags: <defaults>
</compile_context>

<pallas_src>
import functools
import math

import jax
import jax.numpy as jnp
from jax import lax
from jax.experimental import pallas as pl
from jax.experimental.pallas import tpu as pltpu


# ---------------------------------------------------------------------------
# In-kernel helpers (operate on values / refs inside the Pallas kernel)
# ---------------------------------------------------------------------------

def _layer_norm(y, gamma, beta, eps):
    """Biased-variance LayerNorm over the last axis (matches PyTorch)."""
    mu = jnp.mean(y, axis=-1, keepdims=True)
    var = jnp.mean((y - mu) ** 2, axis=-1, keepdims=True)
    return (y - mu) * lax.rsqrt(var + eps) * gamma + beta


def _mha_add_ln(x_res, q, k, v, bias, wo, bo, gamma, beta, ctx_ref, *,
                num_heads, scale, eps):
    """Multi-head attention core + output proj + residual add + LayerNorm.

    x_res/q: (Sq, D) f32, k/v: (Sk, D) f32, bias: (Sq, Sk) f32 additive mask,
    wo: (D, D) bf16, ctx_ref: (Sq, D) f32 VMEM scratch.
    """
    _, D = q.shape
    dk = D // num_heads
    qb = (q * scale).astype(jnp.bfloat16)            # fold 1/sqrt(dk) into Q once
    kb = k.astype(jnp.bfloat16)
    vb = v.astype(jnp.bfloat16)

    for h in range(num_heads):                        # static unroll over heads
        sl = slice(h * dk, (h + 1) * dk)
        # contract over dk without an explicit transpose
        s = lax.dot_general(qb[:, sl], kb[:, sl], (((1,), (1,)), ((), ())),
                            preferred_element_type=jnp.float32)       # (Sq, Sk)
        s = s + bias                                  # additive mask (0 / -1e9)
        s = s - jnp.max(s, axis=-1, keepdims=True)
        p = jnp.exp(s)
        p = p * pl.reciprocal(jnp.sum(p, axis=-1, keepdims=True), approx=True)
        # write this head's context into its lane slice of the VMEM scratch
        ctx_ref[:, sl] = jnp.dot(p.astype(jnp.bfloat16), vb[:, sl],
                                 preferred_element_type=jnp.float32)

    out = jnp.dot(ctx_ref[...].astype(jnp.bfloat16), wo,
                  preferred_element_type=jnp.float32) + bo
    return _layer_norm(out + x_res, gamma, beta, eps)


# ---------------------------------------------------------------------------
# Fused decoder-layer Pallas kernel (self-attn + cross-attn + FFN, each with
# output projection, residual add and LayerNorm)
# ---------------------------------------------------------------------------

def _decoder_layer_kernel(x_ref, enc_ref, sbias_ref, cbias_ref,
                          sa_wqkv_ref, sa_bqkv_ref, sa_wo_ref, sa_bo_ref,
                          ln1g_ref, ln1b_ref,
                          ca_wqkv_ref, ca_bqkv_ref, ca_wo_ref, ca_bo_ref,
                          ln2g_ref, ln2b_ref,
                          w1_ref, b1_ref, w2_ref, b2_ref, ln3g_ref, ln3b_ref,
                          o_ref, ctx_ref, *, num_heads, scale, eps):
    x = x_ref[0]                                      # (S, D)  f32
    enc = enc_ref[0]                                  # (S_enc, D)  bf16
    D = x.shape[-1]

    # ---- masked self-attention + Add & Norm ----
    qkv = jnp.dot(x.astype(jnp.bfloat16), sa_wqkv_ref[...],
                  preferred_element_type=jnp.float32) + sa_bqkv_ref[...]   # (S, 3D)
    x = _mha_add_ln(x, qkv[:, :D], qkv[:, D:2 * D], qkv[:, 2 * D:],
                    sbias_ref[0], sa_wo_ref[...], sa_bo_ref[...],
                    ln1g_ref[...], ln1b_ref[...], ctx_ref,
                    num_heads=num_heads, scale=scale, eps=eps)

    # ---- encoder-decoder cross-attention + Add & Norm ----
    w = ca_wqkv_ref[...]                              # (D, 3D) bf16: [Wq | Wk | Wv]
    bqkv = ca_bqkv_ref[...]                           # (1, 3D) f32
    q = jnp.dot(x.astype(jnp.bfloat16), w[:, :D],
                preferred_element_type=jnp.float32) + bqkv[:, :D]
    kv = jnp.dot(enc, w[:, D:],
                 preferred_element_type=jnp.float32) + bqkv[:, D:]         # (S_enc, 2D)
    x = _mha_add_ln(x, q, kv[:, :D], kv[:, D:],
                    cbias_ref[0], ca_wo_ref[...], ca_bo_ref[...],
                    ln2g_ref[...], ln2b_ref[...], ctx_ref,
                    num_heads=num_heads, scale=scale, eps=eps)

    # ---- position-wise FFN + Add & Norm (dff intermediate never leaves VMEM) ----
    h = jnp.dot(x.astype(jnp.bfloat16), w1_ref[...],
                preferred_element_type=jnp.float32) + b1_ref[...]
    h = jnp.maximum(h, 0.0)                           # ReLU
    ff = jnp.dot(h.astype(jnp.bfloat16), w2_ref[...],
                 preferred_element_type=jnp.float32) + b2_ref[...]
    o_ref[0] = _layer_norm(ff + x, ln3g_ref[...], ln3b_ref[...], eps)


# ---------------------------------------------------------------------------
# pallas_call wrapper (one call per decoder layer)
# ---------------------------------------------------------------------------

def decoder_layer_fused(x, enc_bf, self_bias, cross_bias, p, num_heads, eps=1e-5):
    """x: (B, S, D) f32 decoder input; enc_bf: (B, S_enc, D) bf16 encoder output."""
    B, S, D = x.shape
    S_enc = enc_bf.shape[1]
    dff = p["w1"].shape[1]
    scale = 1.0 / math.sqrt(D // num_heads)
    sa, ca = p["self_attn"], p["cross_attn"]

    kern = functools.partial(_decoder_layer_kernel,
                             num_heads=num_heads, scale=scale, eps=eps)

    def wspec(r, c):
        # constant index_map -> loaded once, stays VMEM-resident across the grid
        return pl.BlockSpec((r, c), lambda b: (0, 0))

    # Explicit scoped-VMEM budget (defaults are 16/32 MiB): weights (bf16, single
    # copy) + double-buffered activation/mask blocks + in-flight f32 temporaries,
    # with 2x headroom, clamped to [16 MiB, 64 MiB] (valid on v5e/v6e/v7x).
    w_bytes = 2 * (2 * (D * 3 * D + D * D) + 2 * D * dff)
    vec_bytes = 4 * (2 * 4 * D + dff + 8 * D)
    act_bytes = 4 * (2 * S * D) + 2 * (S_enc * D) + 4 * (S * S + S * S_enc)
    tmp_bytes = 4 * (S * 3 * D + S_enc * 2 * D + S * dff + S * max(S, S_enc) + S * D)
    est = w_bytes + vec_bytes + 2 * act_bytes + tmp_bytes
    vmem_limit = int(min(64 << 20, max(16 << 20, 2 * est)))

    return pl.pallas_call(
        kern,
        out_shape=jax.ShapeDtypeStruct((B, S, D), jnp.float32),
        grid=(B,),
        in_specs=[
            pl.BlockSpec((1, S, D), lambda b: (b, 0, 0)),        # decoder input
            pl.BlockSpec((1, S_enc, D), lambda b: (b, 0, 0)),    # encoder output (bf16)
            pl.BlockSpec((1, S, S), lambda b: (b, 0, 0)),        # self-attn additive bias
            pl.BlockSpec((1, S, S_enc), lambda b: (b, 0, 0)),    # cross-attn additive bias
            wspec(D, 3 * D), wspec(1, 3 * D), wspec(D, D), wspec(1, D),
            wspec(1, D), wspec(1, D),                            # self-attn + LN1
            wspec(D, 3 * D), wspec(1, 3 * D), wspec(D, D), wspec(1, D),
            wspec(1, D), wspec(1, D),                            # cross-attn + LN2
            wspec(D, dff), wspec(1, dff), wspec(dff, D), wspec(1, D),
            wspec(1, D), wspec(1, D),                            # FFN + LN3
        ],
        out_specs=pl.BlockSpec((1, S, D), lambda b: (b, 0, 0)),
        scratch_shapes=[pltpu.VMEM((S, D), jnp.float32)],        # attention context
        compiler_params=pltpu.CompilerParams(
            dimension_semantics=("parallel",),
            vmem_limit_bytes=vmem_limit),
    )(x, enc_bf, self_bias, cross_bias,
      sa["wqkv"], sa["bqkv"].reshape(1, -1), sa["wo"], sa["bo"].reshape(1, -1),
      p["ln1_g"].reshape(1, -1), p["ln1_b"].reshape(1, -1),
      ca["wqkv"], ca["bqkv"].reshape(1, -1), ca["wo"], ca["bo"].reshape(1, -1),
      p["ln2_g"].reshape(1, -1), p["ln2_b"].reshape(1, -1),
      p["w1"], p["b1"].reshape(1, -1), p["w2"], p["b2"].reshape(1, -1),
      p["ln3_g"].reshape(1, -1), p["ln3_b"].reshape(1, -1))


# ---------------------------------------------------------------------------
# Model glue (pure JAX: embedding gather, mask->bias, parameter plumbing)
# ---------------------------------------------------------------------------

def pos_sinusoid_embedding(seq_len, d_model):
    pos = jnp.arange(seq_len, dtype=jnp.float32)[:, None]           # (S, 1)
    i = jnp.arange(d_model)
    denom = jnp.power(10000.0, 2.0 * (i // 2).astype(jnp.float32) / d_model)
    ang = pos / denom[None, :]
    return jnp.where((i % 2) == 0, jnp.sin(ang), jnp.cos(ang)).astype(jnp.float32)


def decoder_forward(params, labels, enc_out, dec_mask, dec_enc_mask, num_heads):
    B, S = labels.shape
    tgt_emb = params["tgt_emb"][labels]               # embedding gather (plain-JAX glue)
    pos_emb = params["pos_emb"][:S]                   # frozen sinusoid table
    dec_out = tgt_emb + pos_emb[None, :, :]           # dropout_emb: identity (eval)

    # Convert boolean masks ONCE to additive biases used by every layer.
    self_bias = jnp.where(dec_mask, -1e9, 0.0).astype(jnp.float32)
    cross_bias = jnp.where(dec_enc_mask, -1e9, 0.0).astype(jnp.float32)
    enc_bf = enc_out.astype(jnp.bfloat16)             # enc only feeds K/V projections

    for lp in params["layers"]:
        dec_out = decoder_layer_fused(dec_out, enc_bf, self_bias, cross_bias,
                                      lp, num_heads)
    return dec_out


# ---------------------------------------------------------------------------
# Deterministic parameter init (matmul weights pre-cast to bf16 in HBM)
# ---------------------------------------------------------------------------

def init_params(key, num_layers, dec_dim, num_heads, dff, tgt_len, tgt_vocab_size):
    def nrm(k, shape, scale=0.02, dtype=jnp.bfloat16):
        return (scale * jax.random.normal(k, shape, dtype=jnp.float32)).astype(dtype)

    keys = jax.random.split(key, 1 + num_layers)
    params = {
        "tgt_emb": nrm(keys[0], (tgt_vocab_size, dec_dim), scale=1.0, dtype=jnp.float32),
        "pos_emb": pos_sinusoid_embedding(tgt_len, dec_dim),
        "layers": [],
    }
    for li in range(num_layers):
        lk = jax.random.split(keys[1 + li], 8)

        def attn_params(k0, k1):
            return {
                "wqkv": nrm(k0, (dec_dim, 3 * dec_dim)),            # [Wq | Wk | Wv] fused, bf16
                "bqkv": jnp.zeros((3 * dec_dim,), jnp.float32),
                "wo": nrm(k1, (dec_dim, dec_dim)),                   # bf16
                "bo": jnp.zeros((dec_dim,), jnp.float32),
            }

        params["layers"].append({
            "self_attn": attn_params(lk[0], lk[1]),
            "cross_attn": attn_params(lk[2], lk[3]),
            "w1": nrm(lk[4], (dec_dim, dff)), "b1": jnp.zeros((dff,), jnp.float32),
            "w2": nrm(lk[5], (dff, dec_dim)), "b2": jnp.zeros((dec_dim,), jnp.float32),
            "ln1_g": jnp.ones((dec_dim,), jnp.float32), "ln1_b": jnp.zeros((dec_dim,), jnp.float32),
            "ln2_g": jnp.ones((dec_dim,), jnp.float32), "ln2_b": jnp.zeros((dec_dim,), jnp.float32),
            "ln3_g": jnp.ones((dec_dim,), jnp.float32), "ln3_b": jnp.zeros((dec_dim,), jnp.float32),
        })
    return params


# ---------------------------------------------------------------------------
# Main
# ---------------------------------------------------------------------------

if __name__ == "__main__":
    B, S, S_ENC = 2, 8, 8
    DEC_DIM, NUM_HEADS, DFF = 32, 4, 64
    NUM_LAYERS, TGT_LEN, VOCAB = 2, 16, 50

    root = jax.random.PRNGKey(0)
    k_par, k_lab, k_enc = jax.random.split(root, 3)

    params = init_params(k_par, NUM_LAYERS, DEC_DIM, NUM_HEADS, DFF, TGT_LEN, VOCAB)

    labels = jax.random.randint(k_lab, (B, S), 0, VOCAB, dtype=jnp.int32)
    enc_out = jax.random.normal(k_enc, (B, S_ENC, DEC_DIM), dtype=jnp.float32)

    # dec_mask: causal (True == position masked out); dec_enc_mask: nothing masked.
    causal = jnp.triu(jnp.ones((S, S), dtype=bool), k=1)
    dec_mask = jnp.broadcast_to(causal, (B, S, S))
    dec_enc_mask = jnp.zeros((B, S, S_ENC), dtype=bool)

    fwd = jax.jit(decoder_forward, static_argnames=("num_heads",))
    out = fwd(params, labels, enc_out, dec_mask, dec_enc_mask, num_heads=NUM_HEADS)
    out = jax.block_until_ready(out)
    assert out.shape == (B, S, DEC_DIM) and out.dtype == jnp.float32
    assert bool(jnp.all(jnp.isfinite(out)))
    # TODO(synk): dropout layers (dropout_emb/attn/posffn) are identity (inference/eval semantics).
    print("KERNEL_OK")
</pallas_src>

<mosaic_0001>
module attributes {stable_mosaic.version = 11 : i64} {
  func.func @_decoder_layer_kernel(%arg0: i32, %arg1: memref<1x8x32xf32, #tpu.memory_space<vmem>>, %arg2: memref<1x8x32xbf16, #tpu.memory_space<vmem>>, %arg3: memref<1x8x8xf32, #tpu.memory_space<vmem>>, %arg4: memref<1x8x8xf32, #tpu.memory_space<vmem>>, %arg5: memref<32x96xbf16, #tpu.memory_space<vmem>>, %arg6: memref<1x96xf32, #tpu.memory_space<vmem>>, %arg7: memref<32x32xbf16, #tpu.memory_space<vmem>>, %arg8: memref<1x32xf32, #tpu.memory_space<vmem>>, %arg9: memref<1x32xf32, #tpu.memory_space<vmem>>, %arg10: memref<1x32xf32, #tpu.memory_space<vmem>>, %arg11: memref<32x96xbf16, #tpu.memory_space<vmem>>, %arg12: memref<1x96xf32, #tpu.memory_space<vmem>>, %arg13: memref<32x32xbf16, #tpu.memory_space<vmem>>, %arg14: memref<1x32xf32, #tpu.memory_space<vmem>>, %arg15: memref<1x32xf32, #tpu.memory_space<vmem>>, %arg16: memref<1x32xf32, #tpu.memory_space<vmem>>, %arg17: memref<32x64xbf16, #tpu.memory_space<vmem>>, %arg18: memref<1x64xf32, #tpu.memory_space<vmem>>, %arg19: memref<64x32xbf16, #tpu.memory_space<vmem>>, %arg20: memref<1x32xf32, #tpu.memory_space<vmem>>, %arg21: memref<1x32xf32, #tpu.memory_space<vmem>>, %arg22: memref<1x32xf32, #tpu.memory_space<vmem>>, %arg23: memref<1x8x32xf32, #tpu.memory_space<vmem>>, %arg24: memref<8x32xf32, #tpu.memory_space<vmem>>) attributes {dimension_semantics = [#tpu.dimension_semantics<parallel>], iteration_bounds = array<i64: 2>, scalar_prefetch = 0 : i64, scratch_operands = 1 : i64, tpu.core_type = #tpu.core_type<tc>, window_params = [{transform_indices = @transform_0, window_bounds = array<i64: 1, 8, 32>}, {transform_indices = @transform_1, window_bounds = array<i64: 1, 8, 32>}, {transform_indices = @transform_2, window_bounds = array<i64: 1, 8, 8>}, {transform_indices = @transform_3, window_bounds = array<i64: 1, 8, 8>}, {pipeline_mode = #tpu.pipeline_mode<synchronous>, transform_indices = @transform_4, window_bounds = array<i64: 32, 96>}, {pipeline_mode = #tpu.pipeline_mode<synchronous>, transform_indices = @transform_5, window_bounds = array<i64: 1, 96>}, {pipeline_mode = #tpu.pipeline_mode<synchronous>, transform_indices = @transform_6, window_bounds = array<i64: 32, 32>}, {pipeline_mode = #tpu.pipeline_mode<synchronous>, transform_indices = @transform_7, window_bounds = array<i64: 1, 32>}, {pipeline_mode = #tpu.pipeline_mode<synchronous>, transform_indices = @transform_8, window_bounds = array<i64: 1, 32>}, {pipeline_mode = #tpu.pipeline_mode<synchronous>, transform_indices = @transform_9, window_bounds = array<i64: 1, 32>}, {pipeline_mode = #tpu.pipeline_mode<synchronous>, transform_indices = @transform_10, window_bounds = array<i64: 32, 96>}, {pipeline_mode = #tpu.pipeline_mode<synchronous>, transform_indices = @transform_11, window_bounds = array<i64: 1, 96>}, {pipeline_mode = #tpu.pipeline_mode<synchronous>, transform_indices = @transform_12, window_bounds = array<i64: 32, 32>}, {pipeline_mode = #tpu.pipeline_mode<synchronous>, transform_indices = @transform_13, window_bounds = array<i64: 1, 32>}, {pipeline_mode = #tpu.pipeline_mode<synchronous>, transform_indices = @transform_14, window_bounds = array<i64: 1, 32>}, {pipeline_mode = #tpu.pipeline_mode<synchronous>, transform_indices = @transform_15, window_bounds = array<i64: 1, 32>}, {pipeline_mode = #tpu.pipeline_mode<synchronous>, transform_indices = @transform_16, window_bounds = array<i64: 32, 64>}, {pipeline_mode = #tpu.pipeline_mode<synchronous>, transform_indices = @transform_17, window_bounds = array<i64: 1, 64>}, {pipeline_mode = #tpu.pipeline_mode<synchronous>, transform_indices = @transform_18, window_bounds = array<i64: 64, 32>}, {pipeline_mode = #tpu.pipeline_mode<synchronous>, transform_indices = @transform_19, window_bounds = array<i64: 1, 32>}, {pipeline_mode = #tpu.pipeline_mode<synchronous>, transform_indices = @transform_20, window_bounds = array<i64: 1, 32>}, {pipeline_mode = #tpu.pipeline_mode<synchronous>, transform_indices = @transform_21, window_bounds = array<i64: 1, 32>}, {transform_indices = @transform_22, window_bounds = array<i64: 1, 8, 32>}]} {
    %c0 = arith.constant 0 : index
    %c0_0 = arith.constant 0 : index
    %c0_1 = arith.constant 0 : index
    %0 = vector.load %arg1[%c0, %c0_0, %c0_1] : memref<1x8x32xf32, #tpu.memory_space<vmem>>, vector<1x8x32xf32>
    %1 = vector.shape_cast %0 : vector<1x8x32xf32> to vector<8x32xf32>
    %c0_2 = arith.constant 0 : index
    %c0_3 = arith.constant 0 : index
    %c0_4 = arith.constant 0 : index
    %2 = vector.load %arg2[%c0_2, %c0_3, %c0_4] : memref<1x8x32xbf16, #tpu.memory_space<vmem>>, vector<1x8x32xbf16>
    %3 = vector.shape_cast %2 : vector<1x8x32xbf16> to vector<8x32xbf16>
    %4 = arith.truncf %1 : vector<8x32xf32> to vector<8x32xbf16>
    %c0_5 = arith.constant 0 : index
    %c0_6 = arith.constant 0 : index
    %5 = vector.load %arg5[%c0_5, %c0_6] : memref<32x96xbf16, #tpu.memory_space<vmem>>, vector<32x96xbf16>
    %cst = arith.constant dense<0.000000e+00> : vector<8x96xf32>
    %6 = tpu.matmul %4, %5, %cst {dimension_numbers = #tpu.dot_dimension_numbers<[1], [0], [0], [1], [0, 0, 1, 1], [], []>} : vector<8x32xbf16>, vector<32x96xbf16>, vector<8x96xf32> -> vector<8x96xf32>
    %c0_7 = arith.constant 0 : index
    %c0_8 = arith.constant 0 : index
    %7 = vector.load %arg6[%c0_7, %c0_8] : memref<1x96xf32, #tpu.memory_space<vmem>>, vector<1x96xf32>
    %8 = vector.broadcast %7 : vector<1x96xf32> to vector<8x96xf32>
    %9 = arith.addf %6, %8 : vector<8x96xf32>
    %10 = vector.extract_strided_slice %9 {offsets = [0, 0], sizes = [8, 32], strides = [1, 1]} : vector<8x96xf32> to vector<8x32xf32>
    %11 = vector.extract_strided_slice %9 {offsets = [0, 32], sizes = [8, 32], strides = [1, 1]} : vector<8x96xf32> to vector<8x32xf32>
    %12 = vector.extract_strided_slice %9 {offsets = [0, 64], sizes = [8, 32], strides = [1, 1]} : vector<8x96xf32> to vector<8x32xf32>
    %c0_9 = arith.constant 0 : index
    %c0_10 = arith.constant 0 : index
    %c0_11 = arith.constant 0 : index
    %13 = vector.load %arg3[%c0_9, %c0_10, %c0_11] : memref<1x8x8xf32, #tpu.memory_space<vmem>>, vector<1x8x8xf32>
    %14 = vector.shape_cast %13 : vector<1x8x8xf32> to vector<8x8xf32>
    %c0_12 = arith.constant 0 : index
    %c0_13 = arith.constant 0 : index
    %15 = vector.load %arg7[%c0_12, %c0_13] : memref<32x32xbf16, #tpu.memory_space<vmem>>, vector<32x32xbf16>
    %c0_14 = arith.constant 0 : index
    %c0_15 = arith.constant 0 : index
    %16 = vector.load %arg8[%c0_14, %c0_15] : memref<1x32xf32, #tpu.memory_space<vmem>>, vector<1x32xf32>
    %c0_16 = arith.constant 0 : index
    %c0_17 = arith.constant 0 : index
    %17 = vector.load %arg9[%c0_16, %c0_17] : memref<1x32xf32, #tpu.memory_space<vmem>>, vector<1x32xf32>
    %c0_18 = arith.constant 0 : index
    %c0_19 = arith.constant 0 : index
    %18 = vector.load %arg10[%c0_18, %c0_19] : memref<1x32xf32, #tpu.memory_space<vmem>>, vector<1x32xf32>
    %cst_20 = arith.constant 0.353553385 : f32
    %19 = vector.broadcast %cst_20 : f32 to vector<8x32xf32>
    %20 = arith.mulf %10, %19 : vector<8x32xf32>
    %21 = arith.truncf %20 : vector<8x32xf32> to vector<8x32xbf16>
    %22 = arith.truncf %11 : vector<8x32xf32> to vector<8x32xbf16>
    %23 = arith.truncf %12 : vector<8x32xf32> to vector<8x32xbf16>
    %24 = vector.extract_strided_slice %21 {offsets = [0, 0], sizes = [8, 8], strides = [1, 1]} : vector<8x32xbf16> to vector<8x8xbf16>
    %25 = vector.extract_strided_slice %22 {offsets = [0, 0], sizes = [8, 8], strides = [1, 1]} : vector<8x32xbf16> to vector<8x8xbf16>
    %cst_21 = arith.constant dense<0.000000e+00> : vector<8x8xf32>
    %26 = tpu.matmul %24, %25, %cst_21 {dimension_numbers = #tpu.dot_dimension_numbers<[1], [1], [0], [0], [0, 0, 1, 0], [], []>} : vector<8x8xbf16>, vector<8x8xbf16>, vector<8x8xf32> -> vector<8x8xf32>
    %27 = arith.addf %26, %14 : vector<8x8xf32>
    %cst_22 = arith.constant dense<0xFF800000> : vector<8xf32>
    %28 = vector.multi_reduction <maximumf>, %27, %cst_22 [1] : vector<8x8xf32> to vector<8xf32>
    %29 = vector.shape_cast %28 : vector<8xf32> to vector<8x1xf32>
    %30 = vector.broadcast %29 : vector<8x1xf32> to vector<8x8xf32>
    %31 = arith.subf %27, %30 : vector<8x8xf32>
    %32 = math.exp %31 : vector<8x8xf32>
    %cst_23 = arith.constant dense<0.000000e+00> : vector<8xf32>
    %33 = vector.multi_reduction <add>, %32, %cst_23 [1] : vector<8x8xf32> to vector<8xf32>
    %34 = vector.shape_cast %33 : vector<8xf32> to vector<8x1xf32>
    %35 = tpu.reciprocal %34 {approx = true} : vector<8x1xf32> -> vector<8x1xf32>
    %36 = vector.broadcast %35 : vector<8x1xf32> to vector<8x8xf32>
    %37 = arith.mulf %32, %36 : vector<8x8xf32>
    %38 = arith.truncf %37 : vector<8x8xf32> to vector<8x8xbf16>
    %39 = vector.extract_strided_slice %23 {offsets = [0, 0], sizes = [8, 8], strides = [1, 1]} : vector<8x32xbf16> to vector<8x8xbf16>
    %cst_24 = arith.constant dense<0.000000e+00> : vector<8x8xf32>
    %40 = tpu.matmul %38, %39, %cst_24 {dimension_numbers = #tpu.dot_dimension_numbers<[1], [0], [0], [1], [0, 0, 1, 1], [], []>} : vector<8x8xbf16>, vector<8x8xbf16>, vector<8x8xf32> -> vector<8x8xf32>
    %c0_25 = arith.constant 0 : index
    %c0_26 = arith.constant 0 : index
    %41 = vector.load %arg24[%c0_25, %c0_26] : memref<8x32xf32, #tpu.memory_space<vmem>>, vector<8x8xf32>
    tpu.vector_store %arg24[%c0_25, %c0_26], %40 {strides = array<i32>} : memref<8x32xf32, #tpu.memory_space<vmem>>, vector<8x8xf32>,
    %42 = vector.extract_strided_slice %21 {offsets = [0, 8], sizes = [8, 8], strides = [1, 1]} : vector<8x32xbf16> to vector<8x8xbf16>
    %43 = vector.extract_strided_slice %22 {offsets = [0, 8], sizes = [8, 8], strides = [1, 1]} : vector<8x32xbf16> to vector<8x8xbf16>
    %cst_27 = arith.constant dense<0.000000e+00> : vector<8x8xf32>
    %44 = tpu.matmul %42, %43, %cst_27 {dimension_numbers = #tpu.dot_dimension_numbers<[1], [1], [0], [0], [0, 0, 1, 0], [], []>} : vector<8x8xbf16>, vector<8x8xbf16>, vector<8x8xf32> -> vector<8x8xf32>
    %45 = arith.addf %44, %14 : vector<8x8xf32>
    %cst_28 = arith.constant dense<0xFF800000> : vector<8xf32>
    %46 = vector.multi_reduction <maximumf>, %45, %cst_28 [1] : vector<8x8xf32> to vector<8xf32>
    %47 = vector.shape_cast %46 : vector<8xf32> to vector<8x1xf32>
    %48 = vector.broadcast %47 : vector<8x1xf32> to vector<8x8xf32>
    %49 = arith.subf %45, %48 : vector<8x8xf32>
    %50 = math.exp %49 : vector<8x8xf32>
    %cst_29 = arith.constant dense<0.000000e+00> : vector<8xf32>
    %51 = vector.multi_reduction <add>, %50, %cst_29 [1] : vector<8x8xf32> to vector<8xf32>
    %52 = vector.shape_cast %51 : vector<8xf32> to vector<8x1xf32>
    %53 = tpu.reciprocal %52 {approx = true} : vector<8x1xf32> -> vector<8x1xf32>
    %54 = vector.broadcast %53 : vector<8x1xf32> to vector<8x8xf32>
    %55 = arith.mulf %50, %54 : vector<8x8xf32>
    %56 = arith.truncf %55 : vector<8x8xf32> to vector<8x8xbf16>
    %57 = vector.extract_strided_slice %23 {offsets = [0, 8], sizes = [8, 8], strides = [1, 1]} : vector<8x32xbf16> to vector<8x8xbf16>
    %cst_30 = arith.constant dense<0.000000e+00> : vector<8x8xf32>
    %58 = tpu.matmul %56, %57, %cst_30 {dimension_numbers = #tpu.dot_dimension_numbers<[1], [0], [0], [1], [0, 0, 1, 1], [], []>} : vector<8x8xbf16>, vector<8x8xbf16>, vector<8x8xf32> -> vector<8x8xf32>
    %c0_31 = arith.constant 0 : index
    %c8 = arith.constant 8 : index
    %59 = vector.load %arg24[%c0_31, %c8] : memref<8x32xf32, #tpu.memory_space<vmem>>, vector<8x8xf32>
    tpu.vector_store %arg24[%c0_31, %c8], %58 {strides = array<i32>} : memref<8x32xf32, #tpu.memory_space<vmem>>, vector<8x8xf32>,
    %60 = vector.extract_strided_slice %21 {offsets = [0, 16], sizes = [8, 8], strides = [1, 1]} : vector<8x32xbf16> to vector<8x8xbf16>
    %61 = vector.extract_strided_slice %22 {offsets = [0, 16], sizes = [8, 8], strides = [1, 1]} : vector<8x32xbf16> to vector<8x8xbf16>
    %cst_32 = arith.constant dense<0.000000e+00> : vector<8x8xf32>
    %62 = tpu.matmul %60, %61, %cst_32 {dimension_numbers = #tpu.dot_dimension_numbers<[1], [1], [0], [0], [0, 0, 1, 0], [], []>} : vector<8x8xbf16>, vector<8x8xbf16>, vector<8x8xf32> -> vector<8x8xf32>
    %63 = arith.addf %62, %14 : vector<8x8xf32>
    %cst_33 = arith.constant dense<0xFF800000> : vector<8xf32>
    %64 = vector.multi_reduction <maximumf>, %63, %cst_33 [1] : vector<8x8xf32> to vector<8xf32>
    %65 = vector.shape_cast %64 : vector<8xf32> to vector<8x1xf32>
    %66 = vector.broadcast %65 : vector<8x1xf32> to vector<8x8xf32>
    %67 = arith.subf %63, %66 : vector<8x8xf32>
    %68 = math.exp %67 : vector<8x8xf32>
    %cst_34 = arith.constant dense<0.000000e+00> : vector<8xf32>
    %69 = vector.multi_reduction <add>, %68, %cst_34 [1] : vector<8x8xf32> to vector<8xf32>
    %70 = vector.shape_cast %69 : vector<8xf32> to vector<8x1xf32>
    %71 = tpu.reciprocal %70 {approx = true} : vector<8x1xf32> -> vector<8x1xf32>
    %72 = vector.broadcast %71 : vector<8x1xf32> to vector<8x8xf32>
    %73 = arith.mulf %68, %72 : vector<8x8xf32>
    %74 = arith.truncf %73 : vector<8x8xf32> to vector<8x8xbf16>
    %75 = vector.extract_strided_slice %23 {offsets = [0, 16], sizes = [8, 8], strides = [1, 1]} : vector<8x32xbf16> to vector<8x8xbf16>
    %cst_35 = arith.constant dense<0.000000e+00> : vector<8x8xf32>
    %76 = tpu.matmul %74, %75, %cst_35 {dimension_numbers = #tpu.dot_dimension_numbers<[1], [0], [0], [1], [0, 0, 1, 1], [], []>} : vector<8x8xbf16>, vector<8x8xbf16>, vector<8x8xf32> -> vector<8x8xf32>
    %c0_36 = arith.constant 0 : index
    %c16 = arith.constant 16 : index
    %77 = vector.load %arg24[%c0_36, %c16] : memref<8x32xf32, #tpu.memory_space<vmem>>, vector<8x8xf32>
    tpu.vector_store %arg24[%c0_36, %c16], %76 {strides = array<i32>} : memref<8x32xf32, #tpu.memory_space<vmem>>, vector<8x8xf32>,
    %78 = vector.extract_strided_slice %21 {offsets = [0, 24], sizes = [8, 8], strides = [1, 1]} : vector<8x32xbf16> to vector<8x8xbf16>
    %79 = vector.extract_strided_slice %22 {offsets = [0, 24], sizes = [8, 8], strides = [1, 1]} : vector<8x32xbf16> to vector<8x8xbf16>
    %cst_37 = arith.constant dense<0.000000e+00> : vector<8x8xf32>
    %80 = tpu.matmul %78, %79, %cst_37 {dimension_numbers = #tpu.dot_dimension_numbers<[1], [1], [0], [0], [0, 0, 1, 0], [], []>} : vector<8x8xbf16>, vector<8x8xbf16>, vector<8x8xf32> -> vector<8x8xf32>
    %81 = arith.addf %80, %14 : vector<8x8xf32>
    %cst_38 = arith.constant dense<0xFF800000> : vector<8xf32>
    %82 = vector.multi_reduction <maximumf>, %81, %cst_38 [1] : vector<8x8xf32> to vector<8xf32>
    %83 = vector.shape_cast %82 : vector<8xf32> to vector<8x1xf32>
    %84 = vector.broadcast %83 : vector<8x1xf32> to vector<8x8xf32>
    %85 = arith.subf %81, %84 : vector<8x8xf32>
    %86 = math.exp %85 : vector<8x8xf32>
    %cst_39 = arith.constant dense<0.000000e+00> : vector<8xf32>
    %87 = vector.multi_reduction <add>, %86, %cst_39 [1] : vector<8x8xf32> to vector<8xf32>
    %88 = vector.shape_cast %87 : vector<8xf32> to vector<8x1xf32>
    %89 = tpu.reciprocal %88 {approx = true} : vector<8x1xf32> -> vector<8x1xf32>
    %90 = vector.broadcast %89 : vector<8x1xf32> to vector<8x8xf32>
    %91 = arith.mulf %86, %90 : vector<8x8xf32>
    %92 = arith.truncf %91 : vector<8x8xf32> to vector<8x8xbf16>
    %93 = vector.extract_strided_slice %23 {offsets = [0, 24], sizes = [8, 8], strides = [1, 1]} : vector<8x32xbf16> to vector<8x8xbf16>
    %cst_40 = arith.constant dense<0.000000e+00> : vector<8x8xf32>
    %94 = tpu.matmul %92, %93, %cst_40 {dimension_numbers = #tpu.dot_dimension_numbers<[1], [0], [0], [1], [0, 0, 1, 1], [], []>} : vector<8x8xbf16>, vector<8x8xbf16>, vector<8x8xf32> -> vector<8x8xf32>
    %c0_41 = arith.constant 0 : index
    %c24 = arith.constant 24 : index
    %95 = vector.load %arg24[%c0_41, %c24] : memref<8x32xf32, #tpu.memory_space<vmem>>, vector<8x8xf32>
    tpu.vector_store %arg24[%c0_41, %c24], %94 {strides = array<i32>} : memref<8x32xf32, #tpu.memory_space<vmem>>, vector<8x8xf32>,
    %c0_42 = arith.constant 0 : index
    %c0_43 = arith.constant 0 : index
    %96 = vector.load %arg24[%c0_42, %c0_43] : memref<8x32xf32, #tpu.memory_space<vmem>>, vector<8x32xf32>
    %97 = arith.truncf %96 : vector<8x32xf32> to vector<8x32xbf16>
    %cst_44 = arith.constant dense<0.000000e+00> : vector<8x32xf32>
    %98 = tpu.matmul %97, %15, %cst_44 {dimension_numbers = #tpu.dot_dimension_numbers<[1], [0], [0], [1], [0, 0, 1, 1], [], []>} : vector<8x32xbf16>, vector<32x32xbf16>, vector<8x32xf32> -> vector<8x32xf32>
    %99 = vector.broadcast %16 : vector<1x32xf32> to vector<8x32xf32>
    %100 = arith.addf %98, %99 : vector<8x32xf32>
    %101 = arith.addf %100, %1 : vector<8x32xf32>
    %cst_45 = arith.constant dense<0.000000e+00> : vector<8xf32>
    %102 = vector.multi_reduction <add>, %101, %cst_45 [1] : vector<8x32xf32> to vector<8xf32>
    %103 = vector.shape_cast %102 : vector<8xf32> to vector<8x1xf32>
    %cst_46 = arith.constant 3.200000e+01 : f32
    %104 = vector.broadcast %cst_46 : f32 to vector<8x1xf32>
    %105 = arith.divf %103, %104 : vector<8x1xf32>
    %106 = vector.broadcast %105 : vector<8x1xf32> to vector<8x32xf32>
    %107 = arith.subf %101, %106 : vector<8x32xf32>
    %108 = arith.mulf %107, %107 : vector<8x32xf32>
    %cst_47 = arith.constant dense<0.000000e+00> : vector<8xf32>
    %109 = vector.multi_reduction <add>, %108, %cst_47 [1] : vector<8x32xf32> to vector<8xf32>
    %110 = vector.shape_cast %109 : vector<8xf32> to vector<8x1xf32>
    %cst_48 = arith.constant 3.200000e+01 : f32
    %111 = vector.broadcast %cst_48 : f32 to vector<8x1xf32>
    %112 = arith.divf %110, %111 : vector<8x1xf32>
    %113 = vector.broadcast %105 : vector<8x1xf32> to vector<8x32xf32>
    %114 = arith.subf %101, %113 : vector<8x32xf32>
    %cst_49 = arith.constant 9.99999974E-6 : f32
    %115 = vector.broadcast %cst_49 : f32 to vector<8x1xf32>
    %116 = arith.addf %112, %115 : vector<8x1xf32>
    %117 = math.rsqrt %116 : vector<8x1xf32>
    %118 = vector.broadcast %117 : vector<8x1xf32> to vector<8x32xf32>
    %119 = arith.mulf %114, %118 : vector<8x32xf32>
    %120 = vector.broadcast %17 : vector<1x32xf32> to vector<8x32xf32>
    %121 = arith.mulf %119, %120 : vector<8x32xf32>
    %122 = vector.broadcast %18 : vector<1x32xf32> to vector<8x32xf32>
    %123 = arith.addf %121, %122 : vector<8x32xf32>
    %c0_50 = arith.constant 0 : index
    %c0_51 = arith.constant 0 : index
    %124 = vector.load %arg11[%c0_50, %c0_51] : memref<32x96xbf16, #tpu.memory_space<vmem>>, vector<32x96xbf16>
    %c0_52 = arith.constant 0 : index
    %c0_53 = arith.constant 0 : index
    %125 = vector.load %arg12[%c0_52, %c0_53] : memref<1x96xf32, #tpu.memory_space<vmem>>, vector<1x96xf32>
    %126 = arith.truncf %123 : vector<8x32xf32> to vector<8x32xbf16>
    %127 = vector.extract_strided_slice %124 {offsets = [0, 0], sizes = [32, 32], strides = [1, 1]} : vector<32x96xbf16> to vector<32x32xbf16>
    %cst_54 = arith.constant dense<0.000000e+00> : vector<8x32xf32>
    %128 = tpu.matmul %126, %127, %cst_54 {dimension_numbers = #tpu.dot_dimension_numbers<[1], [0], [0], [1], [0, 0, 1, 1], [], []>} : vector<8x32xbf16>, vector<32x32xbf16>, vector<8x32xf32> -> vector<8x32xf32>
    %129 = vector.extract_strided_slice %125 {offsets = [0, 0], sizes = [1, 32], strides = [1, 1]} : vector<1x96xf32> to vector<1x32xf32>
    %130 = vector.broadcast %129 : vector<1x32xf32> to vector<8x32xf32>
    %131 = arith.addf %128, %130 : vector<8x32xf32>
    %132 = vector.extract_strided_slice %124 {offsets = [0, 32], sizes = [32, 64], strides = [1, 1]} : vector<32x96xbf16> to vector<32x64xbf16>
    %cst_55 = arith.constant dense<0.000000e+00> : vector<8x64xf32>
    %133 = tpu.matmul %3, %132, %cst_55 {dimension_numbers = #tpu.dot_dimension_numbers<[1], [0], [0], [1], [0, 0, 1, 1], [], []>} : vector<8x32xbf16>, vector<32x64xbf16>, vector<8x64xf32> -> vector<8x64xf32>
    %134 = vector.extract_strided_slice %125 {offsets = [0, 32], sizes = [1, 64], strides = [1, 1]} : vector<1x96xf32> to vector<1x64xf32>
    %135 = vector.broadcast %134 : vector<1x64xf32> to vector<8x64xf32>
    %136 = arith.addf %133, %135 : vector<8x64xf32>
    %137 = vector.extract_strided_slice %136 {offsets = [0, 0], sizes = [8, 32], strides = [1, 1]} : vector<8x64xf32> to vector<8x32xf32>
    %138 = vector.extract_strided_slice %136 {offsets = [0, 32], sizes = [8, 32], strides = [1, 1]} : vector<8x64xf32> to vector<8x32xf32>
    %c0_56 = arith.constant 0 : index
    %c0_57 = arith.constant 0 : index
    %c0_58 = arith.constant 0 : index
    %139 = vector.load %arg4[%c0_56, %c0_57, %c0_58] : memref<1x8x8xf32, #tpu.memory_space<vmem>>, vector<1x8x8xf32>
    %140 = vector.shape_cast %139 : vector<1x8x8xf32> to vector<8x8xf32>
    %c0_59 = arith.constant 0 : index
    %c0_60 = arith.constant 0 : index
    %141 = vector.load %arg13[%c0_59, %c0_60] : memref<32x32xbf16, #tpu.memory_space<vmem>>, vector<32x32xbf16>
    %c0_61 = arith.constant 0 : index
    %c0_62 = arith.constant 0 : index
    %142 = vector.load %arg14[%c0_61, %c0_62] : memref<1x32xf32, #tpu.memory_space<vmem>>, vector<1x32xf32>
    %c0_63 = arith.constant 0 : index
    %c0_64 = arith.constant 0 : index
    %143 = vector.load %arg15[%c0_63, %c0_64] : memref<1x32xf32, #tpu.memory_space<vmem>>, vector<1x32xf32>
    %c0_65 = arith.constant 0 : index
    %c0_66 = arith.constant 0 : index
    %144 = vector.load %arg16[%c0_65, %c0_66] : memref<1x32xf32, #tpu.memory_space<vmem>>, vector<1x32xf32>
    %cst_67 = arith.constant 0.353553385 : f32
    %145 = vector.broadcast %cst_67 : f32 to vector<8x32xf32>
    %146 = arith.mulf %131, %145 : vector<8x32xf32>
    %147 = arith.truncf %146 : vector<8x32xf32> to vector<8x32xbf16>
    %148 = arith.truncf %137 : vector<8x32xf32> to vector<8x32xbf16>
    %149 = arith.truncf %138 : vector<8x32xf32> to vector<8x32xbf16>
    %150 = vector.extract_strided_slice %147 {offsets = [0, 0], sizes = [8, 8], strides = [1, 1]} : vector<8x32xbf16> to vector<8x8xbf16>
    %151 = vector.extract_strided_slice %148 {offsets = [0, 0], sizes = [8, 8], strides = [1, 1]} : vector<8x32xbf16> to vector<8x8xbf16>
    %cst_68 = arith.constant dense<0.000000e+00> : vector<8x8xf32>
    %152 = tpu.matmul %150, %151, %cst_68 {dimension_numbers = #tpu.dot_dimension_numbers<[1], [1], [0], [0], [0, 0, 1, 0], [], []>} : vector<8x8xbf16>, vector<8x8xbf16>, vector<8x8xf32> -> vector<8x8xf32>
    %153 = arith.addf %152, %140 : vector<8x8xf32>
    %cst_69 = arith.constant dense<0xFF800000> : vector<8xf32>
    %154 = vector.multi_reduction <maximumf>, %153, %cst_69 [1] : vector<8x8xf32> to vector<8xf32>
    %155 = vector.shape_cast %154 : vector<8xf32> to vector<8x1xf32>
    %156 = vector.broadcast %155 : vector<8x1xf32> to vector<8x8xf32>
    %157 = arith.subf %153, %156 : vector<8x8xf32>
    %158 = math.exp %157 : vector<8x8xf32>
    %cst_70 = arith.constant dense<0.000000e+00> : vector<8xf32>
    %159 = vector.multi_reduction <add>, %158, %cst_70 [1] : vector<8x8xf32> to vector<8xf32>
    %160 = vector.shape_cast %159 : vector<8xf32> to vector<8x1xf32>
    %161 = tpu.reciprocal %160 {approx = true} : vector<8x1xf32> -> vector<8x1xf32>
    %162 = vector.broadcast %161 : vector<8x1xf32> to vector<8x8xf32>
    %163 = arith.mulf %158, %162 : vector<8x8xf32>
    %164 = arith.truncf %163 : vector<8x8xf32> to vector<8x8xbf16>
    %165 = vector.extract_strided_slice %149 {offsets = [0, 0], sizes = [8, 8], strides = [1, 1]} : vector<8x32xbf16> to vector<8x8xbf16>
    %cst_71 = arith.constant dense<0.000000e+00> : vector<8x8xf32>
    %166 = tpu.matmul %164, %165, %cst_71 {dimension_numbers = #tpu.dot_dimension_numbers<[1], [0], [0], [1], [0, 0, 1, 1], [], []>} : vector<8x8xbf16>, vector<8x8xbf16>, vector<8x8xf32> -> vector<8x8xf32>
    %c0_72 = arith.constant 0 : index
    %c0_73 = arith.constant 0 : index
    %167 = vector.load %arg24[%c0_72, %c0_73] : memref<8x32xf32, #tpu.memory_space<vmem>>, vector<8x8xf32>
    tpu.vector_store %arg24[%c0_72, %c0_73], %166 {strides = array<i32>} : memref<8x32xf32, #tpu.memory_space<vmem>>, vector<8x8xf32>,
    %168 = vector.extract_strided_slice %147 {offsets = [0, 8], sizes = [8, 8], strides = [1, 1]} : vector<8x32xbf16> to vector<8x8xbf16>
    %169 = vector.extract_strided_slice %148 {offsets = [0, 8], sizes = [8, 8], strides = [1, 1]} : vector<8x32xbf16> to vector<8x8xbf16>
    %cst_74 = arith.constant dense<0.000000e+00> : vector<8x8xf32>
    %170 = tpu.matmul %168, %169, %cst_74 {dimension_numbers = #tpu.dot_dimension_numbers<[1], [1], [0], [0], [0, 0, 1, 0], [], []>} : vector<8x8xbf16>, vector<8x8xbf16>, vector<8x8xf32> -> vector<8x8xf32>
    %171 = arith.addf %170, %140 : vector<8x8xf32>
    %cst_75 = arith.constant dense<0xFF800000> : vector<8xf32>
    %172 = vector.multi_reduction <maximumf>, %171, %cst_75 [1] : vector<8x8xf32> to vector<8xf32>
    %173 = vector.shape_cast %172 : vector<8xf32> to vector<8x1xf32>
    %174 = vector.broadcast %173 : vector<8x1xf32> to vector<8x8xf32>
    %175 = arith.subf %171, %174 : vector<8x8xf32>
    %176 = math.exp %175 : vector<8x8xf32>
    %cst_76 = arith.constant dense<0.000000e+00> : vector<8xf32>
    %177 = vector.multi_reduction <add>, %176, %cst_76 [1] : vector<8x8xf32> to vector<8xf32>
    %178 = vector.shape_cast %177 : vector<8xf32> to vector<8x1xf32>
    %179 = tpu.reciprocal %178 {approx = true} : vector<8x1xf32> -> vector<8x1xf32>
    %180 = vector.broadcast %179 : vector<8x1xf32> to vector<8x8xf32>
    %181 = arith.mulf %176, %180 : vector<8x8xf32>
    %182 = arith.truncf %181 : vector<8x8xf32> to vector<8x8xbf16>
    %183 = vector.extract_strided_slice %149 {offsets = [0, 8], sizes = [8, 8], strides = [1, 1]} : vector<8x32xbf16> to vector<8x8xbf16>
    %cst_77 = arith.constant dense<0.000000e+00> : vector<8x8xf32>
    %184 = tpu.matmul %182, %183, %cst_77 {dimension_numbers = #tpu.dot_dimension_numbers<[1], [0], [0], [1], [0, 0, 1, 1], [], []>} : vector<8x8xbf16>, vector<8x8xbf16>, vector<8x8xf32> -> vector<8x8xf32>
    %c0_78 = arith.constant 0 : index
    %c8_79 = arith.constant 8 : index
    %185 = vector.load %arg24[%c0_78, %c8_79] : memref<8x32xf32, #tpu.memory_space<vmem>>, vector<8x8xf32>
    tpu.vector_store %arg24[%c0_78, %c8_79], %184 {strides = array<i32>} : memref<8x32xf32, #tpu.memory_space<vmem>>, vector<8x8xf32>,
    %186 = vector.extract_strided_slice %147 {offsets = [0, 16], sizes = [8, 8], strides = [1, 1]} : vector<8x32xbf16> to vector<8x8xbf16>
    %187 = vector.extract_strided_slice %148 {offsets = [0, 16], sizes = [8, 8], strides = [1, 1]} : vector<8x32xbf16> to vector<8x8xbf16>
    %cst_80 = arith.constant dense<0.000000e+00> : vector<8x8xf32>
    %188 = tpu.matmul %186, %187, %cst_80 {dimension_numbers = #tpu.dot_dimension_numbers<[1], [1], [0], [0], [0, 0, 1, 0], [], []>} : vector<8x8xbf16>, vector<8x8xbf16>, vector<8x8xf32> -> vector<8x8xf32>
    %189 = arith.addf %188, %140 : vector<8x8xf32>
    %cst_81 = arith.constant dense<0xFF800000> : vector<8xf32>
    %190 = vector.multi_reduction <maximumf>, %189, %cst_81 [1] : vector<8x8xf32> to vector<8xf32>
    %191 = vector.shape_cast %190 : vector<8xf32> to vector<8x1xf32>
    %192 = vector.broadcast %191 : vector<8x1xf32> to vector<8x8xf32>
    %193 = arith.subf %189, %192 : vector<8x8xf32>
    %194 = math.exp %193 : vector<8x8xf32>
    %cst_82 = arith.constant dense<0.000000e+00> : vector<8xf32>
    %195 = vector.multi_reduction <add>, %194, %cst_82 [1] : vector<8x8xf32> to vector<8xf32>
    %196 = vector.shape_cast %195 : vector<8xf32> to vector<8x1xf32>
    %197 = tpu.reciprocal %196 {approx = true} : vector<8x1xf32> -> vector<8x1xf32>
    %198 = vector.broadcast %197 : vector<8x1xf32> to vector<8x8xf32>
    %199 = arith.mulf %194, %198 : vector<8x8xf32>
    %200 = arith.truncf %199 : vector<8x8xf32> to vector<8x8xbf16>
    %201 = vector.extract_strided_slice %149 {offsets = [0, 16], sizes = [8, 8], strides = [1, 1]} : vector<8x32xbf16> to vector<8x8xbf16>
    %cst_83 = arith.constant dense<0.000000e+00> : vector<8x8xf32>
    %202 = tpu.matmul %200, %201, %cst_83 {dimension_numbers = #tpu.dot_dimension_numbers<[1], [0], [0], [1], [0, 0, 1, 1], [], []>} : vector<8x8xbf16>, vector<8x8xbf16>, vector<8x8xf32> -> vector<8x8xf32>
    %c0_84 = arith.constant 0 : index
    %c16_85 = arith.constant 16 : index
    %203 = vector.load %arg24[%c0_84, %c16_85] : memref<8x32xf32, #tpu.memory_space<vmem>>, vector<8x8xf32>
    tpu.vector_store %arg24[%c0_84, %c16_85], %202 {strides = array<i32>} : memref<8x32xf32, #tpu.memory_space<vmem>>, vector<8x8xf32>,
    %204 = vector.extract_strided_slice %147 {offsets = [0, 24], sizes = [8, 8], strides = [1, 1]} : vector<8x32xbf16> to vector<8x8xbf16>
    %205 = vector.extract_strided_slice %148 {offsets = [0, 24], sizes = [8, 8], strides = [1, 1]} : vector<8x32xbf16> to vector<8x8xbf16>
    %cst_86 = arith.constant dense<0.000000e+00> : vector<8x8xf32>
    %206 = tpu.matmul %204, %205, %cst_86 {dimension_numbers = #tpu.dot_dimension_numbers<[1], [1], [0], [0], [0, 0, 1, 0], [], []>} : vector<8x8xbf16>, vector<8x8xbf16>, vector<8x8xf32> -> vector<8x8xf32>
    %207 = arith.addf %206, %140 : vector<8x8xf32>
    %cst_87 = arith.constant dense<0xFF800000> : vector<8xf32>
    %208 = vector.multi_reduction <maximumf>, %207, %cst_87 [1] : vector<8x8xf32> to vector<8xf32>
    %209 = vector.shape_cast %208 : vector<8xf32> to vector<8x1xf32>
    %210 = vector.broadcast %209 : vector<8x1xf32> to vector<8x8xf32>
    %211 = arith.subf %207, %210 : vector<8x8xf32>
    %212 = math.exp %211 : vector<8x8xf32>
    %cst_88 = arith.constant dense<0.000000e+00> : vector<8xf32>
    %213 = vector.multi_reduction <add>, %212, %cst_88 [1] : vector<8x8xf32> to vector<8xf32>
    %214 = vector.shape_cast %213 : vector<8xf32> to vector<8x1xf32>
    %215 = tpu.reciprocal %214 {approx = true} : vector<8x1xf32> -> vector<8x1xf32>
    %216 = vector.broadcast %215 : vector<8x1xf32> to vector<8x8xf32>
    %217 = arith.mulf %212, %216 : vector<8x8xf32>
    %218 = arith.truncf %217 : vector<8x8xf32> to vector<8x8xbf16>
    %219 = vector.extract_strided_slice %149 {offsets = [0, 24], sizes = [8, 8], strides = [1, 1]} : vector<8x32xbf16> to vector<8x8xbf16>
    %cst_89 = arith.constant dense<0.000000e+00> : vector<8x8xf32>
    %220 = tpu.matmul %218, %219, %cst_89 {dimension_numbers = #tpu.dot_dimension_numbers<[1], [0], [0], [1], [0, 0, 1, 1], [], []>} : vector<8x8xbf16>, vector<8x8xbf16>, vector<8x8xf32> -> vector<8x8xf32>
    %c0_90 = arith.constant 0 : index
    %c24_91 = arith.constant 24 : index
    %221 = vector.load %arg24[%c0_90, %c24_91] : memref<8x32xf32, #tpu.memory_space<vmem>>, vector<8x8xf32>
    tpu.vector_store %arg24[%c0_90, %c24_91], %220 {strides = array<i32>} : memref<8x32xf32, #tpu.memory_space<vmem>>, vector<8x8xf32>,
    %c0_92 = arith.constant 0 : index
    %c0_93 = arith.constant 0 : index
    %222 = vector.load %arg24[%c0_92, %c0_93] : memref<8x32xf32, #tpu.memory_space<vmem>>, vector<8x32xf32>
    %223 = arith.truncf %222 : vector<8x32xf32> to vector<8x32xbf16>
    %cst_94 = arith.constant dense<0.000000e+00> : vector<8x32xf32>
    %224 = tpu.matmul %223, %141, %cst_94 {dimension_numbers = #tpu.dot_dimension_numbers<[1], [0], [0], [1], [0, 0, 1, 1], [], []>} : vector<8x32xbf16>, vector<32x32xbf16>, vector<8x32xf32> -> vector<8x32xf32>
    %225 = vector.broadcast %142 : vector<1x32xf32> to vector<8x32xf32>
    %226 = arith.addf %224, %225 : vector<8x32xf32>
    %227 = arith.addf %226, %123 : vector<8x32xf32>
    %cst_95 = arith.constant dense<0.000000e+00> : vector<8xf32>
    %228 = vector.multi_reduction <add>, %227, %cst_95 [1] : vector<8x32xf32> to vector<8xf32>
    %229 = vector.shape_cast %228 : vector<8xf32> to vector<8x1xf32>
    %cst_96 = arith.constant 3.200000e+01 : f32
    %230 = vector.broadcast %cst_96 : f32 to vector<8x1xf32>
    %231 = arith.divf %229, %230 : vector<8x1xf32>
    %232 = vector.broadcast %231 : vector<8x1xf32> to vector<8x32xf32>
    %233 = arith.subf %227, %232 : vector<8x32xf32>
    %234 = arith.mulf %233, %233 : vector<8x32xf32>
    %cst_97 = arith.constant dense<0.000000e+00> : vector<8xf32>
    %235 = vector.multi_reduction <add>, %234, %cst_97 [1] : vector<8x32xf32> to vector<8xf32>
    %236 = vector.shape_cast %235 : vector<8xf32> to vector<8x1xf32>
    %cst_98 = arith.constant 3.200000e+01 : f32
    %237 = vector.broadcast %cst_98 : f32 to vector<8x1xf32>
    %238 = arith.divf %236, %237 : vector<8x1xf32>
    %239 = vector.broadcast %231 : vector<8x1xf32> to vector<8x32xf32>
    %240 = arith.subf %227, %239 : vector<8x32xf32>
    %cst_99 = arith.constant 9.99999974E-6 : f32
    %241 = vector.broadcast %cst_99 : f32 to vector<8x1xf32>
    %242 = arith.addf %238, %241 : vector<8x1xf32>
    %243 = math.rsqrt %242 : vector<8x1xf32>
    %244 = vector.broadcast %243 : vector<8x1xf32> to vector<8x32xf32>
    %245 = arith.mulf %240, %244 : vector<8x32xf32>
    %246 = vector.broadcast %143 : vector<1x32xf32> to vector<8x32xf32>
    %247 = arith.mulf %245, %246 : vector<8x32xf32>
    %248 = vector.broadcast %144 : vector<1x32xf32> to vector<8x32xf32>
    %249 = arith.addf %247, %248 : vector<8x32xf32>
    %250 = arith.truncf %249 : vector<8x32xf32> to vector<8x32xbf16>
    %c0_100 = arith.constant 0 : index
    %c0_101 = arith.constant 0 : index
    %251 = vector.load %arg17[%c0_100, %c0_101] : memref<32x64xbf16, #tpu.memory_space<vmem>>, vector<32x64xbf16>
    %cst_102 = arith.constant dense<0.000000e+00> : vector<8x64xf32>
    %252 = tpu.matmul %250, %251, %cst_102 {dimension_numbers = #tpu.dot_dimension_numbers<[1], [0], [0], [1], [0, 0, 1, 1], [], []>} : vector<8x32xbf16>, vector<32x64xbf16>, vector<8x64xf32> -> vector<8x64xf32>
    %c0_103 = arith.constant 0 : index
    %c0_104 = arith.constant 0 : index
    %253 = vector.load %arg18[%c0_103, %c0_104] : memref<1x64xf32, #tpu.memory_space<vmem>>, vector<1x64xf32>
    %254 = vector.broadcast %253 : vector<1x64xf32> to vector<8x64xf32>
    %255 = arith.addf %252, %254 : vector<8x64xf32>
    %cst_105 = arith.constant 0.000000e+00 : f32
    %256 = vector.broadcast %cst_105 : f32 to vector<8x64xf32>
    %257 = arith.maximumf %255, %256 : vector<8x64xf32>
    %258 = arith.truncf %257 : vector<8x64xf32> to vector<8x64xbf16>
    %c0_106 = arith.constant 0 : index
    %c0_107 = arith.constant 0 : index
    %259 = vector.load %arg19[%c0_106, %c0_107] : memref<64x32xbf16, #tpu.memory_space<vmem>>, vector<64x32xbf16>
    %cst_108 = arith.constant dense<0.000000e+00> : vector<8x32xf32>
    %260 = tpu.matmul %258, %259, %cst_108 {dimension_numbers = #tpu.dot_dimension_numbers<[1], [0], [0], [1], [0, 0, 1, 1], [], []>} : vector<8x64xbf16>, vector<64x32xbf16>, vector<8x32xf32> -> vector<8x32xf32>
    %c0_109 = arith.constant 0 : index
    %c0_110 = arith.constant 0 : index
    %261 = vector.load %arg20[%c0_109, %c0_110] : memref<1x32xf32, #tpu.memory_space<vmem>>, vector<1x32xf32>
    %262 = vector.broadcast %261 : vector<1x32xf32> to vector<8x32xf32>
    %263 = arith.addf %260, %262 : vector<8x32xf32>
    %264 = arith.addf %263, %249 : vector<8x32xf32>
    %c0_111 = arith.constant 0 : index
    %c0_112 = arith.constant 0 : index
    %265 = vector.load %arg21[%c0_111, %c0_112] : memref<1x32xf32, #tpu.memory_space<vmem>>, vector<1x32xf32>
    %c0_113 = arith.constant 0 : index
    %c0_114 = arith.constant 0 : index
    %266 = vector.load %arg22[%c0_113, %c0_114] : memref<1x32xf32, #tpu.memory_space<vmem>>, vector<1x32xf32>
    %cst_115 = arith.constant dense<0.000000e+00> : vector<8xf32>
    %267 = vector.multi_reduction <add>, %264, %cst_115 [1] : vector<8x32xf32> to vector<8xf32>
    %268 = vector.shape_cast %267 : vector<8xf32> to vector<8x1xf32>
    %cst_116 = arith.constant 3.200000e+01 : f32
    %269 = vector.broadcast %cst_116 : f32 to vector<8x1xf32>
    %270 = arith.divf %268, %269 : vector<8x1xf32>
    %271 = vector.broadcast %270 : vector<8x1xf32> to vector<8x32xf32>
    %272 = arith.subf %264, %271 : vector<8x32xf32>
    %273 = arith.mulf %272, %272 : vector<8x32xf32>
    %cst_117 = arith.constant dense<0.000000e+00> : vector<8xf32>
    %274 = vector.multi_reduction <add>, %273, %cst_117 [1] : vector<8x32xf32> to vector<8xf32>
    %275 = vector.shape_cast %274 : vector<8xf32> to vector<8x1xf32>
    %cst_118 = arith.constant 3.200000e+01 : f32
    %276 = vector.broadcast %cst_118 : f32 to vector<8x1xf32>
    %277 = arith.divf %275, %276 : vector<8x1xf32>
    %278 = vector.broadcast %270 : vector<8x1xf32> to vector<8x32xf32>
    %279 = arith.subf %264, %278 : vector<8x32xf32>
    %cst_119 = arith.constant 9.99999974E-6 : f32
    %280 = vector.broadcast %cst_119 : f32 to vector<8x1xf32>
    %281 = arith.addf %277, %280 : vector<8x1xf32>
    %282 = math.rsqrt %281 : vector<8x1xf32>
    %283 = vector.broadcast %282 : vector<8x1xf32> to vector<8x32xf32>
    %284 = arith.mulf %279, %283 : vector<8x32xf32>
    %285 = vector.broadcast %265 : vector<1x32xf32> to vector<8x32xf32>
    %286 = arith.mulf %284, %285 : vector<8x32xf32>
    %287 = vector.broadcast %266 : vector<1x32xf32> to vector<8x32xf32>
    %288 = arith.addf %286, %287 : vector<8x32xf32>
    %c0_120 = arith.constant 0 : index
    %c0_121 = arith.constant 0 : index
    %c0_122 = arith.constant 0 : index
    %289 = vector.load %arg23[%c0_120, %c0_121, %c0_122] : memref<1x8x32xf32, #tpu.memory_space<vmem>>, vector<1x8x32xf32>
    %290 = vector.shape_cast %289 : vector<1x8x32xf32> to vector<8x32xf32>
    %291 = vector.shape_cast %288 : vector<8x32xf32> to vector<1x8x32xf32>
    tpu.vector_store %arg23[%c0_120, %c0_121, %c0_122], %291 {strides = array<i32>} : memref<1x8x32xf32, #tpu.memory_space<vmem>>, vector<1x8x32xf32>,
    return
  }
  func.func @transform_0(%arg0: i32) -> (i32, i32, i32) {
    %c0_i32 = arith.constant 0 : i32
    %c0_i32_0 = arith.constant 0 : i32
    %c0_i32_1 = arith.constant 0 : i32
    return %arg0, %c0_i32, %c0_i32_0 : i32, i32, i32
  }
  func.func @transform_1(%arg0: i32) -> (i32, i32, i32) {
    %c0_i32 = arith.constant 0 : i32
    %c0_i32_0 = arith.constant 0 : i32
    %c0_i32_1 = arith.constant 0 : i32
    return %arg0, %c0_i32, %c0_i32_0 : i32, i32, i32
  }
  func.func @transform_2(%arg0: i32) -> (i32, i32, i32) {
    %c0_i32 = arith.constant 0 : i32
    %c0_i32_0 = arith.constant 0 : i32
    %c0_i32_1 = arith.constant 0 : i32
    return %arg0, %c0_i32, %c0_i32_0 : i32, i32, i32
  }
  func.func @transform_3(%arg0: i32) -> (i32, i32, i32) {
    %c0_i32 = arith.constant 0 : i32
    %c0_i32_0 = arith.constant 0 : i32
    %c0_i32_1 = arith.constant 0 : i32
    return %arg0, %c0_i32, %c0_i32_0 : i32, i32, i32
  }
  func.func @transform_4(%arg0: i32) -> (i32, i32) {
    %c0_i32 = arith.constant 0 : i32
    %c0_i32_0 = arith.constant 0 : i32
    %c0_i32_1 = arith.constant 0 : i32
    return %c0_i32, %c0_i32_0 : i32, i32
  }
  func.func @transform_5(%arg0: i32) -> (i32, i32) {
    %c0_i32 = arith.constant 0 : i32
    %c0_i32_0 = arith.constant 0 : i32
    %c0_i32_1 = arith.constant 0 : i32
    return %c0_i32, %c0_i32_0 : i32, i32
  }
  func.func @transform_6(%arg0: i32) -> (i32, i32) {
    %c0_i32 = arith.constant 0 : i32
    %c0_i32_0 = arith.constant 0 : i32
    %c0_i32_1 = arith.constant 0 : i32
    return %c0_i32, %c0_i32_0 : i32, i32
  }
  func.func @transform_7(%arg0: i32) -> (i32, i32) {
    %c0_i32 = arith.constant 0 : i32
    %c0_i32_0 = arith.constant 0 : i32
    %c0_i32_1 = arith.constant 0 : i32
    return %c0_i32, %c0_i32_0 : i32, i32
  }
  func.func @transform_8(%arg0: i32) -> (i32, i32) {
    %c0_i32 = arith.constant 0 : i32
    %c0_i32_0 = arith.constant 0 : i32
    %c0_i32_1 = arith.constant 0 : i32
    return %c0_i32, %c0_i32_0 : i32, i32
  }
  func.func @transform_9(%arg0: i32) -> (i32, i32) {
    %c0_i32 = arith.constant 0 : i32
    %c0_i32_0 = arith.constant 0 : i32
    %c0_i32_1 = arith.constant 0 : i32
    return %c0_i32, %c0_i32_0 : i32, i32
  }
  func.func @transform_10(%arg0: i32) -> (i32, i32) {
    %c0_i32 = arith.constant 0 : i32
    %c0_i32_0 = arith.constant 0 : i32
    %c0_i32_1 = arith.constant 0 : i32
    return %c0_i32, %c0_i32_0 : i32, i32
  }
  func.func @transform_11(%arg0: i32) -> (i32, i32) {
    %c0_i32 = arith.constant 0 : i32
    %c0_i32_0 = arith.constant 0 : i32
    %c0_i32_1 = arith.constant 0 : i32
    return %c0_i32, %c0_i32_0 : i32, i32
  }
  func.func @transform_12(%arg0: i32) -> (i32, i32) {
    %c0_i32 = arith.constant 0 : i32
    %c0_i32_0 = arith.constant 0 : i32
    %c0_i32_1 = arith.constant 0 : i32
    return %c0_i32, %c0_i32_0 : i32, i32
  }
  func.func @transform_13(%arg0: i32) -> (i32, i32) {
    %c0_i32 = arith.constant 0 : i32
    %c0_i32_0 = arith.constant 0 : i32
    %c0_i32_1 = arith.constant 0 : i32
    return %c0_i32, %c0_i32_0 : i32, i32
  }
  func.func @transform_14(%arg0: i32) -> (i32, i32) {
    %c0_i32 = arith.constant 0 : i32
    %c0_i32_0 = arith.constant 0 : i32
    %c0_i32_1 = arith.constant 0 : i32
    return %c0_i32, %c0_i32_0 : i32, i32
  }
  func.func @transform_15(%arg0: i32) -> (i32, i32) {
    %c0_i32 = arith.constant 0 : i32
    %c0_i32_0 = arith.constant 0 : i32
    %c0_i32_1 = arith.constant 0 : i32
    return %c0_i32, %c0_i32_0 : i32, i32
  }
  func.func @transform_16(%arg0: i32) -> (i32, i32) {
    %c0_i32 = arith.constant 0 : i32
    %c0_i32_0 = arith.constant 0 : i32
    %c0_i32_1 = arith.constant 0 : i32
    return %c0_i32, %c0_i32_0 : i32, i32
  }
  func.func @transform_17(%arg0: i32) -> (i32, i32) {
    %c0_i32 = arith.constant 0 : i32
    %c0_i32_0 = arith.constant 0 : i32
    %c0_i32_1 = arith.constant 0 : i32
    return %c0_i32, %c0_i32_0 : i32, i32
  }
  func.func @transform_18(%arg0: i32) -> (i32, i32) {
    %c0_i32 = arith.constant 0 : i32
    %c0_i32_0 = arith.constant 0 : i32
    %c0_i32_1 = arith.constant 0 : i32
    return %c0_i32, %c0_i32_0 : i32, i32
  }
  func.func @transform_19(%arg0: i32) -> (i32, i32) {
    %c0_i32 = arith.constant 0 : i32
    %c0_i32_0 = arith.constant 0 : i32
    %c0_i32_1 = arith.constant 0 : i32
    return %c0_i32, %c0_i32_0 : i32, i32
  }
  func.func @transform_20(%arg0: i32) -> (i32, i32) {
    %c0_i32 = arith.constant 0 : i32
    %c0_i32_0 = arith.constant 0 : i32
    %c0_i32_1 = arith.constant 0 : i32
    return %c0_i32, %c0_i32_0 : i32, i32
  }
  func.func @transform_21(%arg0: i32) -> (i32, i32) {
    %c0_i32 = arith.constant 0 : i32
    %c0_i32_0 = arith.constant 0 : i32
    %c0_i32_1 = arith.constant 0 : i32
    return %c0_i32, %c0_i32_0 : i32, i32
  }
  func.func @transform_22(%arg0: i32) -> (i32, i32, i32) {
    %c0_i32 = arith.constant 0 : i32
    %c0_i32_0 = arith.constant 0 : i32
    %c0_i32_1 = arith.constant 0 : i32
    return %arg0, %c0_i32, %c0_i32_0 : i32, i32, i32
  }
}

module attributes {stable_mosaic.version = 11 : i64} {
  func.func @_decoder_layer_kernel(%arg0: i32, %arg1: memref<1x8x32xf32, #tpu.memory_space<vmem>>, %arg2: memref<1x8x32xbf16, #tpu.memory_space<vmem>>, %arg3: memref<1x8x8xf32, #tpu.memory_space<vmem>>, %arg4: memref<1x8x8xf32, #tpu.memory_space<vmem>>, %arg5: memref<32x96xbf16, #tpu.memory_space<vmem>>, %arg6: memref<1x96xf32, #tpu.memory_space<vmem>>, %arg7: memref<32x32xbf16, #tpu.memory_space<vmem>>, %arg8: memref<1x32xf32, #tpu.memory_space<vmem>>, %arg9: memref<1x32xf32, #tpu.memory_space<vmem>>, %arg10: memref<1x32xf32, #tpu.memory_space<vmem>>, %arg11: memref<32x96xbf16, #tpu.memory_space<vmem>>, %arg12: memref<1x96xf32, #tpu.memory_space<vmem>>, %arg13: memref<32x32xbf16, #tpu.memory_space<vmem>>, %arg14: memref<1x32xf32, #tpu.memory_space<vmem>>, %arg15: memref<1x32xf32, #tpu.memory_space<vmem>>, %arg16: memref<1x32xf32, #tpu.memory_space<vmem>>, %arg17: memref<32x64xbf16, #tpu.memory_space<vmem>>, %arg18: memref<1x64xf32, #tpu.memory_space<vmem>>, %arg19: memref<64x32xbf16, #tpu.memory_space<vmem>>, %arg20: memref<1x32xf32, #tpu.memory_space<vmem>>, %arg21: memref<1x32xf32, #tpu.memory_space<vmem>>, %arg22: memref<1x32xf32, #tpu.memory_space<vmem>>, %arg23: memref<1x8x32xf32, #tpu.memory_space<vmem>>, %arg24: memref<8x32xf32, #tpu.memory_space<vmem>>) attributes {dimension_semantics = [#tpu.dimension_semantics<parallel>], iteration_bounds = array<i64: 2>, scalar_prefetch = 0 : i64, scratch_operands = 1 : i64, tpu.core_type = #tpu.core_type<tc>, window_params = [{transform_indices = @transform_0, window_bounds = array<i64: 1, 8, 32>}, {transform_indices = @transform_1, window_bounds = array<i64: 1, 8, 32>}, {transform_indices = @transform_2, window_bounds = array<i64: 1, 8, 8>}, {transform_indices = @transform_3, window_bounds = array<i64: 1, 8, 8>}, {pipeline_mode = #tpu.pipeline_mode<synchronous>, transform_indices = @transform_4, window_bounds = array<i64: 32, 96>}, {pipeline_mode = #tpu.pipeline_mode<synchronous>, transform_indices = @transform_5, window_bounds = array<i64: 1, 96>}, {pipeline_mode = #tpu.pipeline_mode<synchronous>, transform_indices = @transform_6, window_bounds = array<i64: 32, 32>}, {pipeline_mode = #tpu.pipeline_mode<synchronous>, transform_indices = @transform_7, window_bounds = array<i64: 1, 32>}, {pipeline_mode = #tpu.pipeline_mode<synchronous>, transform_indices = @transform_8, window_bounds = array<i64: 1, 32>}, {pipeline_mode = #tpu.pipeline_mode<synchronous>, transform_indices = @transform_9, window_bounds = array<i64: 1, 32>}, {pipeline_mode = #tpu.pipeline_mode<synchronous>, transform_indices = @transform_10, window_bounds = array<i64: 32, 96>}, {pipeline_mode = #tpu.pipeline_mode<synchronous>, transform_indices = @transform_11, window_bounds = array<i64: 1, 96>}, {pipeline_mode = #tpu.pipeline_mode<synchronous>, transform_indices = @transform_12, window_bounds = array<i64: 32, 32>}, {pipeline_mode = #tpu.pipeline_mode<synchronous>, transform_indices = @transform_13, window_bounds = array<i64: 1, 32>}, {pipeline_mode = #tpu.pipeline_mode<synchronous>, transform_indices = @transform_14, window_bounds = array<i64: 1, 32>}, {pipeline_mode = #tpu.pipeline_mode<synchronous>, transform_indices = @transform_15, window_bounds = array<i64: 1, 32>}, {pipeline_mode = #tpu.pipeline_mode<synchronous>, transform_indices = @transform_16, window_bounds = array<i64: 32, 64>}, {pipeline_mode = #tpu.pipeline_mode<synchronous>, transform_indices = @transform_17, window_bounds = array<i64: 1, 64>}, {pipeline_mode = #tpu.pipeline_mode<synchronous>, transform_indices = @transform_18, window_bounds = array<i64: 64, 32>}, {pipeline_mode = #tpu.pipeline_mode<synchronous>, transform_indices = @transform_19, window_bounds = array<i64: 1, 32>}, {pipeline_mode = #tpu.pipeline_mode<synchronous>, transform_indices = @transform_20, window_bounds = array<i64: 1, 32>}, {pipeline_mode = #tpu.pipeline_mode<synchronous>, transform_indices = @transform_21, window_bounds = array<i64: 1, 32>}, {transform_indices = @transform_22, window_bounds = array<i64: 1, 8, 32>}]} {
    %c0 = arith.constant 0 : index
    %c0_0 = arith.constant 0 : index
    %c0_1 = arith.constant 0 : index
    %0 = vector.load %arg1[%c0, %c0_0, %c0_1] : memref<1x8x32xf32, #tpu.memory_space<vmem>>, vector<1x8x32xf32>
    %1 = vector.shape_cast %0 : vector<1x8x32xf32> to vector<8x32xf32>
    %c0_2 = arith.constant 0 : index
    %c0_3 = arith.constant 0 : index
    %c0_4 = arith.constant 0 : index
    %2 = vector.load %arg2[%c0_2, %c0_3, %c0_4] : memref<1x8x32xbf16, #tpu.memory_space<vmem>>, vector<1x8x32xbf16>
    %3 = vector.shape_cast %2 : vector<1x8x32xbf16> to vector<8x32xbf16>
    %4 = arith.truncf %1 : vector<8x32xf32> to vector<8x32xbf16>
    %c0_5 = arith.constant 0 : index
    %c0_6 = arith.constant 0 : index
    %5 = vector.load %arg5[%c0_5, %c0_6] : memref<32x96xbf16, #tpu.memory_space<vmem>>, vector<32x96xbf16>
    %cst = arith.constant dense<0.000000e+00> : vector<8x96xf32>
    %6 = tpu.matmul %4, %5, %cst {dimension_numbers = #tpu.dot_dimension_numbers<[1], [0], [0], [1], [0, 0, 1, 1], [], []>} : vector<8x32xbf16>, vector<32x96xbf16>, vector<8x96xf32> -> vector<8x96xf32>
    %c0_7 = arith.constant 0 : index
    %c0_8 = arith.constant 0 : index
    %7 = vector.load %arg6[%c0_7, %c0_8] : memref<1x96xf32, #tpu.memory_space<vmem>>, vector<1x96xf32>
    %8 = vector.broadcast %7 : vector<1x96xf32> to vector<8x96xf32>
    %9 = arith.addf %6, %8 : vector<8x96xf32>
    %10 = vector.extract_strided_slice %9 {offsets = [0, 0], sizes = [8, 32], strides = [1, 1]} : vector<8x96xf32> to vector<8x32xf32>
    %11 = vector.extract_strided_slice %9 {offsets = [0, 32], sizes = [8, 32], strides = [1, 1]} : vector<8x96xf32> to vector<8x32xf32>
    %12 = vector.extract_strided_slice %9 {offsets = [0, 64], sizes = [8, 32], strides = [1, 1]} : vector<8x96xf32> to vector<8x32xf32>
    %c0_9 = arith.constant 0 : index
    %c0_10 = arith.constant 0 : index
    %c0_11 = arith.constant 0 : index
    %13 = vector.load %arg3[%c0_9, %c0_10, %c0_11] : memref<1x8x8xf32, #tpu.memory_space<vmem>>, vector<1x8x8xf32>
    %14 = vector.shape_cast %13 : vector<1x8x8xf32> to vector<8x8xf32>
    %c0_12 = arith.constant 0 : index
    %c0_13 = arith.constant 0 : index
    %15 = vector.load %arg7[%c0_12, %c0_13] : memref<32x32xbf16, #tpu.memory_space<vmem>>, vector<32x32xbf16>
    %c0_14 = arith.constant 0 : index
    %c0_15 = arith.constant 0 : index
    %16 = vector.load %arg8[%c0_14, %c0_15] : memref<1x32xf32, #tpu.memory_space<vmem>>, vector<1x32xf32>
    %c0_16 = arith.constant 0 : index
    %c0_17 = arith.constant 0 : index
    %17 = vector.load %arg9[%c0_16, %c0_17] : memref<1x32xf32, #tpu.memory_space<vmem>>, vector<1x32xf32>
    %c0_18 = arith.constant 0 : index
    %c0_19 = arith.constant 0 : index
    %18 = vector.load %arg10[%c0_18, %c0_19] : memref<1x32xf32, #tpu.memory_space<vmem>>, vector<1x32xf32>
    %cst_20 = arith.constant 0.353553385 : f32
    %19 = vector.broadcast %cst_20 : f32 to vector<8x32xf32>
    %20 = arith.mulf %10, %19 : vector<8x32xf32>
    %21 = arith.truncf %20 : vector<8x32xf32> to vector<8x32xbf16>
    %22 = arith.truncf %11 : vector<8x32xf32> to vector<8x32xbf16>
    %23 = arith.truncf %12 : vector<8x32xf32> to vector<8x32xbf16>
    %24 = vector.extract_strided_slice %21 {offsets = [0, 0], sizes = [8, 8], strides = [1, 1]} : vector<8x32xbf16> to vector<8x8xbf16>
    %25 = vector.extract_strided_slice %22 {offsets = [0, 0], sizes = [8, 8], strides = [1, 1]} : vector<8x32xbf16> to vector<8x8xbf16>
    %cst_21 = arith.constant dense<0.000000e+00> : vector<8x8xf32>
    %26 = tpu.matmul %24, %25, %cst_21 {dimension_numbers = #tpu.dot_dimension_numbers<[1], [1], [0], [0], [0, 0, 1, 0], [], []>} : vector<8x8xbf16>, vector<8x8xbf16>, vector<8x8xf32> -> vector<8x8xf32>
    %27 = arith.addf %26, %14 : vector<8x8xf32>
    %cst_22 = arith.constant dense<0xFF800000> : vector<8xf32>
    %28 = vector.multi_reduction <maximumf>, %27, %cst_22 [1] : vector<8x8xf32> to vector<8xf32>
    %29 = vector.shape_cast %28 : vector<8xf32> to vector<8x1xf32>
    %30 = vector.broadcast %29 : vector<8x1xf32> to vector<8x8xf32>
    %31 = arith.subf %27, %30 : vector<8x8xf32>
    %32 = math.exp %31 : vector<8x8xf32>
    %cst_23 = arith.constant dense<0.000000e+00> : vector<8xf32>
    %33 = vector.multi_reduction <add>, %32, %cst_23 [1] : vector<8x8xf32> to vector<8xf32>
    %34 = vector.shape_cast %33 : vector<8xf32> to vector<8x1xf32>
    %35 = tpu.reciprocal %34 {approx = true} : vector<8x1xf32> -> vector<8x1xf32>
    %36 = vector.broadcast %35 : vector<8x1xf32> to vector<8x8xf32>
    %37 = arith.mulf %32, %36 : vector<8x8xf32>
    %38 = arith.truncf %37 : vector<8x8xf32> to vector<8x8xbf16>
    %39 = vector.extract_strided_slice %23 {offsets = [0, 0], sizes = [8, 8], strides = [1, 1]} : vector<8x32xbf16> to vector<8x8xbf16>
    %cst_24 = arith.constant dense<0.000000e+00> : vector<8x8xf32>
    %40 = tpu.matmul %38, %39, %cst_24 {dimension_numbers = #tpu.dot_dimension_numbers<[1], [0], [0], [1], [0, 0, 1, 1], [], []>} : vector<8x8xbf16>, vector<8x8xbf16>, vector<8x8xf32> -> vector<8x8xf32>
    %c0_25 = arith.constant 0 : index
    %c0_26 = arith.constant 0 : index
    %41 = vector.load %arg24[%c0_25, %c0_26] : memref<8x32xf32, #tpu.memory_space<vmem>>, vector<8x8xf32>
    tpu.vector_store %arg24[%c0_25, %c0_26], %40 {strides = array<i32>} : memref<8x32xf32, #tpu.memory_space<vmem>>, vector<8x8xf32>,
    %42 = vector.extract_strided_slice %21 {offsets = [0, 8], sizes = [8, 8], strides = [1, 1]} : vector<8x32xbf16> to vector<8x8xbf16>
    %43 = vector.extract_strided_slice %22 {offsets = [0, 8], sizes = [8, 8], strides = [1, 1]} : vector<8x32xbf16> to vector<8x8xbf16>
    %cst_27 = arith.constant dense<0.000000e+00> : vector<8x8xf32>
    %44 = tpu.matmul %42, %43, %cst_27 {dimension_numbers = #tpu.dot_dimension_numbers<[1], [1], [0], [0], [0, 0, 1, 0], [], []>} : vector<8x8xbf16>, vector<8x8xbf16>, vector<8x8xf32> -> vector<8x8xf32>
    %45 = arith.addf %44, %14 : vector<8x8xf32>
    %cst_28 = arith.constant dense<0xFF800000> : vector<8xf32>
    %46 = vector.multi_reduction <maximumf>, %45, %cst_28 [1] : vector<8x8xf32> to vector<8xf32>
    %47 = vector.shape_cast %46 : vector<8xf32> to vector<8x1xf32>
    %48 = vector.broadcast %47 : vector<8x1xf32> to vector<8x8xf32>
    %49 = arith.subf %45, %48 : vector<8x8xf32>
    %50 = math.exp %49 : vector<8x8xf32>
    %cst_29 = arith.constant dense<0.000000e+00> : vector<8xf32>
    %51 = vector.multi_reduction <add>, %50, %cst_29 [1] : vector<8x8xf32> to vector<8xf32>
    %52 = vector.shape_cast %51 : vector<8xf32> to vector<8x1xf32>
    %53 = tpu.reciprocal %52 {approx = true} : vector<8x1xf32> -> vector<8x1xf32>
    %54 = vector.broadcast %53 : vector<8x1xf32> to vector<8x8xf32>
    %55 = arith.mulf %50, %54 : vector<8x8xf32>
    %56 = arith.truncf %55 : vector<8x8xf32> to vector<8x8xbf16>
    %57 = vector.extract_strided_slice %23 {offsets = [0, 8], sizes = [8, 8], strides = [1, 1]} : vector<8x32xbf16> to vector<8x8xbf16>
    %cst_30 = arith.constant dense<0.000000e+00> : vector<8x8xf32>
    %58 = tpu.matmul %56, %57, %cst_30 {dimension_numbers = #tpu.dot_dimension_numbers<[1], [0], [0], [1], [0, 0, 1, 1], [], []>} : vector<8x8xbf16>, vector<8x8xbf16>, vector<8x8xf32> -> vector<8x8xf32>
    %c0_31 = arith.constant 0 : index
    %c8 = arith.constant 8 : index
    %59 = vector.load %arg24[%c0_31, %c8] : memref<8x32xf32, #tpu.memory_space<vmem>>, vector<8x8xf32>
    tpu.vector_store %arg24[%c0_31, %c8], %58 {strides = array<i32>} : memref<8x32xf32, #tpu.memory_space<vmem>>, vector<8x8xf32>,
    %60 = vector.extract_strided_slice %21 {offsets = [0, 16], sizes = [8, 8], strides = [1, 1]} : vector<8x32xbf16> to vector<8x8xbf16>
    %61 = vector.extract_strided_slice %22 {offsets = [0, 16], sizes = [8, 8], strides = [1, 1]} : vector<8x32xbf16> to vector<8x8xbf16>
    %cst_32 = arith.constant dense<0.000000e+00> : vector<8x8xf32>
    %62 = tpu.matmul %60, %61, %cst_32 {dimension_numbers = #tpu.dot_dimension_numbers<[1], [1], [0], [0], [0, 0, 1, 0], [], []>} : vector<8x8xbf16>, vector<8x8xbf16>, vector<8x8xf32> -> vector<8x8xf32>
    %63 = arith.addf %62, %14 : vector<8x8xf32>
    %cst_33 = arith.constant dense<0xFF800000> : vector<8xf32>
    %64 = vector.multi_reduction <maximumf>, %63, %cst_33 [1] : vector<8x8xf32> to vector<8xf32>
    %65 = vector.shape_cast %64 : vector<8xf32> to vector<8x1xf32>
    %66 = vector.broadcast %65 : vector<8x1xf32> to vector<8x8xf32>
    %67 = arith.subf %63, %66 : vector<8x8xf32>
    %68 = math.exp %67 : vector<8x8xf32>
    %cst_34 = arith.constant dense<0.000000e+00> : vector<8xf32>
    %69 = vector.multi_reduction <add>, %68, %cst_34 [1] : vector<8x8xf32> to vector<8xf32>
    %70 = vector.shape_cast %69 : vector<8xf32> to vector<8x1xf32>
    %71 = tpu.reciprocal %70 {approx = true} : vector<8x1xf32> -> vector<8x1xf32>
    %72 = vector.broadcast %71 : vector<8x1xf32> to vector<8x8xf32>
    %73 = arith.mulf %68, %72 : vector<8x8xf32>
    %74 = arith.truncf %73 : vector<8x8xf32> to vector<8x8xbf16>
    %75 = vector.extract_strided_slice %23 {offsets = [0, 16], sizes = [8, 8], strides = [1, 1]} : vector<8x32xbf16> to vector<8x8xbf16>
    %cst_35 = arith.constant dense<0.000000e+00> : vector<8x8xf32>
    %76 = tpu.matmul %74, %75, %cst_35 {dimension_numbers = #tpu.dot_dimension_numbers<[1], [0], [0], [1], [0, 0, 1, 1], [], []>} : vector<8x8xbf16>, vector<8x8xbf16>, vector<8x8xf32> -> vector<8x8xf32>
    %c0_36 = arith.constant 0 : index
    %c16 = arith.constant 16 : index
    %77 = vector.load %arg24[%c0_36, %c16] : memref<8x32xf32, #tpu.memory_space<vmem>>, vector<8x8xf32>
    tpu.vector_store %arg24[%c0_36, %c16], %76 {strides = array<i32>} : memref<8x32xf32, #tpu.memory_space<vmem>>, vector<8x8xf32>,
    %78 = vector.extract_strided_slice %21 {offsets = [0, 24], sizes = [8, 8], strides = [1, 1]} : vector<8x32xbf16> to vector<8x8xbf16>
    %79 = vector.extract_strided_slice %22 {offsets = [0, 24], sizes = [8, 8], strides = [1, 1]} : vector<8x32xbf16> to vector<8x8xbf16>
    %cst_37 = arith.constant dense<0.000000e+00> : vector<8x8xf32>
    %80 = tpu.matmul %78, %79, %cst_37 {dimension_numbers = #tpu.dot_dimension_numbers<[1], [1], [0], [0], [0, 0, 1, 0], [], []>} : vector<8x8xbf16>, vector<8x8xbf16>, vector<8x8xf32> -> vector<8x8xf32>
    %81 = arith.addf %80, %14 : vector<8x8xf32>
    %cst_38 = arith.constant dense<0xFF800000> : vector<8xf32>
    %82 = vector.multi_reduction <maximumf>, %81, %cst_38 [1] : vector<8x8xf32> to vector<8xf32>
    %83 = vector.shape_cast %82 : vector<8xf32> to vector<8x1xf32>
    %84 = vector.broadcast %83 : vector<8x1xf32> to vector<8x8xf32>
    %85 = arith.subf %81, %84 : vector<8x8xf32>
    %86 = math.exp %85 : vector<8x8xf32>
    %cst_39 = arith.constant dense<0.000000e+00> : vector<8xf32>
    %87 = vector.multi_reduction <add>, %86, %cst_39 [1] : vector<8x8xf32> to vector<8xf32>
    %88 = vector.shape_cast %87 : vector<8xf32> to vector<8x1xf32>
    %89 = tpu.reciprocal %88 {approx = true} : vector<8x1xf32> -> vector<8x1xf32>
    %90 = vector.broadcast %89 : vector<8x1xf32> to vector<8x8xf32>
    %91 = arith.mulf %86, %90 : vector<8x8xf32>
    %92 = arith.truncf %91 : vector<8x8xf32> to vector<8x8xbf16>
    %93 = vector.extract_strided_slice %23 {offsets = [0, 24], sizes = [8, 8], strides = [1, 1]} : vector<8x32xbf16> to vector<8x8xbf16>
    %cst_40 = arith.constant dense<0.000000e+00> : vector<8x8xf32>
    %94 = tpu.matmul %92, %93, %cst_40 {dimension_numbers = #tpu.dot_dimension_numbers<[1], [0], [0], [1], [0, 0, 1, 1], [], []>} : vector<8x8xbf16>, vector<8x8xbf16>, vector<8x8xf32> -> vector<8x8xf32>
    %c0_41 = arith.constant 0 : index
    %c24 = arith.constant 24 : index
    %95 = vector.load %arg24[%c0_41, %c24] : memref<8x32xf32, #tpu.memory_space<vmem>>, vector<8x8xf32>
    tpu.vector_store %arg24[%c0_41, %c24], %94 {strides = array<i32>} : memref<8x32xf32, #tpu.memory_space<vmem>>, vector<8x8xf32>,
    %c0_42 = arith.constant 0 : index
    %c0_43 = arith.constant 0 : index
    %96 = vector.load %arg24[%c0_42, %c0_43] : memref<8x32xf32, #tpu.memory_space<vmem>>, vector<8x32xf32>
    %97 = arith.truncf %96 : vector<8x32xf32> to vector<8x32xbf16>
    %cst_44 = arith.constant dense<0.000000e+00> : vector<8x32xf32>
    %98 = tpu.matmul %97, %15, %cst_44 {dimension_numbers = #tpu.dot_dimension_numbers<[1], [0], [0], [1], [0, 0, 1, 1], [], []>} : vector<8x32xbf16>, vector<32x32xbf16>, vector<8x32xf32> -> vector<8x32xf32>
    %99 = vector.broadcast %16 : vector<1x32xf32> to vector<8x32xf32>
    %100 = arith.addf %98, %99 : vector<8x32xf32>
    %101 = arith.addf %100, %1 : vector<8x32xf32>
    %cst_45 = arith.constant dense<0.000000e+00> : vector<8xf32>
    %102 = vector.multi_reduction <add>, %101, %cst_45 [1] : vector<8x32xf32> to vector<8xf32>
    %103 = vector.shape_cast %102 : vector<8xf32> to vector<8x1xf32>
    %cst_46 = arith.constant 3.200000e+01 : f32
    %104 = vector.broadcast %cst_46 : f32 to vector<8x1xf32>
    %105 = arith.divf %103, %104 : vector<8x1xf32>
    %106 = vector.broadcast %105 : vector<8x1xf32> to vector<8x32xf32>
    %107 = arith.subf %101, %106 : vector<8x32xf32>
    %108 = arith.mulf %107, %107 : vector<8x32xf32>
    %cst_47 = arith.constant dense<0.000000e+00> : vector<8xf32>
    %109 = vector.multi_reduction <add>, %108, %cst_47 [1] : vector<8x32xf32> to vector<8xf32>
    %110 = vector.shape_cast %109 : vector<8xf32> to vector<8x1xf32>
    %cst_48 = arith.constant 3.200000e+01 : f32
    %111 = vector.broadcast %cst_48 : f32 to vector<8x1xf32>
    %112 = arith.divf %110, %111 : vector<8x1xf32>
    %113 = vector.broadcast %105 : vector<8x1xf32> to vector<8x32xf32>
    %114 = arith.subf %101, %113 : vector<8x32xf32>
    %cst_49 = arith.constant 9.99999974E-6 : f32
    %115 = vector.broadcast %cst_49 : f32 to vector<8x1xf32>
    %116 = arith.addf %112, %115 : vector<8x1xf32>
    %117 = math.rsqrt %116 : vector<8x1xf32>
    %118 = vector.broadcast %117 : vector<8x1xf32> to vector<8x32xf32>
    %119 = arith.mulf %114, %118 : vector<8x32xf32>
    %120 = vector.broadcast %17 : vector<1x32xf32> to vector<8x32xf32>
    %121 = arith.mulf %119, %120 : vector<8x32xf32>
    %122 = vector.broadcast %18 : vector<1x32xf32> to vector<8x32xf32>
    %123 = arith.addf %121, %122 : vector<8x32xf32>
    %c0_50 = arith.constant 0 : index
    %c0_51 = arith.constant 0 : index
    %124 = vector.load %arg11[%c0_50, %c0_51] : memref<32x96xbf16, #tpu.memory_space<vmem>>, vector<32x96xbf16>
    %c0_52 = arith.constant 0 : index
    %c0_53 = arith.constant 0 : index
    %125 = vector.load %arg12[%c0_52, %c0_53] : memref<1x96xf32, #tpu.memory_space<vmem>>, vector<1x96xf32>
    %126 = arith.truncf %123 : vector<8x32xf32> to vector<8x32xbf16>
    %127 = vector.extract_strided_slice %124 {offsets = [0, 0], sizes = [32, 32], strides = [1, 1]} : vector<32x96xbf16> to vector<32x32xbf16>
    %cst_54 = arith.constant dense<0.000000e+00> : vector<8x32xf32>
    %128 = tpu.matmul %126, %127, %cst_54 {dimension_numbers = #tpu.dot_dimension_numbers<[1], [0], [0], [1], [0, 0, 1, 1], [], []>} : vector<8x32xbf16>, vector<32x32xbf16>, vector<8x32xf32> -> vector<8x32xf32>
    %129 = vector.extract_strided_slice %125 {offsets = [0, 0], sizes = [1, 32], strides = [1, 1]} : vector<1x96xf32> to vector<1x32xf32>
    %130 = vector.broadcast %129 : vector<1x32xf32> to vector<8x32xf32>
    %131 = arith.addf %128, %130 : vector<8x32xf32>
    %132 = vector.extract_strided_slice %124 {offsets = [0, 32], sizes = [32, 64], strides = [1, 1]} : vector<32x96xbf16> to vector<32x64xbf16>
    %cst_55 = arith.constant dense<0.000000e+00> : vector<8x64xf32>
    %133 = tpu.matmul %3, %132, %cst_55 {dimension_numbers = #tpu.dot_dimension_numbers<[1], [0], [0], [1], [0, 0, 1, 1], [], []>} : vector<8x32xbf16>, vector<32x64xbf16>, vector<8x64xf32> -> vector<8x64xf32>
    %134 = vector.extract_strided_slice %125 {offsets = [0, 32], sizes = [1, 64], strides = [1, 1]} : vector<1x96xf32> to vector<1x64xf32>
    %135 = vector.broadcast %134 : vector<1x64xf32> to vector<8x64xf32>
    %136 = arith.addf %133, %135 : vector<8x64xf32>
    %137 = vector.extract_strided_slice %136 {offsets = [0, 0], sizes = [8, 32], strides = [1, 1]} : vector<8x64xf32> to vector<8x32xf32>
    %138 = vector.extract_strided_slice %136 {offsets = [0, 32], sizes = [8, 32], strides = [1, 1]} : vector<8x64xf32> to vector<8x32xf32>
    %c0_56 = arith.constant 0 : index
    %c0_57 = arith.constant 0 : index
    %c0_58 = arith.constant 0 : index
    %139 = vector.load %arg4[%c0_56, %c0_57, %c0_58] : memref<1x8x8xf32, #tpu.memory_space<vmem>>, vector<1x8x8xf32>
    %140 = vector.shape_cast %139 : vector<1x8x8xf32> to vector<8x8xf32>
    %c0_59 = arith.constant 0 : index
    %c0_60 = arith.constant 0 : index
    %141 = vector.load %arg13[%c0_59, %c0_60] : memref<32x32xbf16, #tpu.memory_space<vmem>>, vector<32x32xbf16>
    %c0_61 = arith.constant 0 : index
    %c0_62 = arith.constant 0 : index
    %142 = vector.load %arg14[%c0_61, %c0_62] : memref<1x32xf32, #tpu.memory_space<vmem>>, vector<1x32xf32>
    %c0_63 = arith.constant 0 : index
    %c0_64 = arith.constant 0 : index
    %143 = vector.load %arg15[%c0_63, %c0_64] : memref<1x32xf32, #tpu.memory_space<vmem>>, vector<1x32xf32>
    %c0_65 = arith.constant 0 : index
    %c0_66 = arith.constant 0 : index
    %144 = vector.load %arg16[%c0_65, %c0_66] : memref<1x32xf32, #tpu.memory_space<vmem>>, vector<1x32xf32>
    %cst_67 = arith.constant 0.353553385 : f32
    %145 = vector.broadcast %cst_67 : f32 to vector<8x32xf32>
    %146 = arith.mulf %131, %145 : vector<8x32xf32>
    %147 = arith.truncf %146 : vector<8x32xf32> to vector<8x32xbf16>
    %148 = arith.truncf %137 : vector<8x32xf32> to vector<8x32xbf16>
    %149 = arith.truncf %138 : vector<8x32xf32> to vector<8x32xbf16>
    %150 = vector.extract_strided_slice %147 {offsets = [0, 0], sizes = [8, 8], strides = [1, 1]} : vector<8x32xbf16> to vector<8x8xbf16>
    %151 = vector.extract_strided_slice %148 {offsets = [0, 0], sizes = [8, 8], strides = [1, 1]} : vector<8x32xbf16> to vector<8x8xbf16>
    %cst_68 = arith.constant dense<0.000000e+00> : vector<8x8xf32>
    %152 = tpu.matmul %150, %151, %cst_68 {dimension_numbers = #tpu.dot_dimension_numbers<[1], [1], [0], [0], [0, 0, 1, 0], [], []>} : vector<8x8xbf16>, vector<8x8xbf16>, vector<8x8xf32> -> vector<8x8xf32>
    %153 = arith.addf %152, %140 : vector<8x8xf32>
    %cst_69 = arith.constant dense<0xFF800000> : vector<8xf32>
    %154 = vector.multi_reduction <maximumf>, %153, %cst_69 [1] : vector<8x8xf32> to vector<8xf32>
    %155 = vector.shape_cast %154 : vector<8xf32> to vector<8x1xf32>
    %156 = vector.broadcast %155 : vector<8x1xf32> to vector<8x8xf32>
    %157 = arith.subf %153, %156 : vector<8x8xf32>
    %158 = math.exp %157 : vector<8x8xf32>
    %cst_70 = arith.constant dense<0.000000e+00> : vector<8xf32>
    %159 = vector.multi_reduction <add>, %158, %cst_70 [1] : vector<8x8xf32> to vector<8xf32>
    %160 = vector.shape_cast %159 : vector<8xf32> to vector<8x1xf32>
    %161 = tpu.reciprocal %160 {approx = true} : vector<8x1xf32> -> vector<8x1xf32>
    %162 = vector.broadcast %161 : vector<8x1xf32> to vector<8x8xf32>
    %163 = arith.mulf %158, %162 : vector<8x8xf32>
    %164 = arith.truncf %163 : vector<8x8xf32> to vector<8x8xbf16>
    %165 = vector.extract_strided_slice %149 {offsets = [0, 0], sizes = [8, 8], strides = [1, 1]} : vector<8x32xbf16> to vector<8x8xbf16>
    %cst_71 = arith.constant dense<0.000000e+00> : vector<8x8xf32>
    %166 = tpu.matmul %164, %165, %cst_71 {dimension_numbers = #tpu.dot_dimension_numbers<[1], [0], [0], [1], [0, 0, 1, 1], [], []>} : vector<8x8xbf16>, vector<8x8xbf16>, vector<8x8xf32> -> vector<8x8xf32>
    %c0_72 = arith.constant 0 : index
    %c0_73 = arith.constant 0 : index
    %167 = vector.load %arg24[%c0_72, %c0_73] : memref<8x32xf32, #tpu.memory_space<vmem>>, vector<8x8xf32>
    tpu.vector_store %arg24[%c0_72, %c0_73], %166 {strides = array<i32>} : memref<8x32xf32, #tpu.memory_space<vmem>>, vector<8x8xf32>,
    %168 = vector.extract_strided_slice %147 {offsets = [0, 8], sizes = [8, 8], strides = [1, 1]} : vector<8x32xbf16> to vector<8x8xbf16>
    %169 = vector.extract_strided_slice %148 {offsets = [0, 8], sizes = [8, 8], strides = [1, 1]} : vector<8x32xbf16> to vector<8x8xbf16>
    %cst_74 = arith.constant dense<0.000000e+00> : vector<8x8xf32>
    %170 = tpu.matmul %168, %169, %cst_74 {dimension_numbers = #tpu.dot_dimension_numbers<[1], [1], [0], [0], [0, 0, 1, 0], [], []>} : vector<8x8xbf16>, vector<8x8xbf16>, vector<8x8xf32> -> vector<8x8xf32>
    %171 = arith.addf %170, %140 : vector<8x8xf32>
    %cst_75 = arith.constant dense<0xFF800000> : vector<8xf32>
    %172 = vector.multi_reduction <maximumf>, %171, %cst_75 [1] : vector<8x8xf32> to vector<8xf32>
    %173 = vector.shape_cast %172 : vector<8xf32> to vector<8x1xf32>
    %174 = vector.broadcast %173 : vector<8x1xf32> to vector<8x8xf32>
    %175 = arith.subf %171, %174 : vector<8x8xf32>
    %176 = math.exp %175 : vector<8x8xf32>
    %cst_76 = arith.constant dense<0.000000e+00> : vector<8xf32>
    %177 = vector.multi_reduction <add>, %176, %cst_76 [1] : vector<8x8xf32> to vector<8xf32>
    %178 = vector.shape_cast %177 : vector<8xf32> to vector<8x1xf32>
    %179 = tpu.reciprocal %178 {approx = true} : vector<8x1xf32> -> vector<8x1xf32>
    %180 = vector.broadcast %179 : vector<8x1xf32> to vector<8x8xf32>
    %181 = arith.mulf %176, %180 : vector<8x8xf32>
    %182 = arith.truncf %181 : vector<8x8xf32> to vector<8x8xbf16>
    %183 = vector.extract_strided_slice %149 {offsets = [0, 8], sizes = [8, 8], strides = [1, 1]} : vector<8x32xbf16> to vector<8x8xbf16>
    %cst_77 = arith.constant dense<0.000000e+00> : vector<8x8xf32>
    %184 = tpu.matmul %182, %183, %cst_77 {dimension_numbers = #tpu.dot_dimension_numbers<[1], [0], [0], [1], [0, 0, 1, 1], [], []>} : vector<8x8xbf16>, vector<8x8xbf16>, vector<8x8xf32> -> vector<8x8xf32>
    %c0_78 = arith.constant 0 : index
    %c8_79 = arith.constant 8 : index
    %185 = vector.load %arg24[%c0_78, %c8_79] : memref<8x32xf32, #tpu.memory_space<vmem>>, vector<8x8xf32>
    tpu.vector_store %arg24[%c0_78, %c8_79], %184 {strides = array<i32>} : memref<8x32xf32, #tpu.memory_space<vmem>>, vector<8x8xf32>,
    %186 = vector.extract_strided_slice %147 {offsets = [0, 16], sizes = [8, 8], strides = [1, 1]} : vector<8x32xbf16> to vector<8x8xbf16>
    %187 = vector.extract_strided_slice %148 {offsets = [0, 16], sizes = [8, 8], strides = [1, 1]} : vector<8x32xbf16> to vector<8x8xbf16>
    %cst_80 = arith.constant dense<0.000000e+00> : vector<8x8xf32>
    %188 = tpu.matmul %186, %187, %cst_80 {dimension_numbers = #tpu.dot_dimension_numbers<[1], [1], [0], [0], [0, 0, 1, 0], [], []>} : vector<8x8xbf16>, vector<8x8xbf16>, vector<8x8xf32> -> vector<8x8xf32>
    %189 = arith.addf %188, %140 : vector<8x8xf32>
    %cst_81 = arith.constant dense<0xFF800000> : vector<8xf32>
    %190 = vector.multi_reduction <maximumf>, %189, %cst_81 [1] : vector<8x8xf32> to vector<8xf32>
    %191 = vector.shape_cast %190 : vector<8xf32> to vector<8x1xf32>
    %192 = vector.broadcast %191 : vector<8x1xf32> to vector<8x8xf32>
    %193 = arith.subf %189, %192 : vector<8x8xf32>
    %194 = math.exp %193 : vector<8x8xf32>
    %cst_82 = arith.constant dense<0.000000e+00> : vector<8xf32>
    %195 = vector.multi_reduction <add>, %194, %cst_82 [1] : vector<8x8xf32> to vector<8xf32>
    %196 = vector.shape_cast %195 : vector<8xf32> to vector<8x1xf32>
    %197 = tpu.reciprocal %196 {approx = true} : vector<8x1xf32> -> vector<8x1xf32>
    %198 = vector.broadcast %197 : vector<8x1xf32> to vector<8x8xf32>
    %199 = arith.mulf %194, %198 : vector<8x8xf32>
    %200 = arith.truncf %199 : vector<8x8xf32> to vector<8x8xbf16>
    %201 = vector.extract_strided_slice %149 {offsets = [0, 16], sizes = [8, 8], strides = [1, 1]} : vector<8x32xbf16> to vector<8x8xbf16>
    %cst_83 = arith.constant dense<0.000000e+00> : vector<8x8xf32>
    %202 = tpu.matmul %200, %201, %cst_83 {dimension_numbers = #tpu.dot_dimension_numbers<[1], [0], [0], [1], [0, 0, 1, 1], [], []>} : vector<8x8xbf16>, vector<8x8xbf16>, vector<8x8xf32> -> vector<8x8xf32>
    %c0_84 = arith.constant 0 : index
    %c16_85 = arith.constant 16 : index
    %203 = vector.load %arg24[%c0_84, %c16_85] : memref<8x32xf32, #tpu.memory_space<vmem>>, vector<8x8xf32>
    tpu.vector_store %arg24[%c0_84, %c16_85], %202 {strides = array<i32>} : memref<8x32xf32, #tpu.memory_space<vmem>>, vector<8x8xf32>,
    %204 = vector.extract_strided_slice %147 {offsets = [0, 24], sizes = [8, 8], strides = [1, 1]} : vector<8x32xbf16> to vector<8x8xbf16>
    %205 = vector.extract_strided_slice %148 {offsets = [0, 24], sizes = [8, 8], strides = [1, 1]} : vector<8x32xbf16> to vector<8x8xbf16>
    %cst_86 = arith.constant dense<0.000000e+00> : vector<8x8xf32>
    %206 = tpu.matmul %204, %205, %cst_86 {dimension_numbers = #tpu.dot_dimension_numbers<[1], [1], [0], [0], [0, 0, 1, 0], [], []>} : vector<8x8xbf16>, vector<8x8xbf16>, vector<8x8xf32> -> vector<8x8xf32>
    %207 = arith.addf %206, %140 : vector<8x8xf32>
    %cst_87 = arith.constant dense<0xFF800000> : vector<8xf32>
    %208 = vector.multi_reduction <maximumf>, %207, %cst_87 [1] : vector<8x8xf32> to vector<8xf32>
    %209 = vector.shape_cast %208 : vector<8xf32> to vector<8x1xf32>
    %210 = vector.broadcast %209 : vector<8x1xf32> to vector<8x8xf32>
    %211 = arith.subf %207, %210 : vector<8x8xf32>
    %212 = math.exp %211 : vector<8x8xf32>
    %cst_88 = arith.constant dense<0.000000e+00> : vector<8xf32>
    %213 = vector.multi_reduction <add>, %212, %cst_88 [1] : vector<8x8xf32> to vector<8xf32>
    %214 = vector.shape_cast %213 : vector<8xf32> to vector<8x1xf32>
    %215 = tpu.reciprocal %214 {approx = true} : vector<8x1xf32> -> vector<8x1xf32>
    %216 = vector.broadcast %215 : vector<8x1xf32> to vector<8x8xf32>
    %217 = arith.mulf %212, %216 : vector<8x8xf32>
    %218 = arith.truncf %217 : vector<8x8xf32> to vector<8x8xbf16>
    %219 = vector.extract_strided_slice %149 {offsets = [0, 24], sizes = [8, 8], strides = [1, 1]} : vector<8x32xbf16> to vector<8x8xbf16>
    %cst_89 = arith.constant dense<0.000000e+00> : vector<8x8xf32>
    %220 = tpu.matmul %218, %219, %cst_89 {dimension_numbers = #tpu.dot_dimension_numbers<[1], [0], [0], [1], [0, 0, 1, 1], [], []>} : vector<8x8xbf16>, vector<8x8xbf16>, vector<8x8xf32> -> vector<8x8xf32>
    %c0_90 = arith.constant 0 : index
    %c24_91 = arith.constant 24 : index
    %221 = vector.load %arg24[%c0_90, %c24_91] : memref<8x32xf32, #tpu.memory_space<vmem>>, vector<8x8xf32>
    tpu.vector_store %arg24[%c0_90, %c24_91], %220 {strides = array<i32>} : memref<8x32xf32, #tpu.memory_space<vmem>>, vector<8x8xf32>,
    %c0_92 = arith.constant 0 : index
    %c0_93 = arith.constant 0 : index
    %222 = vector.load %arg24[%c0_92, %c0_93] : memref<8x32xf32, #tpu.memory_space<vmem>>, vector<8x32xf32>
    %223 = arith.truncf %222 : vector<8x32xf32> to vector<8x32xbf16>
    %cst_94 = arith.constant dense<0.000000e+00> : vector<8x32xf32>
    %224 = tpu.matmul %223, %141, %cst_94 {dimension_numbers = #tpu.dot_dimension_numbers<[1], [0], [0], [1], [0, 0, 1, 1], [], []>} : vector<8x32xbf16>, vector<32x32xbf16>, vector<8x32xf32> -> vector<8x32xf32>
    %225 = vector.broadcast %142 : vector<1x32xf32> to vector<8x32xf32>
    %226 = arith.addf %224, %225 : vector<8x32xf32>
    %227 = arith.addf %226, %123 : vector<8x32xf32>
    %cst_95 = arith.constant dense<0.000000e+00> : vector<8xf32>
    %228 = vector.multi_reduction <add>, %227, %cst_95 [1] : vector<8x32xf32> to vector<8xf32>
    %229 = vector.shape_cast %228 : vector<8xf32> to vector<8x1xf32>
    %cst_96 = arith.constant 3.200000e+01 : f32
    %230 = vector.broadcast %cst_96 : f32 to vector<8x1xf32>
    %231 = arith.divf %229, %230 : vector<8x1xf32>
    %232 = vector.broadcast %231 : vector<8x1xf32> to vector<8x32xf32>
    %233 = arith.subf %227, %232 : vector<8x32xf32>
    %234 = arith.mulf %233, %233 : vector<8x32xf32>
    %cst_97 = arith.constant dense<0.000000e+00> : vector<8xf32>
    %235 = vector.multi_reduction <add>, %234, %cst_97 [1] : vector<8x32xf32> to vector<8xf32>
    %236 = vector.shape_cast %235 : vector<8xf32> to vector<8x1xf32>
    %cst_98 = arith.constant 3.200000e+01 : f32
    %237 = vector.broadcast %cst_98 : f32 to vector<8x1xf32>
    %238 = arith.divf %236, %237 : vector<8x1xf32>
    %239 = vector.broadcast %231 : vector<8x1xf32> to vector<8x32xf32>
    %240 = arith.subf %227, %239 : vector<8x32xf32>
    %cst_99 = arith.constant 9.99999974E-6 : f32
    %241 = vector.broadcast %cst_99 : f32 to vector<8x1xf32>
    %242 = arith.addf %238, %241 : vector<8x1xf32>
    %243 = math.rsqrt %242 : vector<8x1xf32>
    %244 = vector.broadcast %243 : vector<8x1xf32> to vector<8x32xf32>
    %245 = arith.mulf %240, %244 : vector<8x32xf32>
    %246 = vector.broadcast %143 : vector<1x32xf32> to vector<8x32xf32>
    %247 = arith.mulf %245, %246 : vector<8x32xf32>
    %248 = vector.broadcast %144 : vector<1x32xf32> to vector<8x32xf32>
    %249 = arith.addf %247, %248 : vector<8x32xf32>
    %250 = arith.truncf %249 : vector<8x32xf32> to vector<8x32xbf16>
    %c0_100 = arith.constant 0 : index
    %c0_101 = arith.constant 0 : index
    %251 = vector.load %arg17[%c0_100, %c0_101] : memref<32x64xbf16, #tpu.memory_space<vmem>>, vector<32x64xbf16>
    %cst_102 = arith.constant dense<0.000000e+00> : vector<8x64xf32>
    %252 = tpu.matmul %250, %251, %cst_102 {dimension_numbers = #tpu.dot_dimension_numbers<[1], [0], [0], [1], [0, 0, 1, 1], [], []>} : vector<8x32xbf16>, vector<32x64xbf16>, vector<8x64xf32> -> vector<8x64xf32>
    %c0_103 = arith.constant 0 : index
    %c0_104 = arith.constant 0 : index
    %253 = vector.load %arg18[%c0_103, %c0_104] : memref<1x64xf32, #tpu.memory_space<vmem>>, vector<1x64xf32>
    %254 = vector.broadcast %253 : vector<1x64xf32> to vector<8x64xf32>
    %255 = arith.addf %252, %254 : vector<8x64xf32>
    %cst_105 = arith.constant 0.000000e+00 : f32
    %256 = vector.broadcast %cst_105 : f32 to vector<8x64xf32>
    %257 = arith.maximumf %255, %256 : vector<8x64xf32>
    %258 = arith.truncf %257 : vector<8x64xf32> to vector<8x64xbf16>
    %c0_106 = arith.constant 0 : index
    %c0_107 = arith.constant 0 : index
    %259 = vector.load %arg19[%c0_106, %c0_107] : memref<64x32xbf16, #tpu.memory_space<vmem>>, vector<64x32xbf16>
    %cst_108 = arith.constant dense<0.000000e+00> : vector<8x32xf32>
    %260 = tpu.matmul %258, %259, %cst_108 {dimension_numbers = #tpu.dot_dimension_numbers<[1], [0], [0], [1], [0, 0, 1, 1], [], []>} : vector<8x64xbf16>, vector<64x32xbf16>, vector<8x32xf32> -> vector<8x32xf32>
    %c0_109 = arith.constant 0 : index
    %c0_110 = arith.constant 0 : index
    %261 = vector.load %arg20[%c0_109, %c0_110] : memref<1x32xf32, #tpu.memory_space<vmem>>, vector<1x32xf32>
    %262 = vector.broadcast %261 : vector<1x32xf32> to vector<8x32xf32>
    %263 = arith.addf %260, %262 : vector<8x32xf32>
    %264 = arith.addf %263, %249 : vector<8x32xf32>
    %c0_111 = arith.constant 0 : index
    %c0_112 = arith.constant 0 : index
    %265 = vector.load %arg21[%c0_111, %c0_112] : memref<1x32xf32, #tpu.memory_space<vmem>>, vector<1x32xf32>
    %c0_113 = arith.constant 0 : index
    %c0_114 = arith.constant 0 : index
    %266 = vector.load %arg22[%c0_113, %c0_114] : memref<1x32xf32, #tpu.memory_space<vmem>>, vector<1x32xf32>
    %cst_115 = arith.constant dense<0.000000e+00> : vector<8xf32>
    %267 = vector.multi_reduction <add>, %264, %cst_115 [1] : vector<8x32xf32> to vector<8xf32>
    %268 = vector.shape_cast %267 : vector<8xf32> to vector<8x1xf32>
    %cst_116 = arith.constant 3.200000e+01 : f32
    %269 = vector.broadcast %cst_116 : f32 to vector<8x1xf32>
    %270 = arith.divf %268, %269 : vector<8x1xf32>
    %271 = vector.broadcast %270 : vector<8x1xf32> to vector<8x32xf32>
    %272 = arith.subf %264, %271 : vector<8x32xf32>
    %273 = arith.mulf %272, %272 : vector<8x32xf32>
    %cst_117 = arith.constant dense<0.000000e+00> : vector<8xf32>
    %274 = vector.multi_reduction <add>, %273, %cst_117 [1] : vector<8x32xf32> to vector<8xf32>
    %275 = vector.shape_cast %274 : vector<8xf32> to vector<8x1xf32>
    %cst_118 = arith.constant 3.200000e+01 : f32
    %276 = vector.broadcast %cst_118 : f32 to vector<8x1xf32>
    %277 = arith.divf %275, %276 : vector<8x1xf32>
    %278 = vector.broadcast %270 : vector<8x1xf32> to vector<8x32xf32>
    %279 = arith.subf %264, %278 : vector<8x32xf32>
    %cst_119 = arith.constant 9.99999974E-6 : f32
    %280 = vector.broadcast %cst_119 : f32 to vector<8x1xf32>
    %281 = arith.addf %277, %280 : vector<8x1xf32>
    %282 = math.rsqrt %281 : vector<8x1xf32>
    %283 = vector.broadcast %282 : vector<8x1xf32> to vector<8x32xf32>
    %284 = arith.mulf %279, %283 : vector<8x32xf32>
    %285 = vector.broadcast %265 : vector<1x32xf32> to vector<8x32xf32>
    %286 = arith.mulf %284, %285 : vector<8x32xf32>
    %287 = vector.broadcast %266 : vector<1x32xf32> to vector<8x32xf32>
    %288 = arith.addf %286, %287 : vector<8x32xf32>
    %c0_120 = arith.constant 0 : index
    %c0_121 = arith.constant 0 : index
    %c0_122 = arith.constant 0 : index
    %289 = vector.load %arg23[%c0_120, %c0_121, %c0_122] : memref<1x8x32xf32, #tpu.memory_space<vmem>>, vector<1x8x32xf32>
    %290 = vector.shape_cast %289 : vector<1x8x32xf32> to vector<8x32xf32>
    %291 = vector.shape_cast %288 : vector<8x32xf32> to vector<1x8x32xf32>
    tpu.vector_store %arg23[%c0_120, %c0_121, %c0_122], %291 {strides = array<i32>} : memref<1x8x32xf32, #tpu.memory_space<vmem>>, vector<1x8x32xf32>,
    return
  }
  func.func @transform_0(%arg0: i32) -> (i32, i32, i32) {
    %c0_i32 = arith.constant 0 : i32
    %c0_i32_0 = arith.constant 0 : i32
    %c0_i32_1 = arith.constant 0 : i32
    return %arg0, %c0_i32, %c0_i32_0 : i32, i32, i32
  }
  func.func @transform_1(%arg0: i32) -> (i32, i32, i32) {
    %c0_i32 = arith.constant 0 : i32
    %c0_i32_0 = arith.constant 0 : i32
    %c0_i32_1 = arith.constant 0 : i32
    return %arg0, %c0_i32, %c0_i32_0 : i32, i32, i32
  }
  func.func @transform_2(%arg0: i32) -> (i32, i32, i32) {
    %c0_i32 = arith.constant 0 : i32
    %c0_i32_0 = arith.constant 0 : i32
    %c0_i32_1 = arith.constant 0 : i32
    return %arg0, %c0_i32, %c0_i32_0 : i32, i32, i32
  }
  func.func @transform_3(%arg0: i32) -> (i32, i32, i32) {
    %c0_i32 = arith.constant 0 : i32
    %c0_i32_0 = arith.constant 0 : i32
    %c0_i32_1 = arith.constant 0 : i32
    return %arg0, %c0_i32, %c0_i32_0 : i32, i32, i32
  }
  func.func @transform_4(%arg0: i32) -> (i32, i32) {
    %c0_i32 = arith.constant 0 : i32
    %c0_i32_0 = arith.constant 0 : i32
    %c0_i32_1 = arith.constant 0 : i32
    return %c0_i32, %c0_i32_0 : i32, i32
  }
  func.func @transform_5(%arg0: i32) -> (i32, i32) {
    %c0_i32 = arith.constant 0 : i32
    %c0_i32_0 = arith.constant 0 : i32
    %c0_i32_1 = arith.constant 0 : i32
    return %c0_i32, %c0_i32_0 : i32, i32
  }
  func.func @transform_6(%arg0: i32) -> (i32, i32) {
    %c0_i32 = arith.constant 0 : i32
    %c0_i32_0 = arith.constant 0 : i32
    %c0_i32_1 = arith.constant 0 : i32
    return %c0_i32, %c0_i32_0 : i32, i32
  }
  func.func @transform_7(%arg0: i32) -> (i32, i32) {
    %c0_i32 = arith.constant 0 : i32
    %c0_i32_0 = arith.constant 0 : i32
    %c0_i32_1 = arith.constant 0 : i32
    return %c0_i32, %c0_i32_0 : i32, i32
  }
  func.func @transform_8(%arg0: i32) -> (i32, i32) {
    %c0_i32 = arith.constant 0 : i32
    %c0_i32_0 = arith.constant 0 : i32
    %c0_i32_1 = arith.constant 0 : i32
    return %c0_i32, %c0_i32_0 : i32, i32
  }
  func.func @transform_9(%arg0: i32) -> (i32, i32) {
    %c0_i32 = arith.constant 0 : i32
    %c0_i32_0 = arith.constant 0 : i32
    %c0_i32_1 = arith.constant 0 : i32
    return %c0_i32, %c0_i32_0 : i32, i32
  }
  func.func @transform_10(%arg0: i32) -> (i32, i32) {
    %c0_i32 = arith.constant 0 : i32
    %c0_i32_0 = arith.constant 0 : i32
    %c0_i32_1 = arith.constant 0 : i32
    return %c0_i32, %c0_i32_0 : i32, i32
  }
  func.func @transform_11(%arg0: i32) -> (i32, i32) {
    %c0_i32 = arith.constant 0 : i32
    %c0_i32_0 = arith.constant 0 : i32
    %c0_i32_1 = arith.constant 0 : i32
    return %c0_i32, %c0_i32_0 : i32, i32
  }
  func.func @transform_12(%arg0: i32) -> (i32, i32) {
    %c0_i32 = arith.constant 0 : i32
    %c0_i32_0 = arith.constant 0 : i32
    %c0_i32_1 = arith.constant 0 : i32
    return %c0_i32, %c0_i32_0 : i32, i32
  }
  func.func @transform_13(%arg0: i32) -> (i32, i32) {
    %c0_i32 = arith.constant 0 : i32
    %c0_i32_0 = arith.constant 0 : i32
    %c0_i32_1 = arith.constant 0 : i32
    return %c0_i32, %c0_i32_0 : i32, i32
  }
  func.func @transform_14(%arg0: i32) -> (i32, i32) {
    %c0_i32 = arith.constant 0 : i32
    %c0_i32_0 = arith.constant 0 : i32
    %c0_i32_1 = arith.constant 0 : i32
    return %c0_i32, %c0_i32_0 : i32, i32
  }
  func.func @transform_15(%arg0: i32) -> (i32, i32) {
    %c0_i32 = arith.constant 0 : i32
    %c0_i32_0 = arith.constant 0 : i32
    %c0_i32_1 = arith.constant 0 : i32
    return %c0_i32, %c0_i32_0 : i32, i32
  }
  func.func @transform_16(%arg0: i32) -> (i32, i32) {
    %c0_i32 = arith.constant 0 : i32
    %c0_i32_0 = arith.constant 0 : i32
    %c0_i32_1 = arith.constant 0 : i32
    return %c0_i32, %c0_i32_0 : i32, i32
  }
  func.func @transform_17(%arg0: i32) -> (i32, i32) {
    %c0_i32 = arith.constant 0 : i32
    %c0_i32_0 = arith.constant 0 : i32
    %c0_i32_1 = arith.constant 0 : i32
    return %c0_i32, %c0_i32_0 : i32, i32
  }
  func.func @transform_18(%arg0: i32) -> (i32, i32) {
    %c0_i32 = arith.constant 0 : i32
    %c0_i32_0 = arith.constant 0 : i32
    %c0_i32_1 = arith.constant 0 : i32
    return %c0_i32, %c0_i32_0 : i32, i32
  }
  func.func @transform_19(%arg0: i32) -> (i32, i32) {
    %c0_i32 = arith.constant 0 : i32
    %c0_i32_0 = arith.constant 0 : i32
    %c0_i32_1 = arith.constant 0 : i32
    return %c0_i32, %c0_i32_0 : i32, i32
  }
  func.func @transform_20(%arg0: i32) -> (i32, i32) {
    %c0_i32 = arith.constant 0 : i32
    %c0_i32_0 = arith.constant 0 : i32
    %c0_i32_1 = arith.constant 0 : i32
    return %c0_i32, %c0_i32_0 : i32, i32
  }
  func.func @transform_21(%arg0: i32) -> (i32, i32) {
    %c0_i32 = arith.constant 0 : i32
    %c0_i32_0 = arith.constant 0 : i32
    %c0_i32_1 = arith.constant 0 : i32
    return %c0_i32, %c0_i32_0 : i32, i32
  }
  func.func @transform_22(%arg0: i32) -> (i32, i32, i32) {
    %c0_i32 = arith.constant 0 : i32
    %c0_i32_0 = arith.constant 0 : i32
    %c0_i32_1 = arith.constant 0 : i32
    return %arg0, %c0_i32, %c0_i32_0 : i32, i32, i32
  }
}

</mosaic_0001>

<llo_original>
// kernel: decoder_forward.3
$region0: #{decoder_forward.3}
  #allocation0 [shape = 'u32[]', space=smem, size = 0x4, offset = 0x4, fixed_abs, tag = 'smem constant byte address 0x4 - core index']
  #allocation1 [shape = 'u32[144,128]{1,0:T(1,128)}', space=vmem, size = 0x12000, scoped, tag = 'internal scratch']
  #allocation2 [shape = 'f32[8,32]{1,0:T(8,128)}', space=vmem, size = 0x1000, scoped, tag = 'scratch operand']
  %s0 = inlined_call_operand.vmem [shape: f32[2,8,32], index: 0, kind: input, shape index: {}]
  %s1 = inlined_call_operand.vmem [shape: bf16[2,8,32], index: 1, kind: input, shape index: {}]
  %s2 = inlined_call_operand.vmem [shape: f32[2,8,8], index: 2, kind: input, shape index: {}]
  %s3 = inlined_call_operand.vmem [shape: f32[2,8,8], index: 3, kind: input, shape index: {}]
  %s4 = inlined_call_operand.vmem [shape: bf16[32,96], index: 4, kind: input, shape index: {}]
  %s5 = inlined_call_operand.vmem [shape: f32[1,96], index: 5, kind: input, shape index: {}]
  %s6 = inlined_call_operand.vmem [shape: bf16[32,32], index: 6, kind: input, shape index: {}]
  %s7 = inlined_call_operand.vmem [shape: f32[1,32], index: 7, kind: input, shape index: {}]
  %s8 = inlined_call_operand.vmem [shape: f32[1,32], index: 8, kind: input, shape index: {}]
  %s9 = inlined_call_operand.vmem [shape: f32[1,32], index: 9, kind: input, shape index: {}]
  %s10 = inlined_call_operand.vmem [shape: bf16[32,96], index: 10, kind: input, shape index: {}]
  %s11 = inlined_call_operand.vmem [shape: f32[1,96], index: 11, kind: input, shape index: {}]
  %s12 = inlined_call_operand.vmem [shape: bf16[32,32], index: 12, kind: input, shape index: {}]
  %s13 = inlined_call_operand.vmem [shape: f32[1,32], index: 13, kind: input, shape index: {}]
  %s14 = inlined_call_operand.vmem [shape: f32[1,32], index: 14, kind: input, shape index: {}]
  %s15 = inlined_call_operand.vmem [shape: f32[1,32], index: 15, kind: input, shape index: {}]
  %s16 = inlined_call_operand.vmem [shape: bf16[32,64], index: 16, kind: input, shape index: {}]
  %s17 = inlined_call_operand.vmem [shape: f32[1,64], index: 17, kind: input, shape index: {}]
  %s18 = inlined_call_operand.vmem [shape: bf16[64,32], index: 18, kind: input, shape index: {}]
  %s19 = inlined_call_operand.vmem [shape: f32[1,32], index: 19, kind: input, shape index: {}]
  %s20 = inlined_call_operand.vmem [shape: f32[1,32], index: 20, kind: input, shape index: {}]
  %s21 = inlined_call_operand.vmem [shape: f32[1,32], index: 21, kind: input, shape index: {}]
  %s22 = inlined_call_operand.hbm [shape: f32[2,8,32], index: 22, kind: output, shape index: {}]
  %s23 = sld [smem:[#allocation0]]
  $region121: #{decoder_forward.3} parent=0
    _
  %s25 = ssub.s32 1, %s23
  %s26 = scalar_select 0, %s25, %s23
  $region1: #{decoder_forward.3} parent=0
    #allocation3 [shape = 'u8[8192]{0}', space=vmem, size = 0x2000, scoped, tag = 'output window, operand 0']
    #allocation4 [shape = 's32[2]{0}', space=sflag, size = 0x8, scoped, tag = 'scoped memory for decoder_forward.3']
    %27 = vsyncpa [#allocation4], 0
    %s28 = scalar_lea.sflag [#allocation4], 1
    %29 = vsyncpa %s28, 0
    loop: start=0, step=1, limit=4
    $region2: #{decoder_forward.3} parent=1 // loop_pre_header
      _
    $region3: #{decoder_forward.3} parent=1 // loop_header
      %s31 = sphi 0, %s35
      %p32 = scmp.ge.s32.totalorder %s31, 4
      %s41 = sphi 0, %s43
      %s44 = sphi 0, %s41
      %s45 = sphi 0, %s44
      %s61 = sphi 0, %s45
      %s67 = sphi 0, %s69
      %s70 = sphi 0, %s67
      %s71 = sphi 0, %s70
      %s87 = sphi 0, %s71
      %s93 = sphi 0, %s95
      %s96 = sphi 0, %s93
      %s97 = sphi 0, %s96
      %s113 = sphi 0, %s97
      %s119 = sphi 0, %s121
      %s122 = sphi 0, %s119
      %s123 = sphi 0, %s122
      %s139 = sphi 0, %s123
      %s143 = sphi 0, %s143
      %s145 = sphi 0, %s143
      %s146 = sphi 0, %s145
      %s160 = sphi 0, %s146
      %s164 = sphi 0, %s164
      %s166 = sphi 0, %s164
      %s167 = sphi 0, %s166
      %s181 = sphi 0, %s167
      %s185 = sphi 0, %s185
      %s187 = sphi 0, %s185
      %s188 = sphi 0, %s187
      %s202 = sphi 0, %s188
      %s206 = sphi 0, %s206
      %s208 = sphi 0, %s206
      %s209 = sphi 0, %s208
      %s223 = sphi 0, %s209
      %s227 = sphi 0, %s227
      %s229 = sphi 0, %s227
      %s230 = sphi 0, %s229
      %s244 = sphi 0, %s230
      %s248 = sphi 0, %s248
      %s250 = sphi 0, %s248
      %s251 = sphi 0, %s250
      %s265 = sphi 0, %s251
      %s269 = sphi 0, %s269
      %s271 = sphi 0, %s269
      %s272 = sphi 0, %s271
      %s286 = sphi 0, %s272
      %s290 = sphi 0, %s290
      %s292 = sphi 0, %s290
      %s293 = sphi 0, %s292
      %s307 = sphi 0, %s293
      %s311 = sphi 0, %s311
      %s313 = sphi 0, %s311
      %s314 = sphi 0, %s313
      %s328 = sphi 0, %s314
      %s332 = sphi 0, %s332
      %s334 = sphi 0, %s332
      %s335 = sphi 0, %s334
      %s349 = sphi 0, %s335
      %s353 = sphi 0, %s353
      %s355 = sphi 0, %s353
      %s356 = sphi 0, %s355
      %s370 = sphi 0, %s356
      %s374 = sphi 0, %s374
      %s376 = sphi 0, %s374
      %s377 = sphi 0, %s376
      %s391 = sphi 0, %s377
      %s395 = sphi 0, %s395
      %s397 = sphi 0, %s395
      %s398 = sphi 0, %s397
      %s412 = sphi 0, %s398
      %s416 = sphi 0, %s416
      %s418 = sphi 0, %s416
      %s419 = sphi 0, %s418
      %s433 = sphi 0, %s419
      %s437 = sphi 0, %s437
      %s439 = sphi 0, %s437
      %s440 = sphi 0, %s439
      %s454 = sphi 0, %s440
      %s458 = sphi 0, %s458
      %s460 = sphi 0, %s458
      %s461 = sphi 0, %s460
      %s475 = sphi 0, %s461
      %s479 = sphi 0, %s479
      %s481 = sphi 0, %s479
      %s482 = sphi 0, %s481
      %s496 = sphi 0, %s482
      %s500 = sphi 0, %s500
      %s502 = sphi 0, %s500
      %s503 = sphi 0, %s502
      %s517 = sphi 0, %s503
      %s523 = sphi 0, %s525
      %s526 = sphi 0, %s523
      %s527 = sphi 0, %s526
      %s543 = sphi 0, %s527
    $region4: #{decoder_forward.3} parent=1 // loop_header_branch
      %34 = sbr.rel (%p32) target = $region8
    $region5: #{decoder_forward.3} parent=1 // loop_body
      %s36 = ssub.s32 %s31, 1
      %s37 = ssub.s32 %s31, 2
      %s38 = sadd.s32 %s31, 1
      %s39 = ssub.s32 %s31, %s38
      %p40 = scmp.eq.s32.totalorder %s39, 0
      %s42 = sadd.s32 %s41, 1
      %s43 = scalar_select %p40, %s41, %s42
      %p46 = pneg %p40
      %p47 = scmp.eq.s32.totalorder %s31, 1
      %p48 = por %p46, %p47
      %p49 = scmp.ne.s32.totalorder %s41, %s44
      %p50 = scmp.eq.s32.totalorder %s31, 0
      %p51 = por %p49, %p50
      %p52 = scmp.ne.s32.totalorder %s41, %s44
      %p53 = scmp.eq.s32.totalorder %s36, 1
      %p54 = por %p52, %p53
      %p55 = scmp.ne.s32.totalorder %s44, %s45
      %p56 = scmp.eq.s32.totalorder %s36, 0
      %p57 = por %p55, %p56
      %p58 = scmp.ne.s32.totalorder %s44, %s45
      %p59 = scmp.eq.s32.totalorder %s37, 1
      %p60 = por %p58, %p59
      %p62 = scmp.ne.s32.totalorder %s45, %s61
      %p63 = scmp.eq.s32.totalorder %s37, 0
      %p64 = por %p62, %p63
      %s65 = ssub.s32 %s31, %s38
      %p66 = scmp.eq.s32.totalorder %s65, 0
      %s68 = sadd.s32 %s67, 1
      %s69 = scalar_select %p66, %s67, %s68
      %p72 = pneg %p66
      %p73 = scmp.eq.s32.totalorder %s31, 1
      %p74 = por %p72, %p73
      %p75 = scmp.ne.s32.totalorder %s67, %s70
      %p76 = scmp.eq.s32.totalorder %s31, 0
      %p77 = por %p75, %p76
      %p78 = scmp.ne.s32.totalorder %s67, %s70
      %p79 = scmp.eq.s32.totalorder %s36, 1
      %p80 = por %p78, %p79
      %p81 = scmp.ne.s32.totalorder %s70, %s71
      %p82 = scmp.eq.s32.totalorder %s36, 0
      %p83 = por %p81, %p82
      %p84 = scmp.ne.s32.totalorder %s70, %s71
      %p85 = scmp.eq.s32.totalorder %s37, 1
      %p86 = por %p84, %p85
      %p88 = scmp.ne.s32.totalorder %s71, %s87
      %p89 = scmp.eq.s32.totalorder %s37, 0
      %p90 = por %p88, %p89
      %s91 = ssub.s32 %s31, %s38
      %p92 = scmp.eq.s32.totalorder %s91, 0
      %s94 = sadd.s32 %s93, 1
      %s95 = scalar_select %p92, %s93, %s94
      %p98 = pneg %p92
      %p99 = scmp.eq.s32.totalorder %s31, 1
      %p100 = por %p98, %p99
      %p101 = scmp.ne.s32.totalorder %s93, %s96
      %p102 = scmp.eq.s32.totalorder %s31, 0
      %p103 = por %p101, %p102
      %p104 = scmp.ne.s32.totalorder %s93, %s96
      %p105 = scmp.eq.s32.totalorder %s36, 1
      %p106 = por %p104, %p105
      %p107 = scmp.ne.s32.totalorder %s96, %s97
      %p108 = scmp.eq.s32.totalorder %s36, 0
      %p109 = por %p107, %p108
      %p110 = scmp.ne.s32.totalorder %s96, %s97
      %p111 = scmp.eq.s32.totalorder %s37, 1
      %p112 = por %p110, %p111
      %p114 = scmp.ne.s32.totalorder %s97, %s113
      %p115 = scmp.eq.s32.totalorder %s37, 0
      %p116 = por %p114, %p115
      %s117 = ssub.s32 %s31, %s38
      %p118 = scmp.eq.s32.totalorder %s117, 0
      %s120 = sadd.s32 %s119, 1
      %s121 = scalar_select %p118, %s119, %s120
      %p124 = pneg %p118
      %p125 = scmp.eq.s32.totalorder %s31, 1
      %p126 = por %p124, %p125
      %p127 = scmp.ne.s32.totalorder %s119, %s122
      %p128 = scmp.eq.s32.totalorder %s31, 0
      %p129 = por %p127, %p128
      %p130 = scmp.ne.s32.totalorder %s119, %s122
      %p131 = scmp.eq.s32.totalorder %s36, 1
      %p132 = por %p130, %p131
      %p133 = scmp.ne.s32.totalorder %s122, %s123
      %p134 = scmp.eq.s32.totalorder %s36, 0
      %p135 = por %p133, %p134
      %p136 = scmp.ne.s32.totalorder %s122, %s123
      %p137 = scmp.eq.s32.totalorder %s37, 1
      %p138 = por %p136, %p137
      %p140 = scmp.ne.s32.totalorder %s123, %s139
      %p141 = scmp.eq.s32.totalorder %s37, 0
      %p142 = por %p140, %p141
      %s144 = sadd.s32 %s143, 1
      %p147 = scmp.eq.s32.totalorder %s31, 1
      %p148 = scmp.ne.s32.totalorder %s143, %s145
      %p149 = scmp.eq.s32.totalorder %s31, 0
      %p150 = por %p148, %p149
      %p151 = scmp.ne.s32.totalorder %s143, %s145
      %p152 = scmp.eq.s32.totalorder %s36, 1
      %p153 = por %p151, %p152
      %p154 = scmp.ne.s32.totalorder %s145, %s146
      %p155 = scmp.eq.s32.totalorder %s36, 0
      %p156 = por %p154, %p155
      %p157 = scmp.ne.s32.totalorder %s145, %s146
      %p158 = scmp.eq.s32.totalorder %s37, 1
      %p159 = por %p157, %p158
      %p161 = scmp.ne.s32.totalorder %s146, %s160
      %p162 = scmp.eq.s32.totalorder %s37, 0
      %p163 = por %p161, %p162
      %s165 = sadd.s32 %s164, 1
      %p168 = scmp.eq.s32.totalorder %s31, 1
      %p169 = scmp.ne.s32.totalorder %s164, %s166
      %p170 = scmp.eq.s32.totalorder %s31, 0
      %p171 = por %p169, %p170
      %p172 = scmp.ne.s32.totalorder %s164, %s166
      %p173 = scmp.eq.s32.totalorder %s36, 1
      %p174 = por %p172, %p173
      %p175 = scmp.ne.s32.totalorder %s166, %s167
      %p176 = scmp.eq.s32.totalorder %s36, 0
      %p177 = por %p175, %p176
      %p178 = scmp.ne.s32.totalorder %s166, %s167
      %p179 = scmp.eq.s32.totalorder %s37, 1
      %p180 = por %p178, %p179
      %p182 = scmp.ne.s32.totalorder %s167, %s181
      %p183 = scmp.eq.s32.totalorder %s37, 0
      %p184 = por %p182, %p183
      %s186 = sadd.s32 %s185, 1
      %p189 = scmp.eq.s32.totalorder %s31, 1
      %p190 = scmp.ne.s32.totalorder %s185, %s187
      %p191 = scmp.eq.s32.totalorder %s31, 0
      %p192 = por %p190, %p191
      %p193 = scmp.ne.s32.totalorder %s185, %s187
      %p194 = scmp.eq.s32.totalorder %s36, 1
      %p195 = por %p193, %p194
      %p196 = scmp.ne.s32.totalorder %s187, %s188
      %p197 = scmp.eq.s32.totalorder %s36, 0
      %p198 = por %p196, %p197
      %p199 = scmp.ne.s32.totalorder %s187, %s188
      %p200 = scmp.eq.s32.totalorder %s37, 1
      %p201 = por %p199, %p200
      %p203 = scmp.ne.s32.totalorder %s188, %s202
      %p204 = scmp.eq.s32.totalorder %s37, 0
      %p205 = por %p203, %p204
      %s207 = sadd.s32 %s206, 1
      %p210 = scmp.eq.s32.totalorder %s31, 1
      %p211 = scmp.ne.s32.totalorder %s206, %s208
      %p212 = scmp.eq.s32.totalorder %s31, 0
      %p213 = por %p211, %p212
      %p214 = scmp.ne.s32.totalorder %s206, %s208
      %p215 = scmp.eq.s32.totalorder %s36, 1
      %p216 = por %p214, %p215
      %p217 = scmp.ne.s32.totalorder %s208, %s209
      %p218 = scmp.eq.s32.totalorder %s36, 0
      %p219 = por %p217, %p218
      %p220 = scmp.ne.s32.totalorder %s208, %s209
      %p221 = scmp.eq.s32.totalorder %s37, 1
      %p222 = por %p220, %p221
      %p224 = scmp.ne.s32.totalorder %s209, %s223
      %p225 = scmp.eq.s32.totalorder %s37, 0
      %p226 = por %p224, %p225
      %s228 = sadd.s32 %s227, 1
      %p231 = scmp.eq.s32.totalorder %s31, 1
      %p232 = scmp.ne.s32.totalorder %s227, %s229
      %p233 = scmp.eq.s32.totalorder %s31, 0
      %p234 = por %p232, %p233
      %p235 = scmp.ne.s32.totalorder %s227, %s229
      %p236 = scmp.eq.s32.totalorder %s36, 1
      %p237 = por %p235, %p236
      %p238 = scmp.ne.s32.totalorder %s229, %s230
      %p239 = scmp.eq.s32.totalorder %s36, 0
      %p240 = por %p238, %p239
      %p241 = scmp.ne.s32.totalorder %s229, %s230
      %p242 = scmp.eq.s32.totalorder %s37, 1
      %p243 = por %p241, %p242
      %p245 = scmp.ne.s32.totalorder %s230, %s244
      %p246 = scmp.eq.s32.totalorder %s37, 0
      %p247 = por %p245, %p246
      %s249 = sadd.s32 %s248, 1
      %p252 = scmp.eq.s32.totalorder %s31, 1
      %p253 = scmp.ne.s32.totalorder %s248, %s250
      %p254 = scmp.eq.s32.totalorder %s31, 0
      %p255 = por %p253, %p254
      %p256 = scmp.ne.s32.totalorder %s248, %s250
      %p257 = scmp.eq.s32.totalorder %s36, 1
      %p258 = por %p256, %p257
      %p259 = scmp.ne.s32.totalorder %s250, %s251
      %p260 = scmp.eq.s32.totalorder %s36, 0
      %p261 = por %p259, %p260
      %p262 = scmp.ne.s32.totalorder %s250, %s251
      %p263 = scmp.eq.s32.totalorder %s37, 1
      %p264 = por %p262, %p263
      %p266 = scmp.ne.s32.totalorder %s251, %s265
      %p267 = scmp.eq.s32.totalorder %s37, 0
      %p268 = por %p266, %p267
      %s270 = sadd.s32 %s269, 1
      %p273 = scmp.eq.s32.totalorder %s31, 1
      %p274 = scmp.ne.s32.totalorder %s269, %s271
      %p275 = scmp.eq.s32.totalorder %s31, 0
      %p276 = por %p274, %p275
      %p277 = scmp.ne.s32.totalorder %s269, %s271
      %p278 = scmp.eq.s32.totalorder %s36, 1
      %p279 = por %p277, %p278
      %p280 = scmp.ne.s32.totalorder %s271, %s272
      %p281 = scmp.eq.s32.totalorder %s36, 0
      %p282 = por %p280, %p281
      %p283 = scmp.ne.s32.totalorder %s271, %s272
      %p284 = scmp.eq.s32.totalorder %s37, 1
      %p285 = por %p283, %p284
      %p287 = scmp.ne.s32.totalorder %s272, %s286
      %p288 = scmp.eq.s32.totalorder %s37, 0
      %p289 = por %p287, %p288
      %s291 = sadd.s32 %s290, 1
      %p294 = scmp.eq.s32.totalorder %s31, 1
      %p295 = scmp.ne.s32.totalorder %s290, %s292
      %p296 = scmp.eq.s32.totalorder %s31, 0
      %p297 = por %p295, %p296
      %p298 = scmp.ne.s32.totalorder %s290, %s292
      %p299 = scmp.eq.s32.totalorder %s36, 1
      %p300 = por %p298, %p299
      %p301 = scmp.ne.s32.totalorder %s292, %s293
      %p302 = scmp.eq.s32.totalorder %s36, 0
      %p303 = por %p301, %p302
      %p304 = scmp.ne.s32.totalorder %s292, %s293
      %p305 = scmp.eq.s32.totalorder %s37, 1
      %p306 = por %p304, %p305
      %p308 = scmp.ne.s32.totalorder %s293, %s307
      %p309 = scmp.eq.s32.totalorder %s37, 0
      %p310 = por %p308, %p309
      %s312 = sadd.s32 %s311, 1
      %p315 = scmp.eq.s32.totalorder %s31, 1
      %p316 = scmp.ne.s32.totalorder %s311, %s313
      %p317 = scmp.eq.s32.totalorder %s31, 0
      %p318 = por %p316, %p317
      %p319 = scmp.ne.s32.totalorder %s311, %s313
      %p320 = scmp.eq.s32.totalorder %s36, 1
      %p321 = por %p319, %p320
      %p322 = scmp.ne.s32.totalorder %s313, %s314
      %p323 = scmp.eq.s32.totalorder %s36, 0
      %p324 = por %p322, %p323
      %p325 = scmp.ne.s32.totalorder %s313, %s314
      %p326 = scmp.eq.s32.totalorder %s37, 1
      %p327 = por %p325, %p326
      %p329 = scmp.ne.s32.totalorder %s314, %s328
      %p330 = scmp.eq.s32.totalorder %s37, 0
      %p331 = por %p329, %p330
      %s333 = sadd.s32 %s332, 1
      %p336 = scmp.eq.s32.totalorder %s31, 1
      %p337 = scmp.ne.s32.totalorder %s332, %s334
      %p338 = scmp.eq.s32.totalorder %s31, 0
      %p339 = por %p337, %p338
      %p340 = scmp.ne.s32.totalorder %s332, %s334
      %p341 = scmp.eq.s32.totalorder %s36, 1
      %p342 = por %p340, %p341
      %p343 = scmp.ne.s32.totalorder %s334, %s335
      %p344 = scmp.eq.s32.totalorder %s36, 0
      %p345 = por %p343, %p344
      %p346 = scmp.ne.s32.totalorder %s334, %s335
      %p347 = scmp.eq.s32.totalorder %s37, 1
      %p348 = por %p346, %p347
      %p350 = scmp.ne.s32.totalorder %s335, %s349
      %p351 = scmp.eq.s32.totalorder %s37, 0
      %p352 = por %p350, %p351
      %s354 = sadd.s32 %s353, 1
      %p357 = scmp.eq.s32.totalorder %s31, 1
      %p358 = scmp.ne.s32.totalorder %s353, %s355
      %p359 = scmp.eq.s32.totalorder %s31, 0
      %p360 = por %p358, %p359
      %p361 = scmp.ne.s32.totalorder %s353, %s355
      %p362 = scmp.eq.s32.totalorder %s36, 1
      %p363 = por %p361, %p362
      %p364 = scmp.ne.s32.totalorder %s355, %s356
      %p365 = scmp.eq.s32.totalorder %s36, 0
      %p366 = por %p364, %p365
      %p367 = scmp.ne.s32.totalorder %s355, %s356
      %p368 = scmp.eq.s32.totalorder %s37, 1
      %p369 = por %p367, %p368
      %p371 = scmp.ne.s32.totalorder %s356, %s370
      %p372 = scmp.eq.s32.totalorder %s37, 0
      %p373 = por %p371, %p372
      %s375 = sadd.s32 %s374, 1
      %p378 = scmp.eq.s32.totalorder %s31, 1
      %p379 = scmp.ne.s32.totalorder %s374, %s376
      %p380 = scmp.eq.s32.totalorder %s31, 0
      %p381 = por %p379, %p380
      %p382 = scmp.ne.s32.totalorder %s374, %s376
      %p383 = scmp.eq.s32.totalorder %s36, 1
      %p384 = por %p382, %p383
      %p385 = scmp.ne.s32.totalorder %s376, %s377
      %p386 = scmp.eq.s32.totalorder %s36, 0
      %p387 = por %p385, %p386
      %p388 = scmp.ne.s32.totalorder %s376, %s377
      %p389 = scmp.eq.s32.totalorder %s37, 1
      %p390 = por %p388, %p389
      %p392 = scmp.ne.s32.totalorder %s377, %s391
      %p393 = scmp.eq.s32.totalorder %s37, 0
      %p394 = por %p392, %p393
      %s396 = sadd.s32 %s395, 1
      %p399 = scmp.eq.s32.totalorder %s31, 1
      %p400 = scmp.ne.s32.totalorder %s395, %s397
      %p401 = scmp.eq.s32.totalorder %s31, 0
      %p402 = por %p400, %p401
      %p403 = scmp.ne.s32.totalorder %s395, %s397
      %p404 = scmp.eq.s32.totalorder %s36, 1
      %p405 = por %p403, %p404
      %p406 = scmp.ne.s32.totalorder %s397, %s398
      %p407 = scmp.eq.s32.totalorder %s36, 0
      %p408 = por %p406, %p407
      %p409 = scmp.ne.s32.totalorder %s397, %s398
      %p410 = scmp.eq.s32.totalorder %s37, 1
      %p411 = por %p409, %p410
      %p413 = scmp.ne.s32.totalorder %s398, %s412
      %p414 = scmp.eq.s32.totalorder %s37, 0
      %p415 = por %p413, %p414
      %s417 = sadd.s32 %s416, 1
      %p420 = scmp.eq.s32.totalorder %s31, 1
      %p421 = scmp.ne.s32.totalorder %s416, %s418
      %p422 = scmp.eq.s32.totalorder %s31, 0
      %p423 = por %p421, %p422
      %p424 = scmp.ne.s32.totalorder %s416, %s418
      %p425 = scmp.eq.s32.totalorder %s36, 1
      %p426 = por %p424, %p425
      %p427 = scmp.ne.s32.totalorder %s418, %s419
      %p428 = scmp.eq.s32.totalorder %s36, 0
      %p429 = por %p427, %p428
      %p430 = scmp.ne.s32.totalorder %s418, %s419
      %p431 = scmp.eq.s32.totalorder %s37, 1
      %p432 = por %p430, %p431
      %p434 = scmp.ne.s32.totalorder %s419, %s433
      %p435 = scmp.eq.s32.totalorder %s37, 0
      %p436 = por %p434, %p435
      %s438 = sadd.s32 %s437, 1
      %p441 = scmp.eq.s32.totalorder %s31, 1
      %p442 = scmp.ne.s32.totalorder %s437, %s439
      %p443 = scmp.eq.s32.totalorder %s31, 0
      %p444 = por %p442, %p443
      %p445 = scmp.ne.s32.totalorder %s437, %s439
      %p446 = scmp.eq.s32.totalorder %s36, 1
      %p447 = por %p445, %p446
      %p448 = scmp.ne.s32.totalorder %s439, %s440
      %p449 = scmp.eq.s32.totalorder %s36, 0
      %p450 = por %p448, %p449
      %p451 = scmp.ne.s32.totalorder %s439, %s440
      %p452 = scmp.eq.s32.totalorder %s37, 1
      %p453 = por %p451, %p452
      %p455 = scmp.ne.s32.totalorder %s440, %s454
      %p456 = scmp.eq.s32.totalorder %s37, 0
      %p457 = por %p455, %p456
      %s459 = sadd.s32 %s458, 1
      %p462 = scmp.eq.s32.totalorder %s31, 1
      %p463 = scmp.ne.s32.totalorder %s458, %s460
      %p464 = scmp.eq.s32.totalorder %s31, 0
      %p465 = por %p463, %p464
      %p466 = scmp.ne.s32.totalorder %s458, %s460
      %p467 = scmp.eq.s32.totalorder %s36, 1
      %p468 = por %p466, %p467
      %p469 = scmp.ne.s32.totalorder %s460, %s461
      %p470 = scmp.eq.s32.totalorder %s36, 0
      %p471 = por %p469, %p470
      %p472 = scmp.ne.s32.totalorder %s460, %s461
      %p473 = scmp.eq.s32.totalorder %s37, 1
      %p474 = por %p472, %p473
      %p476 = scmp.ne.s32.totalorder %s461, %s475
      %p477 = scmp.eq.s32.totalorder %s37, 0
      %p478 = por %p476, %p477
      %s480 = sadd.s32 %s479, 1
      %p483 = scmp.eq.s32.totalorder %s31, 1
      %p484 = scmp.ne.s32.totalorder %s479, %s481
      %p485 = scmp.eq.s32.totalorder %s31, 0
      %p486 = por %p484, %p485
      %p487 = scmp.ne.s32.totalorder %s479, %s481
      %p488 = scmp.eq.s32.totalorder %s36, 1
      %p489 = por %p487, %p488
      %p490 = scmp.ne.s32.totalorder %s481, %s482
      %p491 = scmp.eq.s32.totalorder %s36, 0
      %p492 = por %p490, %p491
      %p493 = scmp.ne.s32.totalorder %s481, %s482
      %p494 = scmp.eq.s32.totalorder %s37, 1
      %p495 = por %p493, %p494
      %p497 = scmp.ne.s32.totalorder %s482, %s496
      %p498 = scmp.eq.s32.totalorder %s37, 0
      %p499 = por %p497, %p498
      %s501 = sadd.s32 %s500, 1
      %p504 = scmp.eq.s32.totalorder %s31, 1
      %p505 = scmp.ne.s32.totalorder %s500, %s502
      %p506 = scmp.eq.s32.totalorder %s31, 0
      %p507 = por %p505, %p506
      %p508 = scmp.ne.s32.totalorder %s500, %s502
      %p509 = scmp.eq.s32.totalorder %s36, 1
      %p510 = por %p508, %p509
      %p511 = scmp.ne.s32.totalorder %s502, %s503
      %p512 = scmp.eq.s32.totalorder %s36, 0
      %p513 = por %p511, %p512
      %p514 = scmp.ne.s32.totalorder %s502, %s503
      %p515 = scmp.eq.s32.totalorder %s37, 1
      %p516 = por %p514, %p515
      %p518 = scmp.ne.s32.totalorder %s503, %s517
      %p519 = scmp.eq.s32.totalorder %s37, 0
      %p520 = por %p518, %p519
      %s521 = ssub.s32 %s31, %s38
      %p522 = scmp.eq.s32.totalorder %s521, 0
      %s524 = sadd.s32 %s523, 1
      %s525 = scalar_select %p522, %s523, %s524
      %p528 = pneg %p522
      %p529 = scmp.eq.s32.totalorder %s31, 1
      %p530 = por %p528, %p529
      %p531 = scmp.ne.s32.totalorder %s523, %s526
      %p532 = scmp.eq.s32.totalorder %s31, 0
      %p533 = por %p531, %p532
      %p534 = scmp.ne.s32.totalorder %s523, %s526
      %p535 = scmp.eq.s32.totalorder %s36, 1
      %p536 = por %p534, %p535
      %p537 = scmp.ne.s32.totalorder %s526, %s527
      %p538 = scmp.eq.s32.totalorder %s36, 0
      %p539 = por %p537, %p538
      %p540 = scmp.ne.s32.totalorder %s526, %s527
      %p541 = scmp.eq.s32.totalorder %s37, 1
      %p542 = por %p540, %p541
      %p544 = scmp.ne.s32.totalorder %s527, %s543
      %p545 = scmp.eq.s32.totalorder %s37, 0
      %p546 = por %p544, %p545
      %p547 = scmp.le.s32.totalorder 1, %s31
      %p548 = scmp.lt.s32.totalorder %s31, 3
      %p549 = pnand %p547, %p548
      %p550 = pneg %p549
      // Predicated region
      $region9: #{decoder_forward.3} parent=5 // pred_check
        _
      $region10: #{decoder_forward.3} parent=5 // pred_check_branch
        %552 = sbr.rel (%p549) target = $region12
      $region11: #{decoder_forward.3} parent=5 // pred_region
        %s553 = ssub.s32 %s31, 1
        // Predicated region
        $region13: #{decoder_forward.3} parent=11 // pred_check
          %p554 = pneg %p156
        $region14: #{decoder_forward.3} parent=11 // pred_check_branch
          %556 = sbr.rel (%p554) target = $region16
        $region15: #{decoder_forward.3} parent=11 // pred_region
          _
        $region16: #{decoder_forward.3} parent=11 // pred_fallthru
          _
        // Predicated region
        $region17: #{decoder_forward.3} parent=11 // pred_check
          %p557 = pneg %p177
        $region18: #{decoder_forward.3} parent=11 // pred_check_branch
          %559 = sbr.rel (%p557) target = $region20
        $region19: #{decoder_forward.3} parent=11 // pred_region
          _
        $region20: #{decoder_forward.3} parent=11 // pred_fallthru
          _
        // Predicated region
        $region21: #{decoder_forward.3} parent=11 // pred_check
          %p560 = pneg %p198
        $region22: #{decoder_forward.3} parent=11 // pred_check_branch
          %562 = sbr.rel (%p560) target = $region24
        $region23: #{decoder_forward.3} parent=11 // pred_region
          _
        $region24: #{decoder_forward.3} parent=11 // pred_fallthru
          _
        // Predicated region
        $region25: #{decoder_forward.3} parent=11 // pred_check
          %p563 = pneg %p219
        $region26: #{decoder_forward.3} parent=11 // pred_check_branch
          %565 = sbr.rel (%p563) target = $region28
        $region27: #{decoder_forward.3} parent=11 // pred_region
          _
        $region28: #{decoder_forward.3} parent=11 // pred_fallthru
          _
        // Predicated region
        $region29: #{decoder_forward.3} parent=11 // pred_check
          %p566 = pneg %p240
        $region30: #{decoder_forward.3} parent=11 // pred_check_branch
          %568 = sbr.rel (%p566) target = $region32
        $region31: #{decoder_forward.3} parent=11 // pred_region
          _
        $region32: #{decoder_forward.3} parent=11 // pred_fallthru
          _
        // Predicated region
        $region33: #{decoder_forward.3} parent=11 // pred_check
          %p569 = pneg %p261
        $region34: #{decoder_forward.3} parent=11 // pred_check_branch
          %571 = sbr.rel (%p569) target = $region36
        $region35: #{decoder_forward.3} parent=11 // pred_region
          _
        $region36: #{decoder_forward.3} parent=11 // pred_fallthru
          _
        // Predicated region
        $region37: #{decoder_forward.3} parent=11 // pred_check
          %p572 = pneg %p282
        $region38: #{decoder_forward.3} parent=11 // pred_check_branch
          %574 = sbr.rel (%p572) target = $region40
        $region39: #{decoder_forward.3} parent=11 // pred_region
          _
        $region40: #{decoder_forward.3} parent=11 // pred_fallthru
          _
        // Predicated region
        $region41: #{decoder_forward.3} parent=11 // pred_check
          %p575 = pneg %p303
        $region42: #{decoder_forward.3} parent=11 // pred_check_branch
          %577 = sbr.rel (%p575) target = $region44
        $region43: #{decoder_forward.3} parent=11 // pred_region
          _
        $region44: #{decoder_forward.3} parent=11 // pred_fallthru
          _
        // Predicated region
        $region45: #{decoder_forward.3} parent=11 // pred_check
          %p578 = pneg %p324
        $region46: #{decoder_forward.3} parent=11 // pred_check_branch
          %580 = sbr.rel (%p578) target = $region48
        $region47: #{decoder_forward.3} parent=11 // pred_region
          _
        $region48: #{decoder_forward.3} parent=11 // pred_fallthru
          _
        // Predicated region
        $region49: #{decoder_forward.3} parent=11 // pred_check
          %p581 = pneg %p345
        $region50: #{decoder_forward.3} parent=11 // pred_check_branch
          %583 = sbr.rel (%p581) target = $region52
        $region51: #{decoder_forward.3} parent=11 // pred_region
          _
        $region52: #{decoder_forward.3} parent=11 // pred_fallthru
          _
        // Predicated region
        $region53: #{decoder_forward.3} parent=11 // pred_check
          %p584 = pneg %p366
        $region54: #{decoder_forward.3} parent=11 // pred_check_branch
          %586 = sbr.rel (%p584) target = $region56
        $region55: #{decoder_forward.3} parent=11 // pred_region
          _
        $region56: #{decoder_forward.3} parent=11 // pred_fallthru
          _
        // Predicated region
        $region57: #{decoder_forward.3} parent=11 // pred_check
          %p587 = pneg %p387
        $region58: #{decoder_forward.3} parent=11 // pred_check_branch
          %589 = sbr.rel (%p587) target = $region60
        $region59: #{decoder_forward.3} parent=11 // pred_region
          _
        $region60: #{decoder_forward.3} parent=11 // pred_fallthru
          _
        // Predicated region
        $region61: #{decoder_forward.3} parent=11 // pred_check
          %p590 = pneg %p408
        $region62: #{decoder_forward.3} parent=11 // pred_check_branch
          %592 = sbr.rel (%p590) target = $region64
        $region63: #{decoder_forward.3} parent=11 // pred_region
          _
        $region64: #{decoder_forward.3} parent=11 // pred_fallthru
          _
        // Predicated region
        $region65: #{decoder_forward.3} parent=11 // pred_check
          %p593 = pneg %p429
        $region66: #{decoder_forward.3} parent=11 // pred_check_branch
          %595 = sbr.rel (%p593) target = $region68
        $region67: #{decoder_forward.3} parent=11 // pred_region
          _
        $region68: #{decoder_forward.3} parent=11 // pred_fallthru
          _
        // Predicated region
        $region69: #{decoder_forward.3} parent=11 // pred_check
          %p596 = pneg %p450
        $region70: #{decoder_forward.3} parent=11 // pred_check_branch
          %598 = sbr.rel (%p596) target = $region72
        $region71: #{decoder_forward.3} parent=11 // pred_region
          _
        $region72: #{decoder_forward.3} parent=11 // pred_fallthru
          _
        // Predicated region
        $region73: #{decoder_forward.3} parent=11 // pred_check
          %p599 = pneg %p471
        $region74: #{decoder_forward.3} parent=11 // pred_check_branch
          %601 = sbr.rel (%p599) target = $region76
        $region75: #{decoder_forward.3} parent=11 // pred_region
          _
        $region76: #{decoder_forward.3} parent=11 // pred_fallthru
          _
        // Predicated region
        $region77: #{decoder_forward.3} parent=11 // pred_check
          %p602 = pneg %p492
        $region78: #{decoder_forward.3} parent=11 // pred_check_branch
          %604 = sbr.rel (%p602) target = $region80
        $region79: #{decoder_forward.3} parent=11 // pred_region
          _
        $region80: #{decoder_forward.3} parent=11 // pred_fallthru
          _
        // Predicated region
        $region81: #{decoder_forward.3} parent=11 // pred_check
          %p605 = pneg %p513
        $region82: #{decoder_forward.3} parent=11 // pred_check_branch
          %607 = sbr.rel (%p605) target = $region84
        $region83: #{decoder_forward.3} parent=11 // pred_region
          _
        $region84: #{decoder_forward.3} parent=11 // pred_fallthru
          _
      $region12: #{decoder_forward.3} parent=5 // pred_fallthru
        _
      %p608 = scmp.lt.s32.totalorder %s31, 2
      // Predicated region
      $region85: #{decoder_forward.3} parent=5 // pred_check
        %p609 = pneg %p608
      $region86: #{decoder_forward.3} parent=5 // pred_check_branch
        %611 = sbr.rel (%p609) target = $region88
      $region87: #{decoder_forward.3} parent=5 // pred_region
        // Predicated region
        $region89: #{decoder_forward.3} parent=87 // pred_check
          %p612 = pneg %p51
        $region90: #{decoder_forward.3} parent=87 // pred_check_branch
          %614 = sbr.rel (%p612) target = $region92
        $region91: #{decoder_forward.3} parent=87 // pred_region
          %p615 = scmp.lt.s32.totalorder %s31, 1
          %s616 = scalar_select %p615, %s31, 1
          %s617 = smul.addr %s616, 8
          %s618 = scalar_lea.vmem %s0, %s617
        $region92: #{decoder_forward.3} parent=87 // pred_fallthru
          _
        // Predicated region
        $region93: #{decoder_forward.3} parent=87 // pred_check
          %p619 = pneg %p77
        $region94: #{decoder_forward.3} parent=87 // pred_check_branch
          %621 = sbr.rel (%p619) target = $region96
        $region95: #{decoder_forward.3} parent=87 // pred_region
          %p622 = scmp.lt.s32.totalorder %s31, 1
          %s623 = scalar_select %p622, %s31, 1
          %s624 = smul.addr %s623, 4
          %s625 = scalar_lea.vmem %s1, %s624
        $region96: #{decoder_forward.3} parent=87 // pred_fallthru
          _
        // Predicated region
        $region97: #{decoder_forward.3} parent=87 // pred_check
          %p626 = pneg %p103
        $region98: #{decoder_forward.3} parent=87 // pred_check_branch
          %628 = sbr.rel (%p626) target = $region100
        $region99: #{decoder_forward.3} parent=87 // pred_region
          %p629 = scmp.lt.s32.totalorder %s31, 1
          %s630 = scalar_select %p629, %s31, 1
          %s631 = smul.addr %s630, 8
          %s632 = scalar_lea.vmem %s2, %s631
        $region100: #{decoder_forward.3} parent=87 // pred_fallthru
          _
        // Predicated region
        $region101: #{decoder_forward.3} parent=87 // pred_check
          %p633 = pneg %p129
        $region102: #{decoder_forward.3} parent=87 // pred_check_branch
          %635 = sbr.rel (%p633) target = $region104
        $region103: #{decoder_forward.3} parent=87 // pred_region
          %p636 = scmp.lt.s32.totalorder %s31, 1
          %s637 = scalar_select %p636, %s31, 1
          %s638 = smul.addr %s637, 8
          %s639 = scalar_lea.vmem %s3, %s638
        $region104: #{decoder_forward.3} parent=87 // pred_fallthru
          _
      $region88: #{decoder_forward.3} parent=5 // pred_fallthru
        _
      %p640 = scmp.le.s32.totalorder 1, %s31
      %p641 = scmp.lt.s32.totalorder %s31, 3
      %p642 = pnand %p640, %p641
      %p643 = pneg %p642
      // Predicated region
      $region105: #{decoder_forward.3} parent=5 // pred_check
        _
      $region106: #{decoder_forward.3} parent=5 // pred_check_branch
        %645 = sbr.rel (%p642) target = $region108
      $region107: #{decoder_forward.3} parent=5 // pred_region
        %s646 = ssub.s32 %s31, 1
        %p647 = scmp.lt.s32.totalorder %s36, 1
        %s648 = scalar_select %p647, %s36, 1
        %s649 = smul.addr %s648, 8
        %s650 = scalar_lea.vmem %s0, %s649
        %p651 = pneg %p57
        %p652 = pneg %p54
        %p653 = scmp.lt.s32.totalorder %s36, 1
        %s654 = scalar_select %p653, %s36, 1
        %s655 = smul.addr %s654, 4
        %s656 = scalar_lea.vmem %s1, %s655
        %p657 = pneg %p83
        %p658 = pneg %p80
        %p659 = scmp.lt.s32.totalorder %s36, 1
        %s660 = scalar_select %p659, %s36, 1
        %s661 = smul.addr %s660, 8
        %s662 = scalar_lea.vmem %s2, %s661
        %p663 = pneg %p109
        %p664 = pneg %p106
        %p665 = scmp.lt.s32.totalorder %s36, 1
        %s666 = scalar_select %p665, %s36, 1
        %s667 = smul.addr %s666, 8
        %s668 = scalar_lea.vmem %s3, %s667
        %p669 = pneg %p135
        %p670 = pneg %p132
        %p671 = pneg %p156
        %p672 = pneg %p153
        %p673 = pneg %p177
        %p674 = pneg %p174
        %p675 = pneg %p198
        %p676 = pneg %p195
        %p677 = pneg %p219
        %p678 = pneg %p216
        %p679 = pneg %p240
        %p680 = pneg %p237
        %p681 = pneg %p261
        %p682 = pneg %p258
        %p683 = pneg %p282
        %p684 = pneg %p279
        %p685 = pneg %p303
        %p686 = pneg %p300
        %p687 = pneg %p324
        %p688 = pneg %p321
        %p689 = pneg %p345
        %p690 = pneg %p342
        %p691 = pneg %p366
        %p692 = pneg %p363
        %p693 = pneg %p387
        %p694 = pneg %p384
        %p695 = pneg %p408
        %p696 = pneg %p405
        %p697 = pneg %p429
        %p698 = pneg %p426
        %p699 = pneg %p450
        %p700 = pneg %p447
        %p701 = pneg %p471
        %p702 = pneg %p468
        %p703 = pneg %p492
        %p704 = pneg %p489
        %p705 = pneg %p513
        %p706 = pneg %p510
        %p707 = pneg %p539
        %p708 = pneg %p536
        %s709 = sand.u32 %s526, 1
        %s710 = scalar_lea.sflag [#allocation4], %s709
        %s711 = sand.u32 %s526, 1
        %s712 = smul.addr %s711, 8
        %s713 = scalar_lea.vmem [#allocation3], %s712
        %p714 = scmp.lt.s32.totalorder %s36, 1
        %s715 = scalar_select %p714, %s36, 1
        %s716 = smul.addr %s715, 8
        %s717 = scalar_lea.vmem %s0, %s716
        %p718 = scmp.lt.s32.totalorder %s36, 1
        %s719 = scalar_select %p718, %s36, 1
        %s720 = smul.addr %s719, 4
        %s721 = scalar_lea.vmem %s1, %s720
        %p722 = scmp.lt.s32.totalorder %s36, 1
        %s723 = scalar_select %p722, %s36, 1
        %s724 = smul.addr %s723, 8
        %s725 = scalar_lea.vmem %s2, %s724
        %p726 = scmp.lt.s32.totalorder %s36, 1
        %s727 = scalar_select %p726, %s36, 1
        %s728 = smul.addr %s727, 8
        %s729 = scalar_lea.vmem %s3, %s728
        %v731 = vld [vmem:[%s717] sm:$0xff]
        %v732 = vld [vmem:[%s721] sm:$0xf]
        %v733 = vpack.c.bf16 %v731, %v731
        %v734 = vld [vmem:[%s4] sm:$0xf]
        %v735 = vld [vmem:[%s4 + $0x4] sm:$0xf]
        %v736 = vld [vmem:[%s4 + $0x8] sm:$0xf]
        %v737 = vld [vmem:[%s4 + $0xc] sm:$0xf]
        %v738 = vld [vmem:[%s5] sm:$0x1]
        %v740 = vlaneseq
        %v741 = vshrl.u32 %v740, 7
        %v742 = vsub.s32 0, %v741
        %v743 = vrot.slane %v738, %v742
        %v749 = vunpack.c.l.b16 %v734
        %v750 = vunpack.c.l.b16 %v735
        %v751 = vunpack.c.l.b16 %v736
        %v752 = vunpack.c.l.b16 %v737
        %v753 = vpack.c.b16 %v750, %v749
        %v754 = vpack.c.b16 %v752, %v751
        %vm757 = vcmask 261120
        %v759 = vsel %vm757, %v733, 0
        %761 = vmatprep.subr.bf16.mxu0 0
        %762 = vmatpush1.bf16.msra.mxu0 0
        %763 = vmatprep.subr.bf16.mxu0 0
        %764 = vmatpush1.bf16.msra.mxu0 0
        %765 = vmatprep.subr.bf16.mxu0 0
        %766 = vmatpush1.bf16.msra.mxu0 0
        %767 = vmatprep.subr.bf16.mxu0 0
        %768 = vmatpush1.bf16.msra.mxu0 0
        %769 = vmatprep.subr.bf16.mxu0 0
        %770 = vmatpush1.bf16.msra.mxu0 0
        %771 = vmatprep.subr.bf16.mxu0 0
        %772 = vmatpush1.bf16.msra.mxu0 0
        %773 = vmatprep.subr.bf16.mxu0 0
        %774 = vmatpush1.bf16.msra.mxu0 %v754
        %775 = vmatprep.subr.bf16.mxu0 0
        %776 = vmatpush1.bf16.msra.mxu0 %v753
        %777 = vmatprep.subr.bf16.mxu0 0
        %778 = vmatpush2.bf16.msra.mxu0 0
        %779 = vmatprep.subr.bf16.mxu0 0
        %780 = vmatpush2.bf16.msra.mxu0 0
        %781 = vmatprep.subr.bf16.mxu0 0
        %782 = vmatpush2.bf16.msra.mxu0 0
        %783 = vmatprep.subr.bf16.mxu0 0
        %784 = vmatpush2.bf16.msra.mxu0 0
        %785 = vmatprep.subr.bf16.mxu0 0
        %786 = vmatpush2.bf16.msra.mxu0 0
        %787 = vmatprep.subr.bf16.mxu0 0
        %788 = vmatpush2.bf16.msra.mxu0 0
        %789 = vmatprep.subr.bf16.mxu0 0
        %790 = vmatpush2.bf16.msra.mxu0 0
        %791 = vmatprep.subr.bf16.mxu0 0
        %792 = vmatpush2.bf16.msra.mxu0 0
        %793 = vmatprep.mubr.bf16.mxu0 0
        %794 = vmatmul.mubr.bf16.gmra.mxu0 %v759
        %v795 = vpop.f32.mrf.mxu0
        %v796 = vadd.f32 %v743, %v795
        %v797 = vpop.f32.mrf.mxu0
        %v798 = vpop.f32.mrf.mxu0
        %v799 = vpop.f32.mrf.mxu0
        %800 = vdwg.mxu0
        %v801 = vld [vmem:[%s725] sm:$0xff]
        %v802 = vld [vmem:[%s6] sm:$0xf]
        %v803 = vld [vmem:[%s6 + $0x4] sm:$0xf]
        %v804 = vld [vmem:[%s6 + $0x8] sm:$0xf]
        %v805 = vld [vmem:[%s6 + $0xc] sm:$0xf]
        %v806 = vld [vmem:[%s7] sm:$0x1]
        %v807 = vld [vmem:[%s8] sm:$0x1]
        %v808 = vld [vmem:[%s9] sm:$0x1]
        %v809 = vmul.f32 %v796, 0.35355338
        %v810 = vpack.c.bf16 %v809, %v809
        %v811 = vpack.c.bf16 %v796, %v796
        %813 = vrot.lane.b32.xlu0 %v811, 96
        %v814 = vpop.permute.xlu0 %813
        %vm815 = vcmask 64512
        %v817 = vsel %vm815, %v810, 0
        %v820 = vsel %vm815, %v814, 0
        %822 = vmatprep.subr.bf16.mxu0 0
        %823 = vmatpush1.bf16.xpose.msra.mxu0 0
        %824 = vmatprep.subr.bf16.mxu0 0
        %825 = vmatpush1.bf16.xpose.msra.mxu0 0
        %826 = vmatprep.subr.bf16.mxu0 0
        %827 = vmatpush1.bf16.xpose.msra.mxu0 0
        %828 = vmatprep.subr.bf16.mxu0 0
        %829 = vmatpush1.bf16.xpose.msra.mxu0 0
        %830 = vmatprep.subr.bf16.mxu0 0
        %831 = vmatpush1.bf16.xpose.msra.mxu0 0
        %832 = vmatprep.subr.bf16.mxu0 0
        %833 = vmatpush1.bf16.xpose.msra.mxu0 0
        %834 = vmatprep.subr.bf16.mxu0 0
        %835 = vmatpush1.bf16.xpose.msra.mxu0 0
        %836 = vmatprep.subr.bf16.mxu0 0
        %837 = vmatpush1.bf16.xpose.msra.mxu0 %v820
        %838 = vmatprep.subr.bf16.mxu0 0
        %839 = vmatpush2.bf16.xpose.msra.mxu0 0
        %840 = vmatprep.subr.bf16.mxu0 0
        %841 = vmatpush2.bf16.xpose.msra.mxu0 0
        %842 = vmatprep.subr.bf16.mxu0 0
        %843 = vmatpush2.bf16.xpose.msra.mxu0 0
        %844 = vmatprep.subr.bf16.mxu0 0
        %845 = vmatpush2.bf16.xpose.msra.mxu0 0
        %846 = vmatprep.subr.bf16.mxu0 0
        %847 = vmatpush2.bf16.xpose.msra.mxu0 0
        %848 = vmatprep.subr.bf16.mxu0 0
        %849 = vmatpush2.bf16.xpose.msra.mxu0 0
        %850 = vmatprep.subr.bf16.mxu0 0
        %851 = vmatpush2.bf16.xpose.msra.mxu0 0
        %852 = vmatprep.subr.bf16.mxu0 0
        %853 = vmatpush2.bf16.xpose.msra.mxu0 0
        %854 = vmatprep.mubr.bf16.mxu0 0
        %855 = vmatmul.mubr.bf16.gmra.mxu0 %v817
        %v856 = vpop.f32.mrf.mxu0
        %v857 = vadd.f32 %v801, %v856
        %v858 = vpop.f32.mrf.mxu0
        %v859 = vpop.f32.mrf.mxu0
        %v860 = vpop.f32.mrf.mxu0
        %861 = vdwg.mxu0
        %v862 = vsel %vm815, %v857, -inf
        %863 = vmax.xlane.f32.xlu0 %v862
        %v864 = vpop.xlane.xlu0 %863
        %v865 = vsub.f32 %v857, %v864
        %v866 = vmul.f32 %v865, 1.442695
        %v867 = vpow.pop %v866
        %v868 = vsel %vm815, %v867, 0.0
        %869 = vadd.xlane.f32.xlu0 %v868
        %v870 = vpop.xlane.xlu0 %869
        %v871 = vrcp.pop %v870
        %v872 = vmul.f32 %v867, %v871
        %v873 = vpack.c.bf16 %v872, %v872
        %874 = vrot.lane.b32.xlu0 %v811, 64
        %v875 = vpop.permute.xlu0 %874
        %v877 = vsel %vm815, %v873, 0
        %vm879 = vcmask 1043456
        %v881 = vsel %vm879, %v875, 0
        %883 = vmatprep.subr.bf16.mxu0 0
        %884 = vmatpush1.bf16.msra.mxu0 0
        %885 = vmatprep.subr.bf16.mxu0 0
        %886 = vmatpush1.bf16.msra.mxu0 0
        %887 = vmatprep.subr.bf16.mxu0 0
        %888 = vmatpush1.bf16.msra.mxu0 0
        %889 = vmatprep.subr.bf16.mxu0 0
        %890 = vmatpush1.bf16.msra.mxu0 0
        %891 = vmatprep.subr.bf16.mxu0 0
        %892 = vmatpush1.bf16.msra.mxu0 0
        %893 = vmatprep.subr.bf16.mxu0 0
        %894 = vmatpush1.bf16.msra.mxu0 0
        %895 = vmatprep.subr.bf16.mxu0 0
        %896 = vmatpush1.bf16.msra.mxu0 0
        %897 = vmatprep.subr.bf16.mxu0 0
        %898 = vmatpush1.bf16.msra.mxu0 %v881
        %899 = vmatprep.subr.bf16.mxu0 0
        %900 = vmatpush2.bf16.msra.mxu0 0
        %901 = vmatprep.subr.bf16.mxu0 0
        %902 = vmatpush2.bf16.msra.mxu0 0
        %903 = vmatprep.subr.bf16.mxu0 0
        %904 = vmatpush2.bf16.msra.mxu0 0
        %905 = vmatprep.subr.bf16.mxu0 0
        %906 = vmatpush2.bf16.msra.mxu0 0
        %907 = vmatprep.subr.bf16.mxu0 0
        %908 = vmatpush2.bf16.msra.mxu0 0
        %909 = vmatprep.subr.bf16.mxu0 0
        %910 = vmatpush2.bf16.msra.mxu0 0
        %911 = vmatprep.subr.bf16.mxu0 0
        %912 = vmatpush2.bf16.msra.mxu0 0
        %913 = vmatprep.subr.bf16.mxu0 0
        %914 = vmatpush2.bf16.msra.mxu0 0
        %915 = vmatprep.mubr.bf16.mxu0 0
        %916 = vmatmul.mubr.bf16.gmra.mxu0 %v877
        %v917 = vpop.f32.mrf.mxu0
        %v918 = vadd.f32 0.0, %v917
        %v919 = vpop.f32.mrf.mxu0
        %v920 = vpop.f32.mrf.mxu0
        %v921 = vpop.f32.mrf.mxu0
        %922 = vdwg.mxu0
        %923 = vst.msk [vmem:[#allocation2] sm:$0xff] %vm815, %v918
        %925 = vrot.lane.b32.xlu0 %v810, 120
        %v926 = vpop.permute.xlu0 %925
        %927 = vrot.lane.b32.xlu0 %v811, 88
        %v928 = vpop.permute.xlu0 %927
        %v930 = vsel %vm815, %v926, 0
        %v933 = vsel %vm815, %v928, 0
        %935 = vmatprep.subr.bf16.mxu0 0
        %936 = vmatpush1.bf16.xpose.msra.mxu0 0
        %937 = vmatprep.subr.bf16.mxu0 0
        %938 = vmatpush1.bf16.xpose.msra.mxu0 0
        %939 = vmatprep.subr.bf16.mxu0 0
        %940 = vmatpush1.bf16.xpose.msra.mxu0 0
        %941 = vmatprep.subr.bf16.mxu0 0
        %942 = vmatpush1.bf16.xpose.msra.mxu0 0
        %943 = vmatprep.subr.bf16.mxu0 0
        %944 = vmatpush1.bf16.xpose.msra.mxu0 0
        %945 = vmatprep.subr.bf16.mxu0 0
        %946 = vmatpush1.bf16.xpose.msra.mxu0 0
        %947 = vmatprep.subr.bf16.mxu0 0
        %948 = vmatpush1.bf16.xpose.msra.mxu0 0
        %949 = vmatprep.subr.bf16.mxu0 0
        %950 = vmatpush1.bf16.xpose.msra.mxu0 %v933
        %951 = vmatprep.subr.bf16.mxu0 0
        %952 = vmatpush2.bf16.xpose.msra.mxu0 0
        %953 = vmatprep.subr.bf16.mxu0 0
        %954 = vmatpush2.bf16.xpose.msra.mxu0 0
        %955 = vmatprep.subr.bf16.mxu0 0
        %956 = vmatpush2.bf16.xpose.msra.mxu0 0
        %957 = vmatprep.subr.bf16.mxu0 0
        %958 = vmatpush2.bf16.xpose.msra.mxu0 0
        %959 = vmatprep.subr.bf16.mxu0 0
        %960 = vmatpush2.bf16.xpose.msra.mxu0 0
        %961 = vmatprep.subr.bf16.mxu0 0
        %962 = vmatpush2.bf16.xpose.msra.mxu0 0
        %963 = vmatprep.subr.bf16.mxu0 0
        %964 = vmatpush2.bf16.xpose.msra.mxu0 0
        %965 = vmatprep.subr.bf16.mxu0 0
        %966 = vmatpush2.bf16.xpose.msra.mxu0 0
        %967 = vmatprep.mubr.bf16.mxu0 0
        %968 = vmatmul.mubr.bf16.gmra.mxu0 %v930
        %v969 = vpop.f32.mrf.mxu0
        %v970 = vadd.f32 %v801, %v969
        %v971 = vpop.f32.mrf.mxu0
        %v972 = vpop.f32.mrf.mxu0
        %v973 = vpop.f32.mrf.mxu0
        %974 = vdwg.mxu0
        %v975 = vsel %vm815, %v970, -inf
        %976 = vmax.xlane.f32.xlu0 %v975
        %v977 = vpop.xlane.xlu0 %976
        %v978 = vsub.f32 %v970, %v977
        %v979 = vmul.f32 %v978, 1.442695
        %v980 = vpow.pop %v979
        %v981 = vsel %vm815, %v980, 0.0
        %982 = vadd.xlane.f32.xlu0 %v981
        %v983 = vpop.xlane.xlu0 %982
        %v984 = vrcp.pop %v983
        %v985 = vmul.f32 %v980, %v984
        %v986 = vpack.c.bf16 %v985, %v985
        %987 = vrot.lane.b32.xlu0 %v811, 56
        %v988 = vpop.permute.xlu0 %987
        %v990 = vsel %vm815, %v986, 0
        %v993 = vsel %vm879, %v988, 0
        %995 = vmatprep.subr.bf16.mxu0 0
        %996 = vmatpush1.bf16.msra.mxu0 0
        %997 = vmatprep.subr.bf16.mxu0 0
        %998 = vmatpush1.bf16.msra.mxu0 0
        %999 = vmatprep.subr.bf16.mxu0 0
        %1000 = vmatpush1.bf16.msra.mxu0 0
        %1001 = vmatprep.subr.bf16.mxu0 0
        %1002 = vmatpush1.bf16.msra.mxu0 0
        %1003 = vmatprep.subr.bf16.mxu0 0
        %1004 = vmatpush1.bf16.msra.mxu0 0
        %1005 = vmatprep.subr.bf16.mxu0 0
        %1006 = vmatpush1.bf16.msra.mxu0 0
        %1007 = vmatprep.subr.bf16.mxu0 0
        %1008 = vmatpush1.bf16.msra.mxu0 0
        %1009 = vmatprep.subr.bf16.mxu0 0
        %1010 = vmatpush1.bf16.msra.mxu0 %v993
        %1011 = vmatprep.subr.bf16.mxu0 0
        %1012 = vmatpush2.bf16.msra.mxu0 0
        %1013 = vmatprep.subr.bf16.mxu0 0
        %1014 = vmatpush2.bf16.msra.mxu0 0
        %1015 = vmatprep.subr.bf16.mxu0 0
        %1016 = vmatpush2.bf16.msra.mxu0 0
        %1017 = vmatprep.subr.bf16.mxu0 0
        %1018 = vmatpush2.bf16.msra.mxu0 0
        %1019 = vmatprep.subr.bf16.mxu0 0
        %1020 = vmatpush2.bf16.msra.mxu0 0
        %1021 = vmatprep.subr.bf16.mxu0 0
        %1022 = vmatpush2.bf16.msra.mxu0 0
        %1023 = vmatprep.subr.bf16.mxu0 0
        %1024 = vmatpush2.bf16.msra.mxu0 0
        %1025 = vmatprep.subr.bf16.mxu0 0
        %1026 = vmatpush2.bf16.msra.mxu0 0
        %1027 = vmatprep.mubr.bf16.mxu0 0
        %1028 = vmatmul.mubr.bf16.gmra.mxu0 %v990
        %v1029 = vpop.f32.mrf.mxu0
        %v1030 = vadd.f32 0.0, %v1029
        %v1031 = vpop.f32.mrf.mxu0
        %v1032 = vpop.f32.mrf.mxu0
        %v1033 = vpop.f32.mrf.mxu0
        %1034 = vdwg.mxu0
        %1036 = vrot.lane.b32.xlu0 %v1030, 8
        %v1037 = vpop.permute.xlu0 %1036
        %vm1039 = vcmask 130112
        %1040 = vst.msk [vmem:[#allocation2] sm:$0xff] %vm1039, %v1037
        %1041 = vrot.lane.b32.xlu0 %v810, 112
        %v1042 = vpop.permute.xlu0 %1041
        %1043 = vrot.lane.b32.xlu0 %v811, 80
        %v1044 = vpop.permute.xlu0 %1043
        %v1046 = vsel %vm815, %v1042, 0
        %v1049 = vsel %vm815, %v1044, 0
        %1051 = vmatprep.subr.bf16.mxu0 0
        %1052 = vmatpush1.bf16.xpose.msra.mxu0 0
        %1053 = vmatprep.subr.bf16.mxu0 0
        %1054 = vmatpush1.bf16.xpose.msra.mxu0 0
        %1055 = vmatprep.subr.bf16.mxu0 0
        %1056 = vmatpush1.bf16.xpose.msra.mxu0 0
        %1057 = vmatprep.subr.bf16.mxu0 0
        %1058 = vmatpush1.bf16.xpose.msra.mxu0 0
        %1059 = vmatprep.subr.bf16.mxu0 0
        %1060 = vmatpush1.bf16.xpose.msra.mxu0 0
        %1061 = vmatprep.subr.bf16.mxu0 0
        %1062 = vmatpush1.bf16.xpose.msra.mxu0 0
        %1063 = vmatprep.subr.bf16.mxu0 0
        %1064 = vmatpush1.bf16.xpose.msra.mxu0 0
        %1065 = vmatprep.subr.bf16.mxu0 0
        %1066 = vmatpush1.bf16.xpose.msra.mxu0 %v1049
        %1067 = vmatprep.subr.bf16.mxu0 0
        %1068 = vmatpush2.bf16.xpose.msra.mxu0 0
        %1069 = vmatprep.subr.bf16.mxu0 0
        %1070 = vmatpush2.bf16.xpose.msra.mxu0 0
        %1071 = vmatprep.subr.bf16.mxu0 0
        %1072 = vmatpush2.bf16.xpose.msra.mxu0 0
        %1073 = vmatprep.subr.bf16.mxu0 0
        %1074 = vmatpush2.bf16.xpose.msra.mxu0 0
        %1075 = vmatprep.subr.bf16.mxu0 0
        %1076 = vmatpush2.bf16.xpose.msra.mxu0 0
        %1077 = vmatprep.subr.bf16.mxu0 0
        %1078 = vmatpush2.bf16.xpose.msra.mxu0 0
        %1079 = vmatprep.subr.bf16.mxu0 0
        %1080 = vmatpush2.bf16.xpose.msra.mxu0 0
        %1081 = vmatprep.subr.bf16.mxu0 0
        %1082 = vmatpush2.bf16.xpose.msra.mxu0 0
        %1083 = vmatprep.mubr.bf16.mxu0 0
        %1084 = vmatmul.mubr.bf16.gmra.mxu0 %v1046
        %v1085 = vpop.f32.mrf.mxu0
        %v1086 = vadd.f32 %v801, %v1085
        %v1087 = vpop.f32.mrf.mxu0
        %v1088 = vpop.f32.mrf.mxu0
        %v1089 = vpop.f32.mrf.mxu0
        %1090 = vdwg.mxu0
        %v1091 = vsel %vm815, %v1086, -inf
        %1092 = vmax.xlane.f32.xlu0 %v1091
        %v1093 = vpop.xlane.xlu0 %1092
        %v1094 = vsub.f32 %v1086, %v1093
        %v1095 = vmul.f32 %v1094, 1.442695
        %v1096 = vpow.pop %v1095
        %v1097 = vsel %vm815, %v1096, 0.0
        %1098 = vadd.xlane.f32.xlu0 %v1097
        %v1099 = vpop.xlane.xlu0 %1098
        %v1100 = vrcp.pop %v1099
        %v1101 = vmul.f32 %v1096, %v1100
        %v1102 = vpack.c.bf16 %v1101, %v1101
        %1103 = vrot.lane.b32.xlu0 %v811, 48
        %v1104 = vpop.permute.xlu0 %1103
        %v1106 = vsel %vm815, %v1102, 0
        %v1109 = vsel %vm879, %v1104, 0
        %1111 = vmatprep.subr.bf16.mxu0 0
        %1112 = vmatpush1.bf16.msra.mxu0 0
        %1113 = vmatprep.subr.bf16.mxu0 0
        %1114 = vmatpush1.bf16.msra.mxu0 0
        %1115 = vmatprep.subr.bf16.mxu0 0
        %1116 = vmatpush1.bf16.msra.mxu0 0
        %1117 = vmatprep.subr.bf16.mxu0 0
        %1118 = vmatpush1.bf16.msra.mxu0 0
        %1119 = vmatprep.subr.bf16.mxu0 0
        %1120 = vmatpush1.bf16.msra.mxu0 0
        %1121 = vmatprep.subr.bf16.mxu0 0
        %1122 = vmatpush1.bf16.msra.mxu0 0
        %1123 = vmatprep.subr.bf16.mxu0 0
        %1124 = vmatpush1.bf16.msra.mxu0 0
        %1125 = vmatprep.subr.bf16.mxu0 0
        %1126 = vmatpush1.bf16.msra.mxu0 %v1109
        %1127 = vmatprep.subr.bf16.mxu0 0
        %1128 = vmatpush2.bf16.msra.mxu0 0
        %1129 = vmatprep.subr.bf16.mxu0 0
        %1130 = vmatpush2.bf16.msra.mxu0 0
        %1131 = vmatprep.subr.bf16.mxu0 0
        %1132 = vmatpush2.bf16.msra.mxu0 0
        %1133 = vmatprep.subr.bf16.mxu0 0
        %1134 = vmatpush2.bf16.msra.mxu0 0
        %1135 = vmatprep.subr.bf16.mxu0 0
        %1136 = vmatpush2.bf16.msra.mxu0 0
        %1137 = vmatprep.subr.bf16.mxu0 0
        %1138 = vmatpush2.bf16.msra.mxu0 0
        %1139 = vmatprep.subr.bf16.mxu0 0
        %1140 = vmatpush2.bf16.msra.mxu0 0
        %1141 = vmatprep.subr.bf16.mxu0 0
        %1142 = vmatpush2.bf16.msra.mxu0 0
        %1143 = vmatprep.mubr.bf16.mxu0 0
        %1144 = vmatmul.mubr.bf16.gmra.mxu0 %v1106
        %v1145 = vpop.f32.mrf.mxu0
        %v1146 = vadd.f32 0.0, %v1145
        %v1147 = vpop.f32.mrf.mxu0
        %v1148 = vpop.f32.mrf.mxu0
        %v1149 = vpop.f32.mrf.mxu0
        %1150 = vdwg.mxu0
        %1152 = vrot.lane.b32.xlu0 %v1146, 16
        %v1153 = vpop.permute.xlu0 %1152
        %vm1155 = vcmask 195712
        %1156 = vst.msk [vmem:[#allocation2] sm:$0xff] %vm1155, %v1153
        %1157 = vrot.lane.b32.xlu0 %v810, 104
        %v1158 = vpop.permute.xlu0 %1157
        %1159 = vrot.lane.b32.xlu0 %v811, 72
        %v1160 = vpop.permute.xlu0 %1159
        %v1162 = vsel %vm815, %v1158, 0
        %v1165 = vsel %vm815, %v1160, 0
        %1167 = vmatprep.subr.bf16.mxu0 0
        %1168 = vmatpush1.bf16.xpose.msra.mxu0 0
        %1169 = vmatprep.subr.bf16.mxu0 0
        %1170 = vmatpush1.bf16.xpose.msra.mxu0 0
        %1171 = vmatprep.subr.bf16.mxu0 0
        %1172 = vmatpush1.bf16.xpose.msra.mxu0 0
        %1173 = vmatprep.subr.bf16.mxu0 0
        %1174 = vmatpush1.bf16.xpose.msra.mxu0 0
        %1175 = vmatprep.subr.bf16.mxu0 0
        %1176 = vmatpush1.bf16.xpose.msra.mxu0 0
        %1177 = vmatprep.subr.bf16.mxu0 0
        %1178 = vmatpush1.bf16.xpose.msra.mxu0 0
        %1179 = vmatprep.subr.bf16.mxu0 0
        %1180 = vmatpush1.bf16.xpose.msra.mxu0 0
        %1181 = vmatprep.subr.bf16.mxu0 0
        %1182 = vmatpush1.bf16.xpose.msra.mxu0 %v1165
        %1183 = vmatprep.subr.bf16.mxu0 0
        %1184 = vmatpush2.bf16.xpose.msra.mxu0 0
        %1185 = vmatprep.subr.bf16.mxu0 0
        %1186 = vmatpush2.bf16.xpose.msra.mxu0 0
        %1187 = vmatprep.subr.bf16.mxu0 0
        %1188 = vmatpush2.bf16.xpose.msra.mxu0 0
        %1189 = vmatprep.subr.bf16.mxu0 0
        %1190 = vmatpush2.bf16.xpose.msra.mxu0 0
        %1191 = vmatprep.subr.bf16.mxu0 0
        %1192 = vmatpush2.bf16.xpose.msra.mxu0 0
        %1193 = vmatprep.subr.bf16.mxu0 0
        %1194 = vmatpush2.bf16.xpose.msra.mxu0 0
        %1195 = vmatprep.subr.bf16.mxu0 0
        %1196 = vmatpush2.bf16.xpose.msra.mxu0 0
        %1197 = vmatprep.subr.bf16.mxu0 0
        %1198 = vmatpush2.bf16.xpose.msra.mxu0 0
        %1199 = vmatprep.mubr.bf16.mxu0 0
        %1200 = vmatmul.mubr.bf16.gmra.mxu0 %v1162
        %v1201 = vpop.f32.mrf.mxu0
        %v1202 = vadd.f32 %v801, %v1201
        %v1203 = vpop.f32.mrf.mxu0
        %v1204 = vpop.f32.mrf.mxu0
        %v1205 = vpop.f32.mrf.mxu0
        %1206 = vdwg.mxu0
        %v1207 = vsel %vm815, %v1202, -inf
        %1208 = vmax.xlane.f32.xlu0 %v1207
        %v1209 = vpop.xlane.xlu0 %1208
        %v1210 = vsub.f32 %v1202, %v1209
        %v1211 = vmul.f32 %v1210, 1.442695
        %v1212 = vpow.pop %v1211
        %v1213 = vsel %vm815, %v1212, 0.0
        %1214 = vadd.xlane.f32.xlu0 %v1213
        %v1215 = vpop.xlane.xlu0 %1214
        %v1216 = vrcp.pop %v1215
        %v1217 = vmul.f32 %v1212, %v1216
        %v1218 = vpack.c.bf16 %v1217, %v1217
        %1219 = vrot.lane.b32.xlu0 %v811, 40
        %v1220 = vpop.permute.xlu0 %1219
        %v1222 = vsel %vm815, %v1218, 0
        %v1225 = vsel %vm879, %v1220, 0
        %1227 = vmatprep.subr.bf16.mxu0 0
        %1228 = vmatpush1.bf16.msra.mxu0 0
        %1229 = vmatprep.subr.bf16.mxu0 0
        %1230 = vmatpush1.bf16.msra.mxu0 0
        %1231 = vmatprep.subr.bf16.mxu0 0
        %1232 = vmatpush1.bf16.msra.mxu0 0
        %1233 = vmatprep.subr.bf16.mxu0 0
        %1234 = vmatpush1.bf16.msra.mxu0 0
        %1235 = vmatprep.subr.bf16.mxu0 0
        %1236 = vmatpush1.bf16.msra.mxu0 0
        %1237 = vmatprep.subr.bf16.mxu0 0
        %1238 = vmatpush1.bf16.msra.mxu0 0
        %1239 = vmatprep.subr.bf16.mxu0 0
        %1240 = vmatpush1.bf16.msra.mxu0 0
        %1241 = vmatprep.subr.bf16.mxu0 0
        %1242 = vmatpush1.bf16.msra.mxu0 %v1225
        %1243 = vmatprep.subr.bf16.mxu0 0
        %1244 = vmatpush2.bf16.msra.mxu0 0
        %1245 = vmatprep.subr.bf16.mxu0 0
        %1246 = vmatpush2.bf16.msra.mxu0 0
        %1247 = vmatprep.subr.bf16.mxu0 0
        %1248 = vmatpush2.bf16.msra.mxu0 0
        %1249 = vmatprep.subr.bf16.mxu0 0
        %1250 = vmatpush2.bf16.msra.mxu0 0
        %1251 = vmatprep.subr.bf16.mxu0 0
        %1252 = vmatpush2.bf16.msra.mxu0 0
        %1253 = vmatprep.subr.bf16.mxu0 0
        %1254 = vmatpush2.bf16.msra.mxu0 0
        %1255 = vmatprep.subr.bf16.mxu0 0
        %1256 = vmatpush2.bf16.msra.mxu0 0
        %1257 = vmatprep.subr.bf16.mxu0 0
        %1258 = vmatpush2.bf16.msra.mxu0 0
        %1259 = vmatprep.mubr.bf16.mxu0 0
        %1260 = vmatmul.mubr.bf16.gmra.mxu0 %v1222
        %v1261 = vpop.f32.mrf.mxu0
        %v1262 = vadd.f32 0.0, %v1261
        %v1263 = vpop.f32.mrf.mxu0
        %v1264 = vpop.f32.mrf.mxu0
        %v1265 = vpop.f32.mrf.mxu0
        %1266 = vdwg.mxu0
        %1268 = vrot.lane.b32.xlu0 %v1262, 24
        %v1269 = vpop.permute.xlu0 %1268
        %vm1271 = vcmask 261312
        %1272 = vst.msk [vmem:[#allocation2] sm:$0xff] %vm1271, %v1269
        %v1273 = vld [vmem:[#allocation2] sm:$0xff]
        %v1274 = vpack.c.bf16 %v1273, %v1273
        %v1276 = vlaneseq
        %v1277 = vshrl.u32 %v1276, 7
        %v1278 = vsub.s32 0, %v1277
        %v1279 = vrot.slane %v806, %v1278
        %v1285 = vunpack.c.l.b16 %v802
        %v1286 = vunpack.c.l.b16 %v803
        %v1287 = vunpack.c.l.b16 %v804
        %v1288 = vunpack.c.l.b16 %v805
        %v1289 = vpack.c.b16 %v1286, %v1285
        %v1290 = vpack.c.b16 %v1288, %v1287
        %v1294 = vsel %vm757, %v1274, 0
        %1296 = vmatprep.subr.bf16.mxu0 0
        %1297 = vmatpush1.bf16.msra.mxu0 0
        %1298 = vmatprep.subr.bf16.mxu0 0
        %1299 = vmatpush1.bf16.msra.mxu0 0
        %1300 = vmatprep.subr.bf16.mxu0 0
        %1301 = vmatpush1.bf16.msra.mxu0 0
        %1302 = vmatprep.subr.bf16.mxu0 0
        %1303 = vmatpush1.bf16.msra.mxu0 0
        %1304 = vmatprep.subr.bf16.mxu0 0
        %1305 = vmatpush1.bf16.msra.mxu0 0
        %1306 = vmatprep.subr.bf16.mxu0 0
        %1307 = vmatpush1.bf16.msra.mxu0 0
        %1308 = vmatprep.subr.bf16.mxu0 0
        %1309 = vmatpush1.bf16.msra.mxu0 %v1290
        %1310 = vmatprep.subr.bf16.mxu0 0
        %1311 = vmatpush1.bf16.msra.mxu0 %v1289
        %1312 = vmatprep.subr.bf16.mxu0 0
        %1313 = vmatpush2.bf16.msra.mxu0 0
        %1314 = vmatprep.subr.bf16.mxu0 0
        %1315 = vmatpush2.bf16.msra.mxu0 0
        %1316 = vmatprep.subr.bf16.mxu0 0
        %1317 = vmatpush2.bf16.msra.mxu0 0
        %1318 = vmatprep.subr.bf16.mxu0 0
        %1319 = vmatpush2.bf16.msra.mxu0 0
        %1320 = vmatprep.subr.bf16.mxu0 0
        %1321 = vmatpush2.bf16.msra.mxu0 0
        %1322 = vmatprep.subr.bf16.mxu0 0
        %1323 = vmatpush2.bf16.msra.mxu0 0
        %1324 = vmatprep.subr.bf16.mxu0 0
        %1325 = vmatpush2.bf16.msra.mxu0 0
        %1326 = vmatprep.subr.bf16.mxu0 0
        %1327 = vmatpush2.bf16.msra.mxu0 0
        %1328 = vmatprep.mubr.bf16.mxu0 0
        %1329 = vmatmul.mubr.bf16.gmra.mxu0 %v1294
        %v1330 = vpop.f32.mrf.mxu0
        %v1331 = vadd.f32 %v1279, %v1330
        %v1332 = vpop.f32.mrf.mxu0
        %v1333 = vpop.f32.mrf.mxu0
        %v1334 = vpop.f32.mrf.mxu0
        %1335 = vdwg.mxu0
        %v1336 = vadd.f32 %v1331, %v731
        %v1337 = vsel %vm757, %v1336, 0.0
        %1338 = vadd.xlane.f32.xlu0 %v1337
        %v1339 = vpop.xlane.xlu0 %1338
        %v1340 = vrcp.pop 32.0
        %v1341 = vmul.f32 %v1339, %v1340
        %v1342 = vsub.f32 %v1336, %v1341
        %v1343 = vmul.f32 %v1342, %v1342
        %v1344 = vsel %vm757, %v1343, 0.0
        %1345 = vadd.xlane.f32.xlu0 %v1344
        %v1346 = vpop.xlane.xlu0 %1345
        %v1347 = vmul.f32 %v1346, %v1340
        %v1348 = vadd.f32 %v1347, 1e-05
        %v1349 = vrsqrt.pop %v1348
        %v1350 = vmul.f32 %v1342, %v1349
        %v1352 = vlaneseq
        %v1353 = vshrl.u32 %v1352, 7
        %v1354 = vsub.s32 0, %v1353
        %v1355 = vrot.slane %v807, %v1354
        %v1357 = vmul.f32 %v1350, %v1355
        %v1359 = vlaneseq
        %v1360 = vshrl.u32 %v1359, 7
        %v1361 = vsub.s32 0, %v1360
        %v1362 = vrot.slane %v808, %v1361
        %v1364 = vadd.f32 %v1357, %v1362
        %v1365 = vld [vmem:[%s10] sm:$0xf]
        %v1366 = vld [vmem:[%s10 + $0x4] sm:$0xf]
        %v1367 = vld [vmem:[%s10 + $0x8] sm:$0xf]
        %v1368 = vld [vmem:[%s10 + $0xc] sm:$0xf]
        %v1369 = vld [vmem:[%s11] sm:$0x1]
        %v1370 = vpack.c.bf16 %v1364, %v1364
        %v1372 = vlaneseq
        %v1373 = vshrl.u32 %v1372, 7
        %v1374 = vsub.s32 0, %v1373
        %v1375 = vrot.slane %v1369, %v1374
        %v1381 = vunpack.c.l.b16 %v1365
        %v1382 = vunpack.c.l.b16 %v1366
        %v1383 = vunpack.c.l.b16 %v1367
        %v1384 = vunpack.c.l.b16 %v1368
        %v1385 = vpack.c.b16 %v1382, %v1381
        %v1386 = vpack.c.b16 %v1384, %v1383
        %v1390 = vsel %vm757, %v1370, 0
        %1392 = vmatprep.subr.bf16.mxu0 0
        %1393 = vmatpush1.bf16.msra.mxu0 0
        %1394 = vmatprep.subr.bf16.mxu0 0
        %1395 = vmatpush1.bf16.msra.mxu0 0
        %1396 = vmatprep.subr.bf16.mxu0 0
        %1397 = vmatpush1.bf16.msra.mxu0 0
        %1398 = vmatprep.subr.bf16.mxu0 0
        %1399 = vmatpush1.bf16.msra.mxu0 0
        %1400 = vmatprep.subr.bf16.mxu0 0
        %1401 = vmatpush1.bf16.msra.mxu0 0
        %1402 = vmatprep.subr.bf16.mxu0 0
        %1403 = vmatpush1.bf16.msra.mxu0 0
        %1404 = vmatprep.subr.bf16.mxu0 0
        %1405 = vmatpush1.bf16.msra.mxu0 %v1386
        %1406 = vmatprep.subr.bf16.mxu0 0
        %1407 = vmatpush1.bf16.msra.mxu0 %v1385
        %1408 = vmatprep.subr.bf16.mxu0 0
        %1409 = vmatpush2.bf16.msra.mxu0 0
        %1410 = vmatprep.subr.bf16.mxu0 0
        %1411 = vmatpush2.bf16.msra.mxu0 0
        %1412 = vmatprep.subr.bf16.mxu0 0
        %1413 = vmatpush2.bf16.msra.mxu0 0
        %1414 = vmatprep.subr.bf16.mxu0 0
        %1415 = vmatpush2.bf16.msra.mxu0 0
        %1416 = vmatprep.subr.bf16.mxu0 0
        %1417 = vmatpush2.bf16.msra.mxu0 0
        %1418 = vmatprep.subr.bf16.mxu0 0
        %1419 = vmatpush2.bf16.msra.mxu0 0
        %1420 = vmatprep.subr.bf16.mxu0 0
        %1421 = vmatpush2.bf16.msra.mxu0 0
        %1422 = vmatprep.subr.bf16.mxu0 0
        %1423 = vmatpush2.bf16.msra.mxu0 0
        %1424 = vmatprep.mubr.bf16.mxu0 0
        %1425 = vmatmul.mubr.bf16.gmra.mxu0 %v1390
        %v1426 = vpop.f32.mrf.mxu0
        %v1427 = vadd.f32 %v1375, %v1426
        %v1428 = vpop.f32.mrf.mxu0
        %v1429 = vpop.f32.mrf.mxu0
        %v1430 = vpop.f32.mrf.mxu0
        %1431 = vdwg.mxu0
        %1432 = vrot.lane.b32.xlu0 %v1385, 96
        %v1433 = vpop.permute.xlu0 %1432
        %1434 = vrot.lane.b32.xlu0 %v1386, 96
        %v1435 = vpop.permute.xlu0 %1434
        %1438 = vrot.lane.b32.xlu0 %v1375, 96
        %v1439 = vpop.permute.xlu0 %1438
        %v1442 = vsel %vm757, %v732, 0
        %1444 = vmatprep.subr.bf16.mxu0 0
        %1445 = vmatpush1.bf16.msra.mxu0 0
        %1446 = vmatprep.subr.bf16.mxu0 0
        %1447 = vmatpush1.bf16.msra.mxu0 0
        %1448 = vmatprep.subr.bf16.mxu0 0
        %1449 = vmatpush1.bf16.msra.mxu0 0
        %1450 = vmatprep.subr.bf16.mxu0 0
        %1451 = vmatpush1.bf16.msra.mxu0 0
        %1452 = vmatprep.subr.bf16.mxu0 0
        %1453 = vmatpush1.bf16.msra.mxu0 0
        %1454 = vmatprep.subr.bf16.mxu0 0
        %1455 = vmatpush1.bf16.msra.mxu0 0
        %1456 = vmatprep.subr.bf16.mxu0 0
        %1457 = vmatpush1.bf16.msra.mxu0 %v1435
        %1458 = vmatprep.subr.bf16.mxu0 0
        %1459 = vmatpush1.bf16.msra.mxu0 %v1433
        %1460 = vmatprep.subr.bf16.mxu0 0
        %1461 = vmatpush2.bf16.msra.mxu0 0
        %1462 = vmatprep.subr.bf16.mxu0 0
        %1463 = vmatpush2.bf16.msra.mxu0 0
        %1464 = vmatprep.subr.bf16.mxu0 0
        %1465 = vmatpush2.bf16.msra.mxu0 0
        %1466 = vmatprep.subr.bf16.mxu0 0
        %1467 = vmatpush2.bf16.msra.mxu0 0
        %1468 = vmatprep.subr.bf16.mxu0 0
        %1469 = vmatpush2.bf16.msra.mxu0 0
        %1470 = vmatprep.subr.bf16.mxu0 0
        %1471 = vmatpush2.bf16.msra.mxu0 0
        %1472 = vmatprep.subr.bf16.mxu0 0
        %1473 = vmatpush2.bf16.msra.mxu0 0
        %1474 = vmatprep.subr.bf16.mxu0 0
        %1475 = vmatpush2.bf16.msra.mxu0 0
        %1476 = vmatprep.mubr.bf16.mxu0 0
        %1477 = vmatmul.mubr.bf16.gmra.mxu0 %v1442
        %v1478 = vpop.f32.mrf.mxu0
        %v1479 = vadd.f32 %v1439, %v1478
        %v1480 = vpop.f32.mrf.mxu0
        %v1481 = vpop.f32.mrf.mxu0
        %v1482 = vpop.f32.mrf.mxu0
        %1483 = vdwg.mxu0
        %v1484 = vld [vmem:[%s729] sm:$0xff]
        %v1485 = vld [vmem:[%s12] sm:$0xf]
        %v1486 = vld [vmem:[%s12 + $0x4] sm:$0xf]
        %v1487 = vld [vmem:[%s12 + $0x8] sm:$0xf]
        %v1488 = vld [vmem:[%s12 + $0xc] sm:$0xf]
        %v1489 = vld [vmem:[%s13] sm:$0x1]
        %v1490 = vld [vmem:[%s14] sm:$0x1]
        %v1491 = vld [vmem:[%s15] sm:$0x1]
        %v1492 = vmul.f32 %v1427, 0.35355338
        %v1493 = vpack.c.bf16 %v1492, %v1492
        %v1494 = vpack.c.bf16 %v1479, %v1479
        %v1496 = vsel %vm815, %v1493, 0
        %v1499 = vsel %vm815, %v1494, 0
        %1501 = vmatprep.subr.bf16.mxu0 0
        %1502 = vmatpush1.bf16.xpose.msra.mxu0 0
        %1503 = vmatprep.subr.bf16.mxu0 0
        %1504 = vmatpush1.bf16.xpose.msra.mxu0 0
        %1505 = vmatprep.subr.bf16.mxu0 0
        %1506 = vmatpush1.bf16.xpose.msra.mxu0 0
        %1507 = vmatprep.subr.bf16.mxu0 0
        %1508 = vmatpush1.bf16.xpose.msra.mxu0 0
        %1509 = vmatprep.subr.bf16.mxu0 0
        %1510 = vmatpush1.bf16.xpose.msra.mxu0 0
        %1511 = vmatprep.subr.bf16.mxu0 0
        %1512 = vmatpush1.bf16.xpose.msra.mxu0 0
        %1513 = vmatprep.subr.bf16.mxu0 0
        %1514 = vmatpush1.bf16.xpose.msra.mxu0 0
        %1515 = vmatprep.subr.bf16.mxu0 0
        %1516 = vmatpush1.bf16.xpose.msra.mxu0 %v1499
        %1517 = vmatprep.subr.bf16.mxu0 0
        %1518 = vmatpush2.bf16.xpose.msra.mxu0 0
        %1519 = vmatprep.subr.bf16.mxu0 0
        %1520 = vmatpush2.bf16.xpose.msra.mxu0 0
        %1521 = vmatprep.subr.bf16.mxu0 0
        %1522 = vmatpush2.bf16.xpose.msra.mxu0 0
        %1523 = vmatprep.subr.bf16.mxu0 0
        %1524 = vmatpush2.bf16.xpose.msra.mxu0 0
        %1525 = vmatprep.subr.bf16.mxu0 0
        %1526 = vmatpush2.bf16.xpose.msra.mxu0 0
        %1527 = vmatprep.subr.bf16.mxu0 0
        %1528 = vmatpush2.bf16.xpose.msra.mxu0 0
        %1529 = vmatprep.subr.bf16.mxu0 0
        %1530 = vmatpush2.bf16.xpose.msra.mxu0 0
        %1531 = vmatprep.subr.bf16.mxu0 0
        %1532 = vmatpush2.bf16.xpose.msra.mxu0 0
        %1533 = vmatprep.mubr.bf16.mxu0 0
        %1534 = vmatmul.mubr.bf16.gmra.mxu0 %v1496
        %v1535 = vpop.f32.mrf.mxu0
        %v1536 = vadd.f32 %v1484, %v1535
        %v1537 = vpop.f32.mrf.mxu0
        %v1538 = vpop.f32.mrf.mxu0
        %v1539 = vpop.f32.mrf.mxu0
        %1540 = vdwg.mxu0
        %v1541 = vsel %vm815, %v1536, -inf
        %1542 = vmax.xlane.f32.xlu0 %v1541
        %v1543 = vpop.xlane.xlu0 %1542
        %v1544 = vsub.f32 %v1536, %v1543
        %v1545 = vmul.f32 %v1544, 1.442695
        %v1546 = vpow.pop %v1545
        %v1547 = vsel %vm815, %v1546, 0.0
        %1548 = vadd.xlane.f32.xlu0 %v1547
        %v1549 = vpop.xlane.xlu0 %1548
        %v1550 = vrcp.pop %v1549
        %v1551 = vmul.f32 %v1546, %v1550
        %v1552 = vpack.c.bf16 %v1551, %v1551
        %1554 = vrot.lane.b32.xlu0 %v1494, 96
        %v1555 = vpop.permute.xlu0 %1554
        %v1557 = vsel %vm815, %v1552, 0
        %v1560 = vsel %vm879, %v1555, 0
        %1562 = vmatprep.subr.bf16.mxu0 0
        %1563 = vmatpush1.bf16.msra.mxu0 0
        %1564 = vmatprep.subr.bf16.mxu0 0
        %1565 = vmatpush1.bf16.msra.mxu0 0
        %1566 = vmatprep.subr.bf16.mxu0 0
        %1567 = vmatpush1.bf16.msra.mxu0 0
        %1568 = vmatprep.subr.bf16.mxu0 0
        %1569 = vmatpush1.bf16.msra.mxu0 0
        %1570 = vmatprep.subr.bf16.mxu0 0
        %1571 = vmatpush1.bf16.msra.mxu0 0
        %1572 = vmatprep.subr.bf16.mxu0 0
        %1573 = vmatpush1.bf16.msra.mxu0 0
        %1574 = vmatprep.subr.bf16.mxu0 0
        %1575 = vmatpush1.bf16.msra.mxu0 0
        %1576 = vmatprep.subr.bf16.mxu0 0
        %1577 = vmatpush1.bf16.msra.mxu0 %v1560
        %1578 = vmatprep.subr.bf16.mxu0 0
        %1579 = vmatpush2.bf16.msra.mxu0 0
        %1580 = vmatprep.subr.bf16.mxu0 0
        %1581 = vmatpush2.bf16.msra.mxu0 0
        %1582 = vmatprep.subr.bf16.mxu0 0
        %1583 = vmatpush2.bf16.msra.mxu0 0
        %1584 = vmatprep.subr.bf16.mxu0 0
        %1585 = vmatpush2.bf16.msra.mxu0 0
        %1586 = vmatprep.subr.bf16.mxu0 0
        %1587 = vmatpush2.bf16.msra.mxu0 0
        %1588 = vmatprep.subr.bf16.mxu0 0
        %1589 = vmatpush2.bf16.msra.mxu0 0
        %1590 = vmatprep.subr.bf16.mxu0 0
        %1591 = vmatpush2.bf16.msra.mxu0 0
        %1592 = vmatprep.subr.bf16.mxu0 0
        %1593 = vmatpush2.bf16.msra.mxu0 0
        %1594 = vmatprep.mubr.bf16.mxu0 0
        %1595 = vmatmul.mubr.bf16.gmra.mxu0 %v1557
        %v1596 = vpop.f32.mrf.mxu0
        %v1597 = vadd.f32 0.0, %v1596
        %v1598 = vpop.f32.mrf.mxu0
        %v1599 = vpop.f32.mrf.mxu0
        %v1600 = vpop.f32.mrf.mxu0
        %1601 = vdwg.mxu0
        %1602 = vst.msk [vmem:[#allocation2] sm:$0xff] %vm815, %v1597
        %1604 = vrot.lane.b32.xlu0 %v1493, 120
        %v1605 = vpop.permute.xlu0 %1604
        %1606 = vrot.lane.b32.xlu0 %v1494, 120
        %v1607 = vpop.permute.xlu0 %1606
        %v1609 = vsel %vm815, %v1605, 0
        %v1612 = vsel %vm815, %v1607, 0
        %1614 = vmatprep.subr.bf16.mxu0 0
        %1615 = vmatpush1.bf16.xpose.msra.mxu0 0
        %1616 = vmatprep.subr.bf16.mxu0 0
        %1617 = vmatpush1.bf16.xpose.msra.mxu0 0
        %1618 = vmatprep.subr.bf16.mxu0 0
        %1619 = vmatpush1.bf16.xpose.msra.mxu0 0
        %1620 = vmatprep.subr.bf16.mxu0 0
        %1621 = vmatpush1.bf16.xpose.msra.mxu0 0
        %1622 = vmatprep.subr.bf16.mxu0 0
        %1623 = vmatpush1.bf16.xpose.msra.mxu0 0
        %1624 = vmatprep.subr.bf16.mxu0 0
        %1625 = vmatpush1.bf16.xpose.msra.mxu0 0
        %1626 = vmatprep.subr.bf16.mxu0 0
        %1627 = vmatpush1.bf16.xpose.msra.mxu0 0
        %1628 = vmatprep.subr.bf16.mxu0 0
        %1629 = vmatpush1.bf16.xpose.msra.mxu0 %v1612
        %1630 = vmatprep.subr.bf16.mxu0 0
        %1631 = vmatpush2.bf16.xpose.msra.mxu0 0
        %1632 = vmatprep.subr.bf16.mxu0 0
        %1633 = vmatpush2.bf16.xpose.msra.mxu0 0
        %1634 = vmatprep.subr.bf16.mxu0 0
        %1635 = vmatpush2.bf16.xpose.msra.mxu0 0
        %1636 = vmatprep.subr.bf16.mxu0 0
        %1637 = vmatpush2.bf16.xpose.msra.mxu0 0
        %1638 = vmatprep.subr.bf16.mxu0 0
        %1639 = vmatpush2.bf16.xpose.msra.mxu0 0
        %1640 = vmatprep.subr.bf16.mxu0 0
        %1641 = vmatpush2.bf16.xpose.msra.mxu0 0
        %1642 = vmatprep.subr.bf16.mxu0 0
        %1643 = vmatpush2.bf16.xpose.msra.mxu0 0
        %1644 = vmatprep.subr.bf16.mxu0 0
        %1645 = vmatpush2.bf16.xpose.msra.mxu0 0
        %1646 = vmatprep.mubr.bf16.mxu0 0
        %1647 = vmatmul.mubr.bf16.gmra.mxu0 %v1609
        %v1648 = vpop.f32.mrf.mxu0
        %v1649 = vadd.f32 %v1484, %v1648
        %v1650 = vpop.f32.mrf.mxu0
        %v1651 = vpop.f32.mrf.mxu0
        %v1652 = vpop.f32.mrf.mxu0
        %1653 = vdwg.mxu0
        %v1654 = vsel %vm815, %v1649, -inf
        %1655 = vmax.xlane.f32.xlu0 %v1654
        %v1656 = vpop.xlane.xlu0 %1655
        %v1657 = vsub.f32 %v1649, %v1656
        %v1658 = vmul.f32 %v1657, 1.442695
        %v1659 = vpow.pop %v1658
        %v1660 = vsel %vm815, %v1659, 0.0
        %1661 = vadd.xlane.f32.xlu0 %v1660
        %v1662 = vpop.xlane.xlu0 %1661
        %v1663 = vrcp.pop %v1662
        %v1664 = vmul.f32 %v1659, %v1663
        %v1665 = vpack.c.bf16 %v1664, %v1664
        %1666 = vrot.lane.b32.xlu0 %v1494, 88
        %v1667 = vpop.permute.xlu0 %1666
        %v1669 = vsel %vm815, %v1665, 0
        %v1672 = vsel %vm879, %v1667, 0
        %1674 = vmatprep.subr.bf16.mxu0 0
        %1675 = vmatpush1.bf16.msra.mxu0 0
        %1676 = vmatprep.subr.bf16.mxu0 0
        %1677 = vmatpush1.bf16.msra.mxu0 0
        %1678 = vmatprep.subr.bf16.mxu0 0
        %1679 = vmatpush1.bf16.msra.mxu0 0
        %1680 = vmatprep.subr.bf16.mxu0 0
        %1681 = vmatpush1.bf16.msra.mxu0 0
        %1682 = vmatprep.subr.bf16.mxu0 0
        %1683 = vmatpush1.bf16.msra.mxu0 0
        %1684 = vmatprep.subr.bf16.mxu0 0
        %1685 = vmatpush1.bf16.msra.mxu0 0
        %1686 = vmatprep.subr.bf16.mxu0 0
        %1687 = vmatpush1.bf16.msra.mxu0 0
        %1688 = vmatprep.subr.bf16.mxu0 0
        %1689 = vmatpush1.bf16.msra.mxu0 %v1672
        %1690 = vmatprep.subr.bf16.mxu0 0
        %1691 = vmatpush2.bf16.msra.mxu0 0
        %1692 = vmatprep.subr.bf16.mxu0 0
        %1693 = vmatpush2.bf16.msra.mxu0 0
        %1694 = vmatprep.subr.bf16.mxu0 0
        %1695 = vmatpush2.bf16.msra.mxu0 0
        %1696 = vmatprep.subr.bf16.mxu0 0
        %1697 = vmatpush2.bf16.msra.mxu0 0
        %1698 = vmatprep.subr.bf16.mxu0 0
        %1699 = vmatpush2.bf16.msra.mxu0 0
        %1700 = vmatprep.subr.bf16.mxu0 0
        %1701 = vmatpush2.bf16.msra.mxu0 0
        %1702 = vmatprep.subr.bf16.mxu0 0
        %1703 = vmatpush2.bf16.msra.mxu0 0
        %1704 = vmatprep.subr.bf16.mxu0 0
        %1705 = vmatpush2.bf16.msra.mxu0 0
        %1706 = vmatprep.mubr.bf16.mxu0 0
        %1707 = vmatmul.mubr.bf16.gmra.mxu0 %v1669
        %v1708 = vpop.f32.mrf.mxu0
        %v1709 = vadd.f32 0.0, %v1708
        %v1710 = vpop.f32.mrf.mxu0
        %v1711 = vpop.f32.mrf.mxu0
        %v1712 = vpop.f32.mrf.mxu0
        %1713 = vdwg.mxu0
        %1715 = vrot.lane.b32.xlu0 %v1709, 8
        %v1716 = vpop.permute.xlu0 %1715
        %1718 = vst.msk [vmem:[#allocation2] sm:$0xff] %vm1039, %v1716
        %1719 = vrot.lane.b32.xlu0 %v1493, 112
        %v1720 = vpop.permute.xlu0 %1719
        %1721 = vrot.lane.b32.xlu0 %v1494, 112
        %v1722 = vpop.permute.xlu0 %1721
        %v1724 = vsel %vm815, %v1720, 0
        %v1727 = vsel %vm815, %v1722, 0
        %1729 = vmatprep.subr.bf16.mxu0 0
        %1730 = vmatpush1.bf16.xpose.msra.mxu0 0
        %1731 = vmatprep.subr.bf16.mxu0 0
        %1732 = vmatpush1.bf16.xpose.msra.mxu0 0
        %1733 = vmatprep.subr.bf16.mxu0 0
        %1734 = vmatpush1.bf16.xpose.msra.mxu0 0
        %1735 = vmatprep.subr.bf16.mxu0 0
        %1736 = vmatpush1.bf16.xpose.msra.mxu0 0
        %1737 = vmatprep.subr.bf16.mxu0 0
        %1738 = vmatpush1.bf16.xpose.msra.mxu0 0
        %1739 = vmatprep.subr.bf16.mxu0 0
        %1740 = vmatpush1.bf16.xpose.msra.mxu0 0
        %1741 = vmatprep.subr.bf16.mxu0 0
        %1742 = vmatpush1.bf16.xpose.msra.mxu0 0
        %1743 = vmatprep.subr.bf16.mxu0 0
        %1744 = vmatpush1.bf16.xpose.msra.mxu0 %v1727
        %1745 = vmatprep.subr.bf16.mxu0 0
        %1746 = vmatpush2.bf16.xpose.msra.mxu0 0
        %1747 = vmatprep.subr.bf16.mxu0 0
        %1748 = vmatpush2.bf16.xpose.msra.mxu0 0
        %1749 = vmatprep.subr.bf16.mxu0 0
        %1750 = vmatpush2.bf16.xpose.msra.mxu0 0
        %1751 = vmatprep.subr.bf16.mxu0 0
        %1752 = vmatpush2.bf16.xpose.msra.mxu0 0
        %1753 = vmatprep.subr.bf16.mxu0 0
        %1754 = vmatpush2.bf16.xpose.msra.mxu0 0
        %1755 = vmatprep.subr.bf16.mxu0 0
        %1756 = vmatpush2.bf16.xpose.msra.mxu0 0
        %1757 = vmatprep.subr.bf16.mxu0 0
        %1758 = vmatpush2.bf16.xpose.msra.mxu0 0
        %1759 = vmatprep.subr.bf16.mxu0 0
        %1760 = vmatpush2.bf16.xpose.msra.mxu0 0
        %1761 = vmatprep.mubr.bf16.mxu0 0
        %1762 = vmatmul.mubr.bf16.gmra.mxu0 %v1724
        %v1763 = vpop.f32.mrf.mxu0
        %v1764 = vadd.f32 %v1484, %v1763
        %v1765 = vpop.f32.mrf.mxu0
        %v1766 = vpop.f32.mrf.mxu0
        %v1767 = vpop.f32.mrf.mxu0
        %1768 = vdwg.mxu0
        %v1769 = vsel %vm815, %v1764, -inf
        %1770 = vmax.xlane.f32.xlu0 %v1769
        %v1771 = vpop.xlane.xlu0 %1770
        %v1772 = vsub.f32 %v1764, %v1771
        %v1773 = vmul.f32 %v1772, 1.442695
        %v1774 = vpow.pop %v1773
        %v1775 = vsel %vm815, %v1774, 0.0
        %1776 = vadd.xlane.f32.xlu0 %v1775
        %v1777 = vpop.xlane.xlu0 %1776
        %v1778 = vrcp.pop %v1777
        %v1779 = vmul.f32 %v1774, %v1778
        %v1780 = vpack.c.bf16 %v1779, %v1779
        %1781 = vrot.lane.b32.xlu0 %v1494, 80
        %v1782 = vpop.permute.xlu0 %1781
        %v1784 = vsel %vm815, %v1780, 0
        %v1787 = vsel %vm879, %v1782, 0
        %1789 = vmatprep.subr.bf16.mxu0 0
        %1790 = vmatpush1.bf16.msra.mxu0 0
        %1791 = vmatprep.subr.bf16.mxu0 0
        %1792 = vmatpush1.bf16.msra.mxu0 0
        %1793 = vmatprep.subr.bf16.mxu0 0
        %1794 = vmatpush1.bf16.msra.mxu0 0
        %1795 = vmatprep.subr.bf16.mxu0 0
        %1796 = vmatpush1.bf16.msra.mxu0 0
        %1797 = vmatprep.subr.bf16.mxu0 0
        %1798 = vmatpush1.bf16.msra.mxu0 0
        %1799 = vmatprep.subr.bf16.mxu0 0
        %1800 = vmatpush1.bf16.msra.mxu0 0
        %1801 = vmatprep.subr.bf16.mxu0 0
        %1802 = vmatpush1.bf16.msra.mxu0 0
        %1803 = vmatprep.subr.bf16.mxu0 0
        %1804 = vmatpush1.bf16.msra.mxu0 %v1787
        %1805 = vmatprep.subr.bf16.mxu0 0
        %1806 = vmatpush2.bf16.msra.mxu0 0
        %1807 = vmatprep.subr.bf16.mxu0 0
        %1808 = vmatpush2.bf16.msra.mxu0 0
        %1809 = vmatprep.subr.bf16.mxu0 0
        %1810 = vmatpush2.bf16.msra.mxu0 0
        %1811 = vmatprep.subr.bf16.mxu0 0
        %1812 = vmatpush2.bf16.msra.mxu0 0
        %1813 = vmatprep.subr.bf16.mxu0 0
        %1814 = vmatpush2.bf16.msra.mxu0 0
        %1815 = vmatprep.subr.bf16.mxu0 0
        %1816 = vmatpush2.bf16.msra.mxu0 0
        %1817 = vmatprep.subr.bf16.mxu0 0
        %1818 = vmatpush2.bf16.msra.mxu0 0
        %1819 = vmatprep.subr.bf16.mxu0 0
        %1820 = vmatpush2.bf16.msra.mxu0 0
        %1821 = vmatprep.mubr.bf16.mxu0 0
        %1822 = vmatmul.mubr.bf16.gmra.mxu0 %v1784
        %v1823 = vpop.f32.mrf.mxu0
        %v1824 = vadd.f32 0.0, %v1823
        %v1825 = vpop.f32.mrf.mxu0
        %v1826 = vpop.f32.mrf.mxu0
        %v1827 = vpop.f32.mrf.mxu0
        %1828 = vdwg.mxu0
        %1830 = vrot.lane.b32.xlu0 %v1824, 16
        %v1831 = vpop.permute.xlu0 %1830
        %1833 = vst.msk [vmem:[#allocation2] sm:$0xff] %vm1155, %v1831
        %1834 = vrot.lane.b32.xlu0 %v1493, 104
        %v1835 = vpop.permute.xlu0 %1834
        %1836 = vrot.lane.b32.xlu0 %v1494, 104
        %v1837 = vpop.permute.xlu0 %1836
        %v1839 = vsel %vm815, %v1835, 0
        %v1842 = vsel %vm815, %v1837, 0
        %1844 = vmatprep.subr.bf16.mxu0 0
        %1845 = vmatpush1.bf16.xpose.msra.mxu0 0
        %1846 = vmatprep.subr.bf16.mxu0 0
        %1847 = vmatpush1.bf16.xpose.msra.mxu0 0
        %1848 = vmatprep.subr.bf16.mxu0 0
        %1849 = vmatpush1.bf16.xpose.msra.mxu0 0
        %1850 = vmatprep.subr.bf16.mxu0 0
        %1851 = vmatpush1.bf16.xpose.msra.mxu0 0
        %1852 = vmatprep.subr.bf16.mxu0 0
        %1853 = vmatpush1.bf16.xpose.msra.mxu0 0
        %1854 = vmatprep.subr.bf16.mxu0 0
        %1855 = vmatpush1.bf16.xpose.msra.mxu0 0
        %1856 = vmatprep.subr.bf16.mxu0 0
        %1857 = vmatpush1.bf16.xpose.msra.mxu0 0
        %1858 = vmatprep.subr.bf16.mxu0 0
        %1859 = vmatpush1.bf16.xpose.msra.mxu0 %v1842
        %1860 = vmatprep.subr.bf16.mxu0 0
        %1861 = vmatpush2.bf16.xpose.msra.mxu0 0
        %1862 = vmatprep.subr.bf16.mxu0 0
        %1863 = vmatpush2.bf16.xpose.msra.mxu0 0
        %1864 = vmatprep.subr.bf16.mxu0 0
        %1865 = vmatpush2.bf16.xpose.msra.mxu0 0
        %1866 = vmatprep.subr.bf16.mxu0 0
        %1867 = vmatpush2.bf16.xpose.msra.mxu0 0
        %1868 = vmatprep.subr.bf16.mxu0 0
        %1869 = vmatpush2.bf16.xpose.msra.mxu0 0
        %1870 = vmatprep.subr.bf16.mxu0 0
        %1871 = vmatpush2.bf16.xpose.msra.mxu0 0
        %1872 = vmatprep.subr.bf16.mxu0 0
        %1873 = vmatpush2.bf16.xpose.msra.mxu0 0
        %1874 = vmatprep.subr.bf16.mxu0 0
        %1875 = vmatpush2.bf16.xpose.msra.mxu0 0
        %1876 = vmatprep.mubr.bf16.mxu0 0
        %1877 = vmatmul.mubr.bf16.gmra.mxu0 %v1839
        %v1878 = vpop.f32.mrf.mxu0
        %v1879 = vadd.f32 %v1484, %v1878
        %v1880 = vpop.f32.mrf.mxu0
        %v1881 = vpop.f32.mrf.mxu0
        %v1882 = vpop.f32.mrf.mxu0
        %1883 = vdwg.mxu0
        %v1884 = vsel %vm815, %v1879, -inf
        %1885 = vmax.xlane.f32.xlu0 %v1884
        %v1886 = vpop.xlane.xlu0 %1885
        %v1887 = vsub.f32 %v1879, %v1886
        %v1888 = vmul.f32 %v1887, 1.442695
        %v1889 = vpow.pop %v1888
        %v1890 = vsel %vm815, %v1889, 0.0
        %1891 = vadd.xlane.f32.xlu0 %v1890
        %v1892 = vpop.xlane.xlu0 %1891
        %v1893 = vrcp.pop %v1892
        %v1894 = vmul.f32 %v1889, %v1893
        %v1895 = vpack.c.bf16 %v1894, %v1894
        %1896 = vrot.lane.b32.xlu0 %v1494, 72
        %v1897 = vpop.permute.xlu0 %1896
        %v1899 = vsel %vm815, %v1895, 0
        %v1902 = vsel %vm879, %v1897, 0
        %1904 = vmatprep.subr.bf16.mxu0 0
        %1905 = vmatpush1.bf16.msra.mxu0 0
        %1906 = vmatprep.subr.bf16.mxu0 0
        %1907 = vmatpush1.bf16.msra.mxu0 0
        %1908 = vmatprep.subr.bf16.mxu0 0
        %1909 = vmatpush1.bf16.msra.mxu0 0
        %1910 = vmatprep.subr.bf16.mxu0 0
        %1911 = vmatpush1.bf16.msra.mxu0 0
        %1912 = vmatprep.subr.bf16.mxu0 0
        %1913 = vmatpush1.bf16.msra.mxu0 0
        %1914 = vmatprep.subr.bf16.mxu0 0
        %1915 = vmatpush1.bf16.msra.mxu0 0
        %1916 = vmatprep.subr.bf16.mxu0 0
        %1917 = vmatpush1.bf16.msra.mxu0 0
        %1918 = vmatprep.subr.bf16.mxu0 0
        %1919 = vmatpush1.bf16.msra.mxu0 %v1902
        %1920 = vmatprep.subr.bf16.mxu0 0
        %1921 = vmatpush2.bf16.msra.mxu0 0
        %1922 = vmatprep.subr.bf16.mxu0 0
        %1923 = vmatpush2.bf16.msra.mxu0 0
        %1924 = vmatprep.subr.bf16.mxu0 0
        %1925 = vmatpush2.bf16.msra.mxu0 0
        %1926 = vmatprep.subr.bf16.mxu0 0
        %1927 = vmatpush2.bf16.msra.mxu0 0
        %1928 = vmatprep.subr.bf16.mxu0 0
        %1929 = vmatpush2.bf16.msra.mxu0 0
        %1930 = vmatprep.subr.bf16.mxu0 0
        %1931 = vmatpush2.bf16.msra.mxu0 0
        %1932 = vmatprep.subr.bf16.mxu0 0
        %1933 = vmatpush2.bf16.msra.mxu0 0
        %1934 = vmatprep.subr.bf16.mxu0 0
        %1935 = vmatpush2.bf16.msra.mxu0 0
        %1936 = vmatprep.mubr.bf16.mxu0 0
        %1937 = vmatmul.mubr.bf16.gmra.mxu0 %v1899
        %v1938 = vpop.f32.mrf.mxu0
        %v1939 = vadd.f32 0.0, %v1938
        %v1940 = vpop.f32.mrf.mxu0
        %v1941 = vpop.f32.mrf.mxu0
        %v1942 = vpop.f32.mrf.mxu0
        %1943 = vdwg.mxu0
        %1945 = vrot.lane.b32.xlu0 %v1939, 24
        %v1946 = vpop.permute.xlu0 %1945
        %1948 = vst.msk [vmem:[#allocation2] sm:$0xff] %vm1271, %v1946
        %v1949 = vld [vmem:[#allocation2] sm:$0xff]
        %v1950 = vpack.c.bf16 %v1949, %v1949
        %v1952 = vlaneseq
        %v1953 = vshrl.u32 %v1952, 7
        %v1954 = vsub.s32 0, %v1953
        %v1955 = vrot.slane %v1489, %v1954
        %v1961 = vunpack.c.l.b16 %v1485
        %v1962 = vunpack.c.l.b16 %v1486
        %v1963 = vunpack.c.l.b16 %v1487
        %v1964 = vunpack.c.l.b16 %v1488
        %v1965 = vpack.c.b16 %v1962, %v1961
        %v1966 = vpack.c.b16 %v1964, %v1963
        %v1970 = vsel %vm757, %v1950, 0
        %1972 = vmatprep.subr.bf16.mxu0 0
        %1973 = vmatpush1.bf16.msra.mxu0 0
        %1974 = vmatprep.subr.bf16.mxu0 0
        %1975 = vmatpush1.bf16.msra.mxu0 0
        %1976 = vmatprep.subr.bf16.mxu0 0
        %1977 = vmatpush1.bf16.msra.mxu0 0
        %1978 = vmatprep.subr.bf16.mxu0 0
        %1979 = vmatpush1.bf16.msra.mxu0 0
        %1980 = vmatprep.subr.bf16.mxu0 0
        %1981 = vmatpush1.bf16.msra.mxu0 0
        %1982 = vmatprep.subr.bf16.mxu0 0
        %1983 = vmatpush1.bf16.msra.mxu0 0
        %1984 = vmatprep.subr.bf16.mxu0 0
        %1985 = vmatpush1.bf16.msra.mxu0 %v1966
        %1986 = vmatprep.subr.bf16.mxu0 0
        %1987 = vmatpush1.bf16.msra.mxu0 %v1965
        %1988 = vmatprep.subr.bf16.mxu0 0
        %1989 = vmatpush2.bf16.msra.mxu0 0
        %1990 = vmatprep.subr.bf16.mxu0 0
        %1991 = vmatpush2.bf16.msra.mxu0 0
        %1992 = vmatprep.subr.bf16.mxu0 0
        %1993 = vmatpush2.bf16.msra.mxu0 0
        %1994 = vmatprep.subr.bf16.mxu0 0
        %1995 = vmatpush2.bf16.msra.mxu0 0
        %1996 = vmatprep.subr.bf16.mxu0 0
        %1997 = vmatpush2.bf16.msra.mxu0 0
        %1998 = vmatprep.subr.bf16.mxu0 0
        %1999 = vmatpush2.bf16.msra.mxu0 0
        %2000 = vmatprep.subr.bf16.mxu0 0
        %2001 = vmatpush2.bf16.msra.mxu0 0
        %2002 = vmatprep.subr.bf16.mxu0 0
        %2003 = vmatpush2.bf16.msra.mxu0 0
        %2004 = vmatprep.mubr.bf16.mxu0 0
        %2005 = vmatmul.mubr.bf16.gmra.mxu0 %v1970
        %v2006 = vpop.f32.mrf.mxu0
        %v2007 = vadd.f32 %v1955, %v2006
        %v2008 = vpop.f32.mrf.mxu0
        %v2009 = vpop.f32.mrf.mxu0
        %v2010 = vpop.f32.mrf.mxu0
        %2011 = vdwg.mxu0
        %v2012 = vadd.f32 %v2007, %v1364
        %v2013 = vsel %vm757, %v2012, 0.0
        %2014 = vadd.xlane.f32.xlu0 %v2013
        %v2015 = vpop.xlane.xlu0 %2014
        %v2016 = vmul.f32 %v2015, %v1340
        %v2017 = vsub.f32 %v2012, %v2016
        %v2018 = vmul.f32 %v2017, %v2017
        %v2019 = vsel %vm757, %v2018, 0.0
        %2020 = vadd.xlane.f32.xlu0 %v2019
        %v2021 = vpop.xlane.xlu0 %2020
        %v2022 = vmul.f32 %v2021, %v1340
        %v2023 = vadd.f32 %v2022, 1e-05
        %v2024 = vrsqrt.pop %v2023
        %v2025 = vmul.f32 %v2017, %v2024
        %v2027 = vlaneseq
        %v2028 = vshrl.u32 %v2027, 7
        %v2029 = vsub.s32 0, %v2028
        %v2030 = vrot.slane %v1490, %v2029
        %v2032 = vmul.f32 %v2025, %v2030
        %v2034 = vlaneseq
        %v2035 = vshrl.u32 %v2034, 7
        %v2036 = vsub.s32 0, %v2035
        %v2037 = vrot.slane %v1491, %v2036
        %v2039 = vadd.f32 %v2032, %v2037
        %v2040 = vpack.c.bf16 %v2039, %v2039
        %v2041 = vld [vmem:[%s16] sm:$0xf]
        %v2042 = vld [vmem:[%s16 + $0x4] sm:$0xf]
        %v2043 = vld [vmem:[%s16 + $0x8] sm:$0xf]
        %v2044 = vld [vmem:[%s16 + $0xc] sm:$0xf]
        %v2045 = vld [vmem:[%s17] sm:$0x1]
        %v2047 = vlaneseq
        %v2048 = vshrl.u32 %v2047, 7
        %v2049 = vsub.s32 0, %v2048
        %v2050 = vrot.slane %v2045, %v2049
        %v2056 = vunpack.c.l.b16 %v2041
        %v2057 = vunpack.c.l.b16 %v2042
        %v2058 = vunpack.c.l.b16 %v2043
        %v2059 = vunpack.c.l.b16 %v2044
        %v2060 = vpack.c.b16 %v2057, %v2056
        %v2061 = vpack.c.b16 %v2059, %v2058
        %v2065 = vsel %vm757, %v2040, 0
        %2067 = vmatprep.subr.bf16.mxu0 0
        %2068 = vmatpush1.bf16.msra.mxu0 0
        %2069 = vmatprep.subr.bf16.mxu0 0
        %2070 = vmatpush1.bf16.msra.mxu0 0
        %2071 = vmatprep.subr.bf16.mxu0 0
        %2072 = vmatpush1.bf16.msra.mxu0 0
        %2073 = vmatprep.subr.bf16.mxu0 0
        %2074 = vmatpush1.bf16.msra.mxu0 0
        %2075 = vmatprep.subr.bf16.mxu0 0
        %2076 = vmatpush1.bf16.msra.mxu0 0
        %2077 = vmatprep.subr.bf16.mxu0 0
        %2078 = vmatpush1.bf16.msra.mxu0 0
        %2079 = vmatprep.subr.bf16.mxu0 0
        %2080 = vmatpush1.bf16.msra.mxu0 %v2061
        %2081 = vmatprep.subr.bf16.mxu0 0
        %2082 = vmatpush1.bf16.msra.mxu0 %v2060
        %2083 = vmatprep.subr.bf16.mxu0 0
        %2084 = vmatpush2.bf16.msra.mxu0 0
        %2085 = vmatprep.subr.bf16.mxu0 0
        %2086 = vmatpush2.bf16.msra.mxu0 0
        %2087 = vmatprep.subr.bf16.mxu0 0
        %2088 = vmatpush2.bf16.msra.mxu0 0
        %2089 = vmatprep.subr.bf16.mxu0 0
        %2090 = vmatpush2.bf16.msra.mxu0 0
        %2091 = vmatprep.subr.bf16.mxu0 0
        %2092 = vmatpush2.bf16.msra.mxu0 0
        %2093 = vmatprep.subr.bf16.mxu0 0
        %2094 = vmatpush2.bf16.msra.mxu0 0
        %2095 = vmatprep.subr.bf16.mxu0 0
        %2096 = vmatpush2.bf16.msra.mxu0 0
        %2097 = vmatprep.subr.bf16.mxu0 0
        %2098 = vmatpush2.bf16.msra.mxu0 0
        %2099 = vmatprep.mubr.bf16.mxu0 0
        %2100 = vmatmul.mubr.bf16.gmra.mxu0 %v2065
        %v2101 = vpop.f32.mrf.mxu0
        %v2102 = vadd.f32 %v2050, %v2101
        %v2103 = vpop.f32.mrf.mxu0
        %v2104 = vpop.f32.mrf.mxu0
        %v2105 = vpop.f32.mrf.mxu0
        %2106 = vdwg.mxu0
        %v2107 = vmax.f32 %v2102, 0.0
        %v2108 = vpack.c.bf16 %v2107, %v2107
        %v2109 = vld [vmem:[%s18] sm:$0xf]
        %v2110 = vld [vmem:[%s18 + $0x4] sm:$0xf]
        %v2111 = vld [vmem:[%s18 + $0x8] sm:$0xf]
        %v2112 = vld [vmem:[%s18 + $0xc] sm:$0xf]
        %v2113 = vld [vmem:[%s18 + $0x10] sm:$0xf]
        %v2114 = vld [vmem:[%s18 + $0x14] sm:$0xf]
        %v2115 = vld [vmem:[%s18 + $0x18] sm:$0xf]
        %v2116 = vld [vmem:[%s18 + $0x1c] sm:$0xf]
        %v2117 = vld [vmem:[%s19] sm:$0x1]
        %v2119 = vlaneseq
        %v2120 = vshrl.u32 %v2119, 7
        %v2121 = vsub.s32 0, %v2120
        %v2122 = vrot.slane %v2117, %v2121
        %v2132 = vunpack.c.l.b16 %v2109
        %v2133 = vunpack.c.l.b16 %v2110
        %v2134 = vunpack.c.l.b16 %v2111
        %v2135 = vunpack.c.l.b16 %v2112
        %v2136 = vunpack.c.l.b16 %v2113
        %v2137 = vunpack.c.l.b16 %v2114
        %v2138 = vunpack.c.l.b16 %v2115
        %v2139 = vunpack.c.l.b16 %v2116
        %v2140 = vpack.c.b16 %v2133, %v2132
        %v2141 = vpack.c.b16 %v2135, %v2134
        %v2142 = vpack.c.b16 %v2137, %v2136
        %v2143 = vpack.c.b16 %v2139, %v2138
        %vm2148 = vcmask 523264
        %v2150 = vsel %vm2148, %v2108, 0
        %2152 = vmatprep.subr.bf16.mxu0 0
        %2153 = vmatpush1.bf16.msra.mxu0 0
        %2154 = vmatprep.subr.bf16.mxu0 0
        %2155 = vmatpush1.bf16.msra.mxu0 0
        %2156 = vmatprep.subr.bf16.mxu0 0
        %2157 = vmatpush1.bf16.msra.mxu0 0
        %2158 = vmatprep.subr.bf16.mxu0 0
        %2159 = vmatpush1.bf16.msra.mxu0 0
        %2160 = vmatprep.subr.bf16.mxu0 0
        %2161 = vmatpush1.bf16.msra.mxu0 %v2143
        %2162 = vmatprep.subr.bf16.mxu0 0
        %2163 = vmatpush1.bf16.msra.mxu0 %v2142
        %2164 = vmatprep.subr.bf16.mxu0 0
        %2165 = vmatpush1.bf16.msra.mxu0 %v2141
        %2166 = vmatprep.subr.bf16.mxu0 0
        %2167 = vmatpush1.bf16.msra.mxu0 %v2140
        %2168 = vmatprep.subr.bf16.mxu0 0
        %2169 = vmatpush2.bf16.msra.mxu0 0
        %2170 = vmatprep.subr.bf16.mxu0 0
        %2171 = vmatpush2.bf16.msra.mxu0 0
        %2172 = vmatprep.subr.bf16.mxu0 0
        %2173 = vmatpush2.bf16.msra.mxu0 0
        %2174 = vmatprep.subr.bf16.mxu0 0
        %2175 = vmatpush2.bf16.msra.mxu0 0
        %2176 = vmatprep.subr.bf16.mxu0 0
        %2177 = vmatpush2.bf16.msra.mxu0 0
        %2178 = vmatprep.subr.bf16.mxu0 0
        %2179 = vmatpush2.bf16.msra.mxu0 0
        %2180 = vmatprep.subr.bf16.mxu0 0
        %2181 = vmatpush2.bf16.msra.mxu0 0
        %2182 = vmatprep.subr.bf16.mxu0 0
        %2183 = vmatpush2.bf16.msra.mxu0 0
        %2184 = vmatprep.mubr.bf16.mxu0 0
        %2185 = vmatmul.mubr.bf16.gmra.mxu0 %v2150
        %v2186 = vpop.f32.mrf.mxu0
        %v2187 = vadd.f32 %v2122, %v2186
        %v2188 = vpop.f32.mrf.mxu0
        %v2189 = vpop.f32.mrf.mxu0
        %v2190 = vpop.f32.mrf.mxu0
        %2191 = vdwg.mxu0
        %v2192 = vadd.f32 %v2187, %v2039
        %v2193 = vld [vmem:[%s20] sm:$0x1]
        %v2194 = vld [vmem:[%s21] sm:$0x1]
        %v2195 = vsel %vm757, %v2192, 0.0
        %2196 = vadd.xlane.f32.xlu0 %v2195
        %v2197 = vpop.xlane.xlu0 %2196
        %v2198 = vmul.f32 %v2197, %v1340
        %v2199 = vsub.f32 %v2192, %v2198
        %v2200 = vmul.f32 %v2199, %v2199
        %v2201 = vsel %vm757, %v2200, 0.0
        %2202 = vadd.xlane.f32.xlu0 %v2201
        %v2203 = vpop.xlane.xlu0 %2202
        %v2204 = vmul.f32 %v2203, %v1340
        %v2205 = vadd.f32 %v2204, 1e-05
        %v2206 = vrsqrt.pop %v2205
        %v2207 = vmul.f32 %v2199, %v2206
        %v2209 = vlaneseq
        %v2210 = vshrl.u32 %v2209, 7
        %v2211 = vsub.s32 0, %v2210
        %v2212 = vrot.slane %v2193, %v2211
        %v2214 = vmul.f32 %v2207, %v2212
        %v2216 = vlaneseq
        %v2217 = vshrl.u32 %v2216, 7
        %v2218 = vsub.s32 0, %v2217
        %v2219 = vrot.slane %v2194, %v2218
        %v2221 = vadd.f32 %v2214, %v2219
        %2222 = vst.msk [vmem:[%s713] sm:$0xff] %vm757, %v2221
        %s2223 = sand.u32 %s526, 1
        %s2224 = scalar_lea.sflag [#allocation4], %s2223
        %s2225 = sand.u32 %s526, 1
        %s2226 = smul.addr %s2225, 8
        %s2227 = scalar_lea.vmem [#allocation3], %s2226
        // Predicated region
        $region109: #{decoder_forward.3} parent=107 // pred_check
          %p2228 = pneg %p536
        $region110: #{decoder_forward.3} parent=107 // pred_check_branch
          %2230 = sbr.rel (%p2228) target = $region112
        $region111: #{decoder_forward.3} parent=107 // pred_region
          %s2232 = ssub.s32 128, 128
          %2233 = vsyncadd %s2224, %s2232
          %s2234 = smul.addr %s36, 128
          %s2235 = scalar_lea.hbm %s22, %s2234
          %s2237 = sshll.u32 %s2227, 4
          %s2238 = int_to_ptr.vmem [resolvable:$true] %s2237
          %2240 = dma.vmem_to_hbm [thread:$0]  %s2238, 128, %s2235, %s2224
        $region112: #{decoder_forward.3} parent=107 // pred_fallthru
          _
      $region108: #{decoder_forward.3} parent=5 // pred_fallthru
        _
      %p2241 = scmp.le.s32.totalorder 2, %s31
      // Predicated region
      $region113: #{decoder_forward.3} parent=5 // pred_check
        %p2242 = pneg %p2241
      $region114: #{decoder_forward.3} parent=5 // pred_check_branch
        %2244 = sbr.rel (%p2242) target = $region116
      $region115: #{decoder_forward.3} parent=5 // pred_region
        %s2245 = ssub.s32 %s31, 2
        // Predicated region
        $region117: #{decoder_forward.3} parent=115 // pred_check
          %p2246 = pneg %p542
        $region118: #{decoder_forward.3} parent=115 // pred_check_branch
          %2248 = sbr.rel (%p2246) target = $region120
        $region119: #{decoder_forward.3} parent=115 // pred_region
          %s2249 = sand.u32 %s527, 1
          %s2250 = scalar_lea.sflag [#allocation4], %s2249
          %s2251 = sand.u32 %s527, 1
          %s2252 = smul.addr %s2251, 8
          %s2253 = scalar_lea.vmem [#allocation3], %s2252
          %2254 = dma.done %s2250, 128
        $region120: #{decoder_forward.3} parent=115 // pred_fallthru
          _
      $region116: #{decoder_forward.3} parent=5 // pred_fallthru
        _
    $region6: #{decoder_forward.3} parent=1 // loop_footer
      %s35 = sadd.s32 1, %s31
    $region7: #{decoder_forward.3} parent=1 // loop_footer_branch
      %30 = sbr.rel target = $region3
    $region8: #{decoder_forward.3} parent=1 // loop_exit
      _
    %2255 = vsyncpa [#allocation4], 1
    %s2256 = scalar_lea.sflag [#allocation4], 1
    %2257 = vsyncpa %s2256, 1

// kernel: decoder_forward.2
$region0: #{decoder_forward.2}
  #allocation0 [shape = 'u32[]', space=smem, size = 0x4, offset = 0x4, fixed_abs, tag = 'smem constant byte address 0x4 - core index']
  #allocation1 [shape = 'u32[144,128]{1,0:T(1,128)}', space=vmem, size = 0x12000, scoped, tag = 'internal scratch']
  #allocation2 [shape = 'f32[8,32]{1,0:T(8,128)}', space=vmem, size = 0x1000, scoped, tag = 'scratch operand']
  %s0 = inlined_call_operand.vmem [shape: f32[2,8,32], index: 0, kind: input, shape index: {}]
  %s1 = inlined_call_operand.vmem [shape: bf16[2,8,32], index: 1, kind: input, shape index: {}]
  %s2 = inlined_call_operand.vmem [shape: f32[2,8,8], index: 2, kind: input, shape index: {}]
  %s3 = inlined_call_operand.vmem [shape: f32[2,8,8], index: 3, kind: input, shape index: {}]
  %s4 = inlined_call_operand.vmem [shape: bf16[32,96], index: 4, kind: input, shape index: {}]
  %s5 = inlined_call_operand.vmem [shape: f32[1,96], index: 5, kind: input, shape index: {}]
  %s6 = inlined_call_operand.vmem [shape: bf16[32,32], index: 6, kind: input, shape index: {}]
  %s7 = inlined_call_operand.vmem [shape: f32[1,32], index: 7, kind: input, shape index: {}]
  %s8 = inlined_call_operand.vmem [shape: f32[1,32], index: 8, kind: input, shape index: {}]
  %s9 = inlined_call_operand.vmem [shape: f32[1,32], index: 9, kind: input, shape index: {}]
  %s10 = inlined_call_operand.vmem [shape: bf16[32,96], index: 10, kind: input, shape index: {}]
  %s11 = inlined_call_operand.vmem [shape: f32[1,96], index: 11, kind: input, shape index: {}]
  %s12 = inlined_call_operand.vmem [shape: bf16[32,32], index: 12, kind: input, shape index: {}]
  %s13 = inlined_call_operand.vmem [shape: f32[1,32], index: 13, kind: input, shape index: {}]
  %s14 = inlined_call_operand.vmem [shape: f32[1,32], index: 14, kind: input, shape index: {}]
  %s15 = inlined_call_operand.vmem [shape: f32[1,32], index: 15, kind: input, shape index: {}]
  %s16 = inlined_call_operand.vmem [shape: bf16[32,64], index: 16, kind: input, shape index: {}]
  %s17 = inlined_call_operand.vmem [shape: f32[1,64], index: 17, kind: input, shape index: {}]
  %s18 = inlined_call_operand.vmem [shape: bf16[64,32], index: 18, kind: input, shape index: {}]
  %s19 = inlined_call_operand.vmem [shape: f32[1,32], index: 19, kind: input, shape index: {}]
  %s20 = inlined_call_operand.vmem [shape: f32[1,32], index: 20, kind: input, shape index: {}]
  %s21 = inlined_call_operand.vmem [shape: f32[1,32], index: 21, kind: input, shape index: {}]
  %s22 = inlined_call_operand.vmem [shape: f32[2,8,32], index: 22, kind: output, shape index: {}]
  %s23 = sld [smem:[#allocation0]]
  $region121: #{decoder_forward.2} parent=0
    _
  %s25 = ssub.s32 1, %s23
  %s26 = scalar_select 0, %s25, %s23
  loop: start=0, step=1, limit=4
  $region2: #{decoder_forward.2} parent=0 // loop_pre_header
    _
  $region3: #{decoder_forward.2} parent=0 // loop_header
    %s28 = sphi 0, %s32
    %p29 = scmp.ge.s32.totalorder %s28, 4
    %s38 = sphi 0, %s40
    %s41 = sphi 0, %s38
    %s42 = sphi 0, %s41
    %s58 = sphi 0, %s42
    %s64 = sphi 0, %s66
    %s67 = sphi 0, %s64
    %s68 = sphi 0, %s67
    %s84 = sphi 0, %s68
    %s90 = sphi 0, %s92
    %s93 = sphi 0, %s90
    %s94 = sphi 0, %s93
    %s110 = sphi 0, %s94
    %s116 = sphi 0, %s118
    %s119 = sphi 0, %s116
    %s120 = sphi 0, %s119
    %s136 = sphi 0, %s120
    %s140 = sphi 0, %s140
    %s142 = sphi 0, %s140
    %s143 = sphi 0, %s142
    %s157 = sphi 0, %s143
    %s161 = sphi 0, %s161
    %s163 = sphi 0, %s161
    %s164 = sphi 0, %s163
    %s178 = sphi 0, %s164
    %s182 = sphi 0, %s182
    %s184 = sphi 0, %s182
    %s185 = sphi 0, %s184
    %s199 = sphi 0, %s185
    %s203 = sphi 0, %s203
    %s205 = sphi 0, %s203
    %s206 = sphi 0, %s205
    %s220 = sphi 0, %s206
    %s224 = sphi 0, %s224
    %s226 = sphi 0, %s224
    %s227 = sphi 0, %s226
    %s241 = sphi 0, %s227
    %s245 = sphi 0, %s245
    %s247 = sphi 0, %s245
    %s248 = sphi 0, %s247
    %s262 = sphi 0, %s248
    %s266 = sphi 0, %s266
    %s268 = sphi 0, %s266
    %s269 = sphi 0, %s268
    %s283 = sphi 0, %s269
    %s287 = sphi 0, %s287
    %s289 = sphi 0, %s287
    %s290 = sphi 0, %s289
    %s304 = sphi 0, %s290
    %s308 = sphi 0, %s308
    %s310 = sphi 0, %s308
    %s311 = sphi 0, %s310
    %s325 = sphi 0, %s311
    %s329 = sphi 0, %s329
    %s331 = sphi 0, %s329
    %s332 = sphi 0, %s331
    %s346 = sphi 0, %s332
    %s350 = sphi 0, %s350
    %s352 = sphi 0, %s350
    %s353 = sphi 0, %s352
    %s367 = sphi 0, %s353
    %s371 = sphi 0, %s371
    %s373 = sphi 0, %s371
    %s374 = sphi 0, %s373
    %s388 = sphi 0, %s374
    %s392 = sphi 0, %s392
    %s394 = sphi 0, %s392
    %s395 = sphi 0, %s394
    %s409 = sphi 0, %s395
    %s413 = sphi 0, %s413
    %s415 = sphi 0, %s413
    %s416 = sphi 0, %s415
    %s430 = sphi 0, %s416
    %s434 = sphi 0, %s434
    %s436 = sphi 0, %s434
    %s437 = sphi 0, %s436
    %s451 = sphi 0, %s437
    %s455 = sphi 0, %s455
    %s457 = sphi 0, %s455
    %s458 = sphi 0, %s457
    %s472 = sphi 0, %s458
    %s476 = sphi 0, %s476
    %s478 = sphi 0, %s476
    %s479 = sphi 0, %s478
    %s493 = sphi 0, %s479
    %s497 = sphi 0, %s497
    %s499 = sphi 0, %s497
    %s500 = sphi 0, %s499
    %s514 = sphi 0, %s500
    %s520 = sphi 0, %s522
    %s523 = sphi 0, %s520
    %s524 = sphi 0, %s523
    %s540 = sphi 0, %s524
  $region4: #{decoder_forward.2} parent=0 // loop_header_branch
    %31 = sbr.rel (%p29) target = $region8
  $region5: #{decoder_forward.2} parent=0 // loop_body
    %s33 = ssub.s32 %s28, 1
    %s34 = ssub.s32 %s28, 2
    %s35 = sadd.s32 %s28, 1
    %s36 = ssub.s32 %s28, %s35
    %p37 = scmp.eq.s32.totalorder %s36, 0
    %s39 = sadd.s32 %s38, 1
    %s40 = scalar_select %p37, %s38, %s39
    %p43 = pneg %p37
    %p44 = scmp.eq.s32.totalorder %s28, 1
    %p45 = por %p43, %p44
    %p46 = scmp.ne.s32.totalorder %s38, %s41
    %p47 = scmp.eq.s32.totalorder %s28, 0
    %p48 = por %p46, %p47
    %p49 = scmp.ne.s32.totalorder %s38, %s41
    %p50 = scmp.eq.s32.totalorder %s33, 1
    %p51 = por %p49, %p50
    %p52 = scmp.ne.s32.totalorder %s41, %s42
    %p53 = scmp.eq.s32.totalorder %s33, 0
    %p54 = por %p52, %p53
    %p55 = scmp.ne.s32.totalorder %s41, %s42
    %p56 = scmp.eq.s32.totalorder %s34, 1
    %p57 = por %p55, %p56
    %p59 = scmp.ne.s32.totalorder %s42, %s58
    %p60 = scmp.eq.s32.totalorder %s34, 0
    %p61 = por %p59, %p60
    %s62 = ssub.s32 %s28, %s35
    %p63 = scmp.eq.s32.totalorder %s62, 0
    %s65 = sadd.s32 %s64, 1
    %s66 = scalar_select %p63, %s64, %s65
    %p69 = pneg %p63
    %p70 = scmp.eq.s32.totalorder %s28, 1
    %p71 = por %p69, %p70
    %p72 = scmp.ne.s32.totalorder %s64, %s67
    %p73 = scmp.eq.s32.totalorder %s28, 0
    %p74 = por %p72, %p73
    %p75 = scmp.ne.s32.totalorder %s64, %s67
    %p76 = scmp.eq.s32.totalorder %s33, 1
    %p77 = por %p75, %p76
    %p78 = scmp.ne.s32.totalorder %s67, %s68
    %p79 = scmp.eq.s32.totalorder %s33, 0
    %p80 = por %p78, %p79
    %p81 = scmp.ne.s32.totalorder %s67, %s68
    %p82 = scmp.eq.s32.totalorder %s34, 1
    %p83 = por %p81, %p82
    %p85 = scmp.ne.s32.totalorder %s68, %s84
    %p86 = scmp.eq.s32.totalorder %s34, 0
    %p87 = por %p85, %p86
    %s88 = ssub.s32 %s28, %s35
    %p89 = scmp.eq.s32.totalorder %s88, 0
    %s91 = sadd.s32 %s90, 1
    %s92 = scalar_select %p89, %s90, %s91
    %p95 = pneg %p89
    %p96 = scmp.eq.s32.totalorder %s28, 1
    %p97 = por %p95, %p96
    %p98 = scmp.ne.s32.totalorder %s90, %s93
    %p99 = scmp.eq.s32.totalorder %s28, 0
    %p100 = por %p98, %p99
    %p101 = scmp.ne.s32.totalorder %s90, %s93
    %p102 = scmp.eq.s32.totalorder %s33, 1
    %p103 = por %p101, %p102
    %p104 = scmp.ne.s32.totalorder %s93, %s94
    %p105 = scmp.eq.s32.totalorder %s33, 0
    %p106 = por %p104, %p105
    %p107 = scmp.ne.s32.totalorder %s93, %s94
    %p108 = scmp.eq.s32.totalorder %s34, 1
    %p109 = por %p107, %p108
    %p111 = scmp.ne.s32.totalorder %s94, %s110
    %p112 = scmp.eq.s32.totalorder %s34, 0
    %p113 = por %p111, %p112
    %s114 = ssub.s32 %s28, %s35
    %p115 = scmp.eq.s32.totalorder %s114, 0
    %s117 = sadd.s32 %s116, 1
    %s118 = scalar_select %p115, %s116, %s117
    %p121 = pneg %p115
    %p122 = scmp.eq.s32.totalorder %s28, 1
    %p123 = por %p121, %p122
    %p124 = scmp.ne.s32.totalorder %s116, %s119
    %p125 = scmp.eq.s32.totalorder %s28, 0
    %p126 = por %p124, %p125
    %p127 = scmp.ne.s32.totalorder %s116, %s119
    %p128 = scmp.eq.s32.totalorder %s33, 1
    %p129 = por %p127, %p128
    %p130 = scmp.ne.s32.totalorder %s119, %s120
    %p131 = scmp.eq.s32.totalorder %s33, 0
    %p132 = por %p130, %p131
    %p133 = scmp.ne.s32.totalorder %s119, %s120
    %p134 = scmp.eq.s32.totalorder %s34, 1
    %p135 = por %p133, %p134
    %p137 = scmp.ne.s32.totalorder %s120, %s136
    %p138 = scmp.eq.s32.totalorder %s34, 0
    %p139 = por %p137, %p138
    %s141 = sadd.s32 %s140, 1
    %p144 = scmp.eq.s32.totalorder %s28, 1
    %p145 = scmp.ne.s32.totalorder %s140, %s142
    %p146 = scmp.eq.s32.totalorder %s28, 0
    %p147 = por %p145, %p146
    %p148 = scmp.ne.s32.totalorder %s140, %s142
    %p149 = scmp.eq.s32.totalorder %s33, 1
    %p150 = por %p148, %p149
    %p151 = scmp.ne.s32.totalorder %s142, %s143
    %p152 = scmp.eq.s32.totalorder %s33, 0
    %p153 = por %p151, %p152
    %p154 = scmp.ne.s32.totalorder %s142, %s143
    %p155 = scmp.eq.s32.totalorder %s34, 1
    %p156 = por %p154, %p155
    %p158 = scmp.ne.s32.totalorder %s143, %s157
    %p159 = scmp.eq.s32.totalorder %s34, 0
    %p160 = por %p158, %p159
    %s162 = sadd.s32 %s161, 1
    %p165 = scmp.eq.s32.totalorder %s28, 1
    %p166 = scmp.ne.s32.totalorder %s161, %s163
    %p167 = scmp.eq.s32.totalorder %s28, 0
    %p168 = por %p166, %p167
    %p169 = scmp.ne.s32.totalorder %s161, %s163
    %p170 = scmp.eq.s32.totalorder %s33, 1
    %p171 = por %p169, %p170
    %p172 = scmp.ne.s32.totalorder %s163, %s164
    %p173 = scmp.eq.s32.totalorder %s33, 0
    %p174 = por %p172, %p173
    %p175 = scmp.ne.s32.totalorder %s163, %s164
    %p176 = scmp.eq.s32.totalorder %s34, 1
    %p177 = por %p175, %p176
    %p179 = scmp.ne.s32.totalorder %s164, %s178
    %p180 = scmp.eq.s32.totalorder %s34, 0
    %p181 = por %p179, %p180
    %s183 = sadd.s32 %s182, 1
    %p186 = scmp.eq.s32.totalorder %s28, 1
    %p187 = scmp.ne.s32.totalorder %s182, %s184
    %p188 = scmp.eq.s32.totalorder %s28, 0
    %p189 = por %p187, %p188
    %p190 = scmp.ne.s32.totalorder %s182, %s184
    %p191 = scmp.eq.s32.totalorder %s33, 1
    %p192 = por %p190, %p191
    %p193 = scmp.ne.s32.totalorder %s184, %s185
    %p194 = scmp.eq.s32.totalorder %s33, 0
    %p195 = por %p193, %p194
    %p196 = scmp.ne.s32.totalorder %s184, %s185
    %p197 = scmp.eq.s32.totalorder %s34, 1
    %p198 = por %p196, %p197
    %p200 = scmp.ne.s32.totalorder %s185, %s199
    %p201 = scmp.eq.s32.totalorder %s34, 0
    %p202 = por %p200, %p201
    %s204 = sadd.s32 %s203, 1
    %p207 = scmp.eq.s32.totalorder %s28, 1
    %p208 = scmp.ne.s32.totalorder %s203, %s205
    %p209 = scmp.eq.s32.totalorder %s28, 0
    %p210 = por %p208, %p209
    %p211 = scmp.ne.s32.totalorder %s203, %s205
    %p212 = scmp.eq.s32.totalorder %s33, 1
    %p213 = por %p211, %p212
    %p214 = scmp.ne.s32.totalorder %s205, %s206
    %p215 = scmp.eq.s32.totalorder %s33, 0
    %p216 = por %p214, %p215
    %p217 = scmp.ne.s32.totalorder %s205, %s206
    %p218 = scmp.eq.s32.totalorder %s34, 1
    %p219 = por %p217, %p218
    %p221 = scmp.ne.s32.totalorder %s206, %s220
    %p222 = scmp.eq.s32.totalorder %s34, 0
    %p223 = por %p221, %p222
    %s225 = sadd.s32 %s224, 1
    %p228 = scmp.eq.s32.totalorder %s28, 1
    %p229 = scmp.ne.s32.totalorder %s224, %s226
    %p230 = scmp.eq.s32.totalorder %s28, 0
    %p231 = por %p229, %p230
    %p232 = scmp.ne.s32.totalorder %s224, %s226
    %p233 = scmp.eq.s32.totalorder %s33, 1
    %p234 = por %p232, %p233
    %p235 = scmp.ne.s32.totalorder %s226, %s227
    %p236 = scmp.eq.s32.totalorder %s33, 0
    %p237 = por %p235, %p236
    %p238 = scmp.ne.s32.totalorder %s226, %s227
    %p239 = scmp.eq.s32.totalorder %s34, 1
    %p240 = por %p238, %p239
    %p242 = scmp.ne.s32.totalorder %s227, %s241
    %p243 = scmp.eq.s32.totalorder %s34, 0
    %p244 = por %p242, %p243
    %s246 = sadd.s32 %s245, 1
    %p249 = scmp.eq.s32.totalorder %s28, 1
    %p250 = scmp.ne.s32.totalorder %s245, %s247
    %p251 = scmp.eq.s32.totalorder %s28, 0
    %p252 = por %p250, %p251
    %p253 = scmp.ne.s32.totalorder %s245, %s247
    %p254 = scmp.eq.s32.totalorder %s33, 1
    %p255 = por %p253, %p254
    %p256 = scmp.ne.s32.totalorder %s247, %s248
    %p257 = scmp.eq.s32.totalorder %s33, 0
    %p258 = por %p256, %p257
    %p259 = scmp.ne.s32.totalorder %s247, %s248
    %p260 = scmp.eq.s32.totalorder %s34, 1
    %p261 = por %p259, %p260
    %p263 = scmp.ne.s32.totalorder %s248, %s262
    %p264 = scmp.eq.s32.totalorder %s34, 0
    %p265 = por %p263, %p264
    %s267 = sadd.s32 %s266, 1
    %p270 = scmp.eq.s32.totalorder %s28, 1
    %p271 = scmp.ne.s32.totalorder %s266, %s268
    %p272 = scmp.eq.s32.totalorder %s28, 0
    %p273 = por %p271, %p272
    %p274 = scmp.ne.s32.totalorder %s266, %s268
    %p275 = scmp.eq.s32.totalorder %s33, 1
    %p276 = por %p274, %p275
    %p277 = scmp.ne.s32.totalorder %s268, %s269
    %p278 = scmp.eq.s32.totalorder %s33, 0
    %p279 = por %p277, %p278
    %p280 = scmp.ne.s32.totalorder %s268, %s269
    %p281 = scmp.eq.s32.totalorder %s34, 1
    %p282 = por %p280, %p281
    %p284 = scmp.ne.s32.totalorder %s269, %s283
    %p285 = scmp.eq.s32.totalorder %s34, 0
    %p286 = por %p284, %p285
    %s288 = sadd.s32 %s287, 1
    %p291 = scmp.eq.s32.totalorder %s28, 1
    %p292 = scmp.ne.s32.totalorder %s287, %s289
    %p293 = scmp.eq.s32.totalorder %s28, 0
    %p294 = por %p292, %p293
    %p295 = scmp.ne.s32.totalorder %s287, %s289
    %p296 = scmp.eq.s32.totalorder %s33, 1
    %p297 = por %p295, %p296
    %p298 = scmp.ne.s32.totalorder %s289, %s290
    %p299 = scmp.eq.s32.totalorder %s33, 0
    %p300 = por %p298, %p299
    %p301 = scmp.ne.s32.totalorder %s289, %s290
    %p302 = scmp.eq.s32.totalorder %s34, 1
    %p303 = por %p301, %p302
    %p305 = scmp.ne.s32.totalorder %s290, %s304
    %p306 = scmp.eq.s32.totalorder %s34, 0
    %p307 = por %p305, %p306
    %s309 = sadd.s32 %s308, 1
    %p312 = scmp.eq.s32.totalorder %s28, 1
    %p313 = scmp.ne.s32.totalorder %s308, %s310
    %p314 = scmp.eq.s32.totalorder %s28, 0
    %p315 = por %p313, %p314
    %p316 = scmp.ne.s32.totalorder %s308, %s310
    %p317 = scmp.eq.s32.totalorder %s33, 1
    %p318 = por %p316, %p317
    %p319 = scmp.ne.s32.totalorder %s310, %s311
    %p320 = scmp.eq.s32.totalorder %s33, 0
    %p321 = por %p319, %p320
    %p322 = scmp.ne.s32.totalorder %s310, %s311
    %p323 = scmp.eq.s32.totalorder %s34, 1
    %p324 = por %p322, %p323
    %p326 = scmp.ne.s32.totalorder %s311, %s325
    %p327 = scmp.eq.s32.totalorder %s34, 0
    %p328 = por %p326, %p327
    %s330 = sadd.s32 %s329, 1
    %p333 = scmp.eq.s32.totalorder %s28, 1
    %p334 = scmp.ne.s32.totalorder %s329, %s331
    %p335 = scmp.eq.s32.totalorder %s28, 0
    %p336 = por %p334, %p335
    %p337 = scmp.ne.s32.totalorder %s329, %s331
    %p338 = scmp.eq.s32.totalorder %s33, 1
    %p339 = por %p337, %p338
    %p340 = scmp.ne.s32.totalorder %s331, %s332
    %p341 = scmp.eq.s32.totalorder %s33, 0
    %p342 = por %p340, %p341
    %p343 = scmp.ne.s32.totalorder %s331, %s332
    %p344 = scmp.eq.s32.totalorder %s34, 1
    %p345 = por %p343, %p344
    %p347 = scmp.ne.s32.totalorder %s332, %s346
    %p348 = scmp.eq.s32.totalorder %s34, 0
    %p349 = por %p347, %p348
    %s351 = sadd.s32 %s350, 1
    %p354 = scmp.eq.s32.totalorder %s28, 1
    %p355 = scmp.ne.s32.totalorder %s350, %s352
    %p356 = scmp.eq.s32.totalorder %s28, 0
    %p357 = por %p355, %p356
    %p358 = scmp.ne.s32.totalorder %s350, %s352
    %p359 = scmp.eq.s32.totalorder %s33, 1
    %p360 = por %p358, %p359
    %p361 = scmp.ne.s32.totalorder %s352, %s353
    %p362 = scmp.eq.s32.totalorder %s33, 0
    %p363 = por %p361, %p362
    %p364 = scmp.ne.s32.totalorder %s352, %s353
    %p365 = scmp.eq.s32.totalorder %s34, 1
    %p366 = por %p364, %p365
    %p368 = scmp.ne.s32.totalorder %s353, %s367
    %p369 = scmp.eq.s32.totalorder %s34, 0
    %p370 = por %p368, %p369
    %s372 = sadd.s32 %s371, 1
    %p375 = scmp.eq.s32.totalorder %s28, 1
    %p376 = scmp.ne.s32.totalorder %s371, %s373
    %p377 = scmp.eq.s32.totalorder %s28, 0
    %p378 = por %p376, %p377
    %p379 = scmp.ne.s32.totalorder %s371, %s373
    %p380 = scmp.eq.s32.totalorder %s33, 1
    %p381 = por %p379, %p380
    %p382 = scmp.ne.s32.totalorder %s373, %s374
    %p383 = scmp.eq.s32.totalorder %s33, 0
    %p384 = por %p382, %p383
    %p385 = scmp.ne.s32.totalorder %s373, %s374
    %p386 = scmp.eq.s32.totalorder %s34, 1
    %p387 = por %p385, %p386
    %p389 = scmp.ne.s32.totalorder %s374, %s388
    %p390 = scmp.eq.s32.totalorder %s34, 0
    %p391 = por %p389, %p390
    %s393 = sadd.s32 %s392, 1
    %p396 = scmp.eq.s32.totalorder %s28, 1
    %p397 = scmp.ne.s32.totalorder %s392, %s394
    %p398 = scmp.eq.s32.totalorder %s28, 0
    %p399 = por %p397, %p398
    %p400 = scmp.ne.s32.totalorder %s392, %s394
    %p401 = scmp.eq.s32.totalorder %s33, 1
    %p402 = por %p400, %p401
    %p403 = scmp.ne.s32.totalorder %s394, %s395
    %p404 = scmp.eq.s32.totalorder %s33, 0
    %p405 = por %p403, %p404
    %p406 = scmp.ne.s32.totalorder %s394, %s395
    %p407 = scmp.eq.s32.totalorder %s34, 1
    %p408 = por %p406, %p407
    %p410 = scmp.ne.s32.totalorder %s395, %s409
    %p411 = scmp.eq.s32.totalorder %s34, 0
    %p412 = por %p410, %p411
    %s414 = sadd.s32 %s413, 1
    %p417 = scmp.eq.s32.totalorder %s28, 1
    %p418 = scmp.ne.s32.totalorder %s413, %s415
    %p419 = scmp.eq.s32.totalorder %s28, 0
    %p420 = por %p418, %p419
    %p421 = scmp.ne.s32.totalorder %s413, %s415
    %p422 = scmp.eq.s32.totalorder %s33, 1
    %p423 = por %p421, %p422
    %p424 = scmp.ne.s32.totalorder %s415, %s416
    %p425 = scmp.eq.s32.totalorder %s33, 0
    %p426 = por %p424, %p425
    %p427 = scmp.ne.s32.totalorder %s415, %s416
    %p428 = scmp.eq.s32.totalorder %s34, 1
    %p429 = por %p427, %p428
    %p431 = scmp.ne.s32.totalorder %s416, %s430
    %p432 = scmp.eq.s32.totalorder %s34, 0
    %p433 = por %p431, %p432
    %s435 = sadd.s32 %s434, 1
    %p438 = scmp.eq.s32.totalorder %s28, 1
    %p439 = scmp.ne.s32.totalorder %s434, %s436
    %p440 = scmp.eq.s32.totalorder %s28, 0
    %p441 = por %p439, %p440
    %p442 = scmp.ne.s32.totalorder %s434, %s436
    %p443 = scmp.eq.s32.totalorder %s33, 1
    %p444 = por %p442, %p443
    %p445 = scmp.ne.s32.totalorder %s436, %s437
    %p446 = scmp.eq.s32.totalorder %s33, 0
    %p447 = por %p445, %p446
    %p448 = scmp.ne.s32.totalorder %s436, %s437
    %p449 = scmp.eq.s32.totalorder %s34, 1
    %p450 = por %p448, %p449
    %p452 = scmp.ne.s32.totalorder %s437, %s451
    %p453 = scmp.eq.s32.totalorder %s34, 0
    %p454 = por %p452, %p453
    %s456 = sadd.s32 %s455, 1
    %p459 = scmp.eq.s32.totalorder %s28, 1
    %p460 = scmp.ne.s32.totalorder %s455, %s457
    %p461 = scmp.eq.s32.totalorder %s28, 0
    %p462 = por %p460, %p461
    %p463 = scmp.ne.s32.totalorder %s455, %s457
    %p464 = scmp.eq.s32.totalorder %s33, 1
    %p465 = por %p463, %p464
    %p466 = scmp.ne.s32.totalorder %s457, %s458
    %p467 = scmp.eq.s32.totalorder %s33, 0
    %p468 = por %p466, %p467
    %p469 = scmp.ne.s32.totalorder %s457, %s458
    %p470 = scmp.eq.s32.totalorder %s34, 1
    %p471 = por %p469, %p470
    %p473 = scmp.ne.s32.totalorder %s458, %s472
    %p474 = scmp.eq.s32.totalorder %s34, 0
    %p475 = por %p473, %p474
    %s477 = sadd.s32 %s476, 1
    %p480 = scmp.eq.s32.totalorder %s28, 1
    %p481 = scmp.ne.s32.totalorder %s476, %s478
    %p482 = scmp.eq.s32.totalorder %s28, 0
    %p483 = por %p481, %p482
    %p484 = scmp.ne.s32.totalorder %s476, %s478
    %p485 = scmp.eq.s32.totalorder %s33, 1
    %p486 = por %p484, %p485
    %p487 = scmp.ne.s32.totalorder %s478, %s479
    %p488 = scmp.eq.s32.totalorder %s33, 0
    %p489 = por %p487, %p488
    %p490 = scmp.ne.s32.totalorder %s478, %s479
    %p491 = scmp.eq.s32.totalorder %s34, 1
    %p492 = por %p490, %p491
    %p494 = scmp.ne.s32.totalorder %s479, %s493
    %p495 = scmp.eq.s32.totalorder %s34, 0
    %p496 = por %p494, %p495
    %s498 = sadd.s32 %s497, 1
    %p501 = scmp.eq.s32.totalorder %s28, 1
    %p502 = scmp.ne.s32.totalorder %s497, %s499
    %p503 = scmp.eq.s32.totalorder %s28, 0
    %p504 = por %p502, %p503
    %p505 = scmp.ne.s32.totalorder %s497, %s499
    %p506 = scmp.eq.s32.totalorder %s33, 1
    %p507 = por %p505, %p506
    %p508 = scmp.ne.s32.totalorder %s499, %s500
    %p509 = scmp.eq.s32.totalorder %s33, 0
    %p510 = por %p508, %p509
    %p511 = scmp.ne.s32.totalorder %s499, %s500
    %p512 = scmp.eq.s32.totalorder %s34, 1
    %p513 = por %p511, %p512
    %p515 = scmp.ne.s32.totalorder %s500, %s514
    %p516 = scmp.eq.s32.totalorder %s34, 0
    %p517 = por %p515, %p516
    %s518 = ssub.s32 %s28, %s35
    %p519 = scmp.eq.s32.totalorder %s518, 0
    %s521 = sadd.s32 %s520, 1
    %s522 = scalar_select %p519, %s520, %s521
    %p525 = pneg %p519
    %p526 = scmp.eq.s32.totalorder %s28, 1
    %p527 = por %p525, %p526
    %p528 = scmp.ne.s32.totalorder %s520, %s523
    %p529 = scmp.eq.s32.totalorder %s28, 0
    %p530 = por %p528, %p529
    %p531 = scmp.ne.s32.totalorder %s520, %s523
    %p532 = scmp.eq.s32.totalorder %s33, 1
    %p533 = por %p531, %p532
    %p534 = scmp.ne.s32.totalorder %s523, %s524
    %p535 = scmp.eq.s32.totalorder %s33, 0
    %p536 = por %p534, %p535
    %p537 = scmp.ne.s32.totalorder %s523, %s524
    %p538 = scmp.eq.s32.totalorder %s34, 1
    %p539 = por %p537, %p538
    %p541 = scmp.ne.s32.totalorder %s524, %s540
    %p542 = scmp.eq.s32.totalorder %s34, 0
    %p543 = por %p541, %p542
    %p544 = scmp.le.s32.totalorder 1, %s28
    %p545 = scmp.lt.s32.totalorder %s28, 3
    %p546 = pnand %p544, %p545
    %p547 = pneg %p546
    // Predicated region
    $region9: #{decoder_forward.2} parent=5 // pred_check
      _
    $region10: #{decoder_forward.2} parent=5 // pred_check_branch
      %549 = sbr.rel (%p546) target = $region12
    $region11: #{decoder_forward.2} parent=5 // pred_region
      %s550 = ssub.s32 %s28, 1
      // Predicated region
      $region13: #{decoder_forward.2} parent=11 // pred_check
        %p551 = pneg %p153
      $region14: #{decoder_forward.2} parent=11 // pred_check_branch
        %553 = sbr.rel (%p551) target = $region16
      $region15: #{decoder_forward.2} parent=11 // pred_region
        _
      $region16: #{decoder_forward.2} parent=11 // pred_fallthru
        _
      // Predicated region
      $region17: #{decoder_forward.2} parent=11 // pred_check
        %p554 = pneg %p174
      $region18: #{decoder_forward.2} parent=11 // pred_check_branch
        %556 = sbr.rel (%p554) target = $region20
      $region19: #{decoder_forward.2} parent=11 // pred_region
        _
      $region20: #{decoder_forward.2} parent=11 // pred_fallthru
        _
      // Predicated region
      $region21: #{decoder_forward.2} parent=11 // pred_check
        %p557 = pneg %p195
      $region22: #{decoder_forward.2} parent=11 // pred_check_branch
        %559 = sbr.rel (%p557) target = $region24
      $region23: #{decoder_forward.2} parent=11 // pred_region
        _
      $region24: #{decoder_forward.2} parent=11 // pred_fallthru
        _
      // Predicated region
      $region25: #{decoder_forward.2} parent=11 // pred_check
        %p560 = pneg %p216
      $region26: #{decoder_forward.2} parent=11 // pred_check_branch
        %562 = sbr.rel (%p560) target = $region28
      $region27: #{decoder_forward.2} parent=11 // pred_region
        _
      $region28: #{decoder_forward.2} parent=11 // pred_fallthru
        _
      // Predicated region
      $region29: #{decoder_forward.2} parent=11 // pred_check
        %p563 = pneg %p237
      $region30: #{decoder_forward.2} parent=11 // pred_check_branch
        %565 = sbr.rel (%p563) target = $region32
      $region31: #{decoder_forward.2} parent=11 // pred_region
        _
      $region32: #{decoder_forward.2} parent=11 // pred_fallthru
        _
      // Predicated region
      $region33: #{decoder_forward.2} parent=11 // pred_check
        %p566 = pneg %p258
      $region34: #{decoder_forward.2} parent=11 // pred_check_branch
        %568 = sbr.rel (%p566) target = $region36
      $region35: #{decoder_forward.2} parent=11 // pred_region
        _
      $region36: #{decoder_forward.2} parent=11 // pred_fallthru
        _
      // Predicated region
      $region37: #{decoder_forward.2} parent=11 // pred_check
        %p569 = pneg %p279
      $region38: #{decoder_forward.2} parent=11 // pred_check_branch
        %571 = sbr.rel (%p569) target = $region40
      $region39: #{decoder_forward.2} parent=11 // pred_region
        _
      $region40: #{decoder_forward.2} parent=11 // pred_fallthru
        _
      // Predicated region
      $region41: #{decoder_forward.2} parent=11 // pred_check
        %p572 = pneg %p300
      $region42: #{decoder_forward.2} parent=11 // pred_check_branch
        %574 = sbr.rel (%p572) target = $region44
      $region43: #{decoder_forward.2} parent=11 // pred_region
        _
      $region44: #{decoder_forward.2} parent=11 // pred_fallthru
        _
      // Predicated region
      $region45: #{decoder_forward.2} parent=11 // pred_check
        %p575 = pneg %p321
      $region46: #{decoder_forward.2} parent=11 // pred_check_branch
        %577 = sbr.rel (%p575) target = $region48
      $region47: #{decoder_forward.2} parent=11 // pred_region
        _
      $region48: #{decoder_forward.2} parent=11 // pred_fallthru
        _
      // Predicated region
      $region49: #{decoder_forward.2} parent=11 // pred_check
        %p578 = pneg %p342
      $region50: #{decoder_forward.2} parent=11 // pred_check_branch
        %580 = sbr.rel (%p578) target = $region52
      $region51: #{decoder_forward.2} parent=11 // pred_region
        _
      $region52: #{decoder_forward.2} parent=11 // pred_fallthru
        _
      // Predicated region
      $region53: #{decoder_forward.2} parent=11 // pred_check
        %p581 = pneg %p363
      $region54: #{decoder_forward.2} parent=11 // pred_check_branch
        %583 = sbr.rel (%p581) target = $region56
      $region55: #{decoder_forward.2} parent=11 // pred_region
        _
      $region56: #{decoder_forward.2} parent=11 // pred_fallthru
        _
      // Predicated region
      $region57: #{decoder_forward.2} parent=11 // pred_check
        %p584 = pneg %p384
      $region58: #{decoder_forward.2} parent=11 // pred_check_branch
        %586 = sbr.rel (%p584) target = $region60
      $region59: #{decoder_forward.2} parent=11 // pred_region
        _
      $region60: #{decoder_forward.2} parent=11 // pred_fallthru
        _
      // Predicated region
      $region61: #{decoder_forward.2} parent=11 // pred_check
        %p587 = pneg %p405
      $region62: #{decoder_forward.2} parent=11 // pred_check_branch
        %589 = sbr.rel (%p587) target = $region64
      $region63: #{decoder_forward.2} parent=11 // pred_region
        _
      $region64: #{decoder_forward.2} parent=11 // pred_fallthru
        _
      // Predicated region
      $region65: #{decoder_forward.2} parent=11 // pred_check
        %p590 = pneg %p426
      $region66: #{decoder_forward.2} parent=11 // pred_check_branch
        %592 = sbr.rel (%p590) target = $region68
      $region67: #{decoder_forward.2} parent=11 // pred_region
        _
      $region68: #{decoder_forward.2} parent=11 // pred_fallthru
        _
      // Predicated region
      $region69: #{decoder_forward.2} parent=11 // pred_check
        %p593 = pneg %p447
      $region70: #{decoder_forward.2} parent=11 // pred_check_branch
        %595 = sbr.rel (%p593) target = $region72
      $region71: #{decoder_forward.2} parent=11 // pred_region
        _
      $region72: #{decoder_forward.2} parent=11 // pred_fallthru
        _
      // Predicated region
      $region73: #{decoder_forward.2} parent=11 // pred_check
        %p596 = pneg %p468
      $region74: #{decoder_forward.2} parent=11 // pred_check_branch
        %598 = sbr.rel (%p596) target = $region76
      $region75: #{decoder_forward.2} parent=11 // pred_region
        _
      $region76: #{decoder_forward.2} parent=11 // pred_fallthru
        _
      // Predicated region
      $region77: #{decoder_forward.2} parent=11 // pred_check
        %p599 = pneg %p489
      $region78: #{decoder_forward.2} parent=11 // pred_check_branch
        %601 = sbr.rel (%p599) target = $region80
      $region79: #{decoder_forward.2} parent=11 // pred_region
        _
      $region80: #{decoder_forward.2} parent=11 // pred_fallthru
        _
      // Predicated region
      $region81: #{decoder_forward.2} parent=11 // pred_check
        %p602 = pneg %p510
      $region82: #{decoder_forward.2} parent=11 // pred_check_branch
        %604 = sbr.rel (%p602) target = $region84
      $region83: #{decoder_forward.2} parent=11 // pred_region
        _
      $region84: #{decoder_forward.2} parent=11 // pred_fallthru
        _
    $region12: #{decoder_forward.2} parent=5 // pred_fallthru
      _
    %p605 = scmp.lt.s32.totalorder %s28, 2
    // Predicated region
    $region85: #{decoder_forward.2} parent=5 // pred_check
      %p606 = pneg %p605
    $region86: #{decoder_forward.2} parent=5 // pred_check_branch
      %608 = sbr.rel (%p606) target = $region88
    $region87: #{decoder_forward.2} parent=5 // pred_region
      // Predicated region
      $region89: #{decoder_forward.2} parent=87 // pred_check
        %p609 = pneg %p48
      $region90: #{decoder_forward.2} parent=87 // pred_check_branch
        %611 = sbr.rel (%p609) target = $region92
      $region91: #{decoder_forward.2} parent=87 // pred_region
        %p612 = scmp.lt.s32.totalorder %s28, 1
        %s613 = scalar_select %p612, %s28, 1
        %s614 = smul.addr %s613, 8
        %s615 = scalar_lea.vmem %s0, %s614
      $region92: #{decoder_forward.2} parent=87 // pred_fallthru
        _
      // Predicated region
      $region93: #{decoder_forward.2} parent=87 // pred_check
        %p616 = pneg %p74
      $region94: #{decoder_forward.2} parent=87 // pred_check_branch
        %618 = sbr.rel (%p616) target = $region96
      $region95: #{decoder_forward.2} parent=87 // pred_region
        %p619 = scmp.lt.s32.totalorder %s28, 1
        %s620 = scalar_select %p619, %s28, 1
        %s621 = smul.addr %s620, 4
        %s622 = scalar_lea.vmem %s1, %s621
      $region96: #{decoder_forward.2} parent=87 // pred_fallthru
        _
      // Predicated region
      $region97: #{decoder_forward.2} parent=87 // pred_check
        %p623 = pneg %p100
      $region98: #{decoder_forward.2} parent=87 // pred_check_branch
        %625 = sbr.rel (%p623) target = $region100
      $region99: #{decoder_forward.2} parent=87 // pred_region
        %p626 = scmp.lt.s32.totalorder %s28, 1
        %s627 = scalar_select %p626, %s28, 1
        %s628 = smul.addr %s627, 8
        %s629 = scalar_lea.vmem %s2, %s628
      $region100: #{decoder_forward.2} parent=87 // pred_fallthru
        _
      // Predicated region
      $region101: #{decoder_forward.2} parent=87 // pred_check
        %p630 = pneg %p126
      $region102: #{decoder_forward.2} parent=87 // pred_check_branch
        %632 = sbr.rel (%p630) target = $region104
      $region103: #{decoder_forward.2} parent=87 // pred_region
        %p633 = scmp.lt.s32.totalorder %s28, 1
        %s634 = scalar_select %p633, %s28, 1
        %s635 = smul.addr %s634, 8
        %s636 = scalar_lea.vmem %s3, %s635
      $region104: #{decoder_forward.2} parent=87 // pred_fallthru
        _
    $region88: #{decoder_forward.2} parent=5 // pred_fallthru
      _
    %p637 = scmp.le.s32.totalorder 1, %s28
    %p638 = scmp.lt.s32.totalorder %s28, 3
    %p639 = pnand %p637, %p638
    %p640 = pneg %p639
    // Predicated region
    $region105: #{decoder_forward.2} parent=5 // pred_check
      _
    $region106: #{decoder_forward.2} parent=5 // pred_check_branch
      %642 = sbr.rel (%p639) target = $region108
    $region107: #{decoder_forward.2} parent=5 // pred_region
      %s643 = ssub.s32 %s28, 1
      %p644 = scmp.lt.s32.totalorder %s33, 1
      %s645 = scalar_select %p644, %s33, 1
      %s646 = smul.addr %s645, 8
      %s647 = scalar_lea.vmem %s0, %s646
      %p648 = pneg %p54
      %p649 = pneg %p51
      %p650 = scmp.lt.s32.totalorder %s33, 1
      %s651 = scalar_select %p650, %s33, 1
      %s652 = smul.addr %s651, 4
      %s653 = scalar_lea.vmem %s1, %s652
      %p654 = pneg %p80
      %p655 = pneg %p77
      %p656 = scmp.lt.s32.totalorder %s33, 1
      %s657 = scalar_select %p656, %s33, 1
      %s658 = smul.addr %s657, 8
      %s659 = scalar_lea.vmem %s2, %s658
      %p660 = pneg %p106
      %p661 = pneg %p103
      %p662 = scmp.lt.s32.totalorder %s33, 1
      %s663 = scalar_select %p662, %s33, 1
      %s664 = smul.addr %s663, 8
      %s665 = scalar_lea.vmem %s3, %s664
      %p666 = pneg %p132
      %p667 = pneg %p129
      %p668 = pneg %p153
      %p669 = pneg %p150
      %p670 = pneg %p174
      %p671 = pneg %p171
      %p672 = pneg %p195
      %p673 = pneg %p192
      %p674 = pneg %p216
      %p675 = pneg %p213
      %p676 = pneg %p237
      %p677 = pneg %p234
      %p678 = pneg %p258
      %p679 = pneg %p255
      %p680 = pneg %p279
      %p681 = pneg %p276
      %p682 = pneg %p300
      %p683 = pneg %p297
      %p684 = pneg %p321
      %p685 = pneg %p318
      %p686 = pneg %p342
      %p687 = pneg %p339
      %p688 = pneg %p363
      %p689 = pneg %p360
      %p690 = pneg %p384
      %p691 = pneg %p381
      %p692 = pneg %p405
      %p693 = pneg %p402
      %p694 = pneg %p426
      %p695 = pneg %p423
      %p696 = pneg %p447
      %p697 = pneg %p444
      %p698 = pneg %p468
      %p699 = pneg %p465
      %p700 = pneg %p489
      %p701 = pneg %p486
      %p702 = pneg %p510
      %p703 = pneg %p507
      %p704 = pneg %p536
      %p705 = pneg %p533
      %p706 = scmp.lt.s32.totalorder %s33, 1
      %s707 = scalar_select %p706, %s33, 1
      %s708 = smul.addr %s707, 8
      %s709 = scalar_lea.vmem %s22, %s708
      %p710 = scmp.lt.s32.totalorder %s33, 1
      %s711 = scalar_select %p710, %s33, 1
      %s712 = smul.addr %s711, 8
      %s713 = scalar_lea.vmem %s0, %s712
      %p714 = scmp.lt.s32.totalorder %s33, 1
      %s715 = scalar_select %p714, %s33, 1
      %s716 = smul.addr %s715, 4
      %s717 = scalar_lea.vmem %s1, %s716
      %p718 = scmp.lt.s32.totalorder %s33, 1
      %s719 = scalar_select %p718, %s33, 1
      %s720 = smul.addr %s719, 8
      %s721 = scalar_lea.vmem %s2, %s720
      %p722 = scmp.lt.s32.totalorder %s33, 1
      %s723 = scalar_select %p722, %s33, 1
      %s724 = smul.addr %s723, 8
      %s725 = scalar_lea.vmem %s3, %s724
      %p726 = scmp.lt.s32.totalorder %s33, 1
      %s727 = scalar_select %p726, %s33, 1
      %s728 = smul.addr %s727, 8
      %s729 = scalar_lea.vmem %s22, %s728
      %v731 = vld [vmem:[%s713] sm:$0xff]
      %v732 = vld [vmem:[%s717] sm:$0xf]
      %v733 = vpack.c.bf16 %v731, %v731
      %v734 = vld [vmem:[%s4] sm:$0xf]
      %v735 = vld [vmem:[%s4 + $0x4] sm:$0xf]
      %v736 = vld [vmem:[%s4 + $0x8] sm:$0xf]
      %v737 = vld [vmem:[%s4 + $0xc] sm:$0xf]
      %v738 = vld [vmem:[%s5] sm:$0x1]
      %v740 = vlaneseq
      %v741 = vshrl.u32 %v740, 7
      %v742 = vsub.s32 0, %v741
      %v743 = vrot.slane %v738, %v742
      %v749 = vunpack.c.l.b16 %v734
      %v750 = vunpack.c.l.b16 %v735
      %v751 = vunpack.c.l.b16 %v736
      %v752 = vunpack.c.l.b16 %v737
      %v753 = vpack.c.b16 %v750, %v749
      %v754 = vpack.c.b16 %v752, %v751
      %vm757 = vcmask 261120
      %v759 = vsel %vm757, %v733, 0
      %761 = vmatprep.subr.bf16.mxu0 0
      %762 = vmatpush1.bf16.msra.mxu0 0
      %763 = vmatprep.subr.bf16.mxu0 0
      %764 = vmatpush1.bf16.msra.mxu0 0
      %765 = vmatprep.subr.bf16.mxu0 0
      %766 = vmatpush1.bf16.msra.mxu0 0
      %767 = vmatprep.subr.bf16.mxu0 0
      %768 = vmatpush1.bf16.msra.mxu0 0
      %769 = vmatprep.subr.bf16.mxu0 0
      %770 = vmatpush1.bf16.msra.mxu0 0
      %771 = vmatprep.subr.bf16.mxu0 0
      %772 = vmatpush1.bf16.msra.mxu0 0
      %773 = vmatprep.subr.bf16.mxu0 0
      %774 = vmatpush1.bf16.msra.mxu0 %v754
      %775 = vmatprep.subr.bf16.mxu0 0
      %776 = vmatpush1.bf16.msra.mxu0 %v753
      %777 = vmatprep.subr.bf16.mxu0 0
      %778 = vmatpush2.bf16.msra.mxu0 0
      %779 = vmatprep.subr.bf16.mxu0 0
      %780 = vmatpush2.bf16.msra.mxu0 0
      %781 = vmatprep.subr.bf16.mxu0 0
      %782 = vmatpush2.bf16.msra.mxu0 0
      %783 = vmatprep.subr.bf16.mxu0 0
      %784 = vmatpush2.bf16.msra.mxu0 0
      %785 = vmatprep.subr.bf16.mxu0 0
      %786 = vmatpush2.bf16.msra.mxu0 0
      %787 = vmatprep.subr.bf16.mxu0 0
      %788 = vmatpush2.bf16.msra.mxu0 0
      %789 = vmatprep.subr.bf16.mxu0 0
      %790 = vmatpush2.bf16.msra.mxu0 0
      %791 = vmatprep.subr.bf16.mxu0 0
      %792 = vmatpush2.bf16.msra.mxu0 0
      %793 = vmatprep.mubr.bf16.mxu0 0
      %794 = vmatmul.mubr.bf16.gmra.mxu0 %v759
      %v795 = vpop.f32.mrf.mxu0
      %v796 = vadd.f32 %v743, %v795
      %v797 = vpop.f32.mrf.mxu0
      %v798 = vpop.f32.mrf.mxu0
      %v799 = vpop.f32.mrf.mxu0
      %800 = vdwg.mxu0
      %v801 = vld [vmem:[%s721] sm:$0xff]
      %v802 = vld [vmem:[%s6] sm:$0xf]
      %v803 = vld [vmem:[%s6 + $0x4] sm:$0xf]
      %v804 = vld [vmem:[%s6 + $0x8] sm:$0xf]
      %v805 = vld [vmem:[%s6 + $0xc] sm:$0xf]
      %v806 = vld [vmem:[%s7] sm:$0x1]
      %v807 = vld [vmem:[%s8] sm:$0x1]
      %v808 = vld [vmem:[%s9] sm:$0x1]
      %v809 = vmul.f32 %v796, 0.35355338
      %v810 = vpack.c.bf16 %v809, %v809
      %v811 = vpack.c.bf16 %v796, %v796
      %813 = vrot.lane.b32.xlu0 %v811, 96
      %v814 = vpop.permute.xlu0 %813
      %vm815 = vcmask 64512
      %v817 = vsel %vm815, %v810, 0
      %v820 = vsel %vm815, %v814, 0
      %822 = vmatprep.subr.bf16.mxu0 0
      %823 = vmatpush1.bf16.xpose.msra.mxu0 0
      %824 = vmatprep.subr.bf16.mxu0 0
      %825 = vmatpush1.bf16.xpose.msra.mxu0 0
      %826 = vmatprep.subr.bf16.mxu0 0
      %827 = vmatpush1.bf16.xpose.msra.mxu0 0
      %828 = vmatprep.subr.bf16.mxu0 0
      %829 = vmatpush1.bf16.xpose.msra.mxu0 0
      %830 = vmatprep.subr.bf16.mxu0 0
      %831 = vmatpush1.bf16.xpose.msra.mxu0 0
      %832 = vmatprep.subr.bf16.mxu0 0
      %833 = vmatpush1.bf16.xpose.msra.mxu0 0
      %834 = vmatprep.subr.bf16.mxu0 0
      %835 = vmatpush1.bf16.xpose.msra.mxu0 0
      %836 = vmatprep.subr.bf16.mxu0 0
      %837 = vmatpush1.bf16.xpose.msra.mxu0 %v820
      %838 = vmatprep.subr.bf16.mxu0 0
      %839 = vmatpush2.bf16.xpose.msra.mxu0 0
      %840 = vmatprep.subr.bf16.mxu0 0
      %841 = vmatpush2.bf16.xpose.msra.mxu0 0
      %842 = vmatprep.subr.bf16.mxu0 0
      %843 = vmatpush2.bf16.xpose.msra.mxu0 0
      %844 = vmatprep.subr.bf16.mxu0 0
      %845 = vmatpush2.bf16.xpose.msra.mxu0 0
      %846 = vmatprep.subr.bf16.mxu0 0
      %847 = vmatpush2.bf16.xpose.msra.mxu0 0
      %848 = vmatprep.subr.bf16.mxu0 0
      %849 = vmatpush2.bf16.xpose.msra.mxu0 0
      %850 = vmatprep.subr.bf16.mxu0 0
      %851 = vmatpush2.bf16.xpose.msra.mxu0 0
      %852 = vmatprep.subr.bf16.mxu0 0
      %853 = vmatpush2.bf16.xpose.msra.mxu0 0
      %854 = vmatprep.mubr.bf16.mxu0 0
      %855 = vmatmul.mubr.bf16.gmra.mxu0 %v817
      %v856 = vpop.f32.mrf.mxu0
      %v857 = vadd.f32 %v801, %v856
      %v858 = vpop.f32.mrf.mxu0
      %v859 = vpop.f32.mrf.mxu0
      %v860 = vpop.f32.mrf.mxu0
      %861 = vdwg.mxu0
      %v862 = vsel %vm815, %v857, -inf
      %863 = vmax.xlane.f32.xlu0 %v862
      %v864 = vpop.xlane.xlu0 %863
      %v865 = vsub.f32 %v857, %v864
      %v866 = vmul.f32 %v865, 1.442695
      %v867 = vpow.pop %v866
      %v868 = vsel %vm815, %v867, 0.0
      %869 = vadd.xlane.f32.xlu0 %v868
      %v870 = vpop.xlane.xlu0 %869
      %v871 = vrcp.pop %v870
      %v872 = vmul.f32 %v867, %v871
      %v873 = vpack.c.bf16 %v872, %v872
      %874 = vrot.lane.b32.xlu0 %v811, 64
      %v875 = vpop.permute.xlu0 %874
      %v877 = vsel %vm815, %v873, 0
      %vm879 = vcmask 1043456
      %v881 = vsel %vm879, %v875, 0
      %883 = vmatprep.subr.bf16.mxu0 0
      %884 = vmatpush1.bf16.msra.mxu0 0
      %885 = vmatprep.subr.bf16.mxu0 0
      %886 = vmatpush1.bf16.msra.mxu0 0
      %887 = vmatprep.subr.bf16.mxu0 0
      %888 = vmatpush1.bf16.msra.mxu0 0
      %889 = vmatprep.subr.bf16.mxu0 0
      %890 = vmatpush1.bf16.msra.mxu0 0
      %891 = vmatprep.subr.bf16.mxu0 0
      %892 = vmatpush1.bf16.msra.mxu0 0
      %893 = vmatprep.subr.bf16.mxu0 0
      %894 = vmatpush1.bf16.msra.mxu0 0
      %895 = vmatprep.subr.bf16.mxu0 0
      %896 = vmatpush1.bf16.msra.mxu0 0
      %897 = vmatprep.subr.bf16.mxu0 0
      %898 = vmatpush1.bf16.msra.mxu0 %v881
      %899 = vmatprep.subr.bf16.mxu0 0
      %900 = vmatpush2.bf16.msra.mxu0 0
      %901 = vmatprep.subr.bf16.mxu0 0
      %902 = vmatpush2.bf16.msra.mxu0 0
      %903 = vmatprep.subr.bf16.mxu0 0
      %904 = vmatpush2.bf16.msra.mxu0 0
      %905 = vmatprep.subr.bf16.mxu0 0
      %906 = vmatpush2.bf16.msra.mxu0 0
      %907 = vmatprep.subr.bf16.mxu0 0
      %908 = vmatpush2.bf16.msra.mxu0 0
      %909 = vmatprep.subr.bf16.mxu0 0
      %910 = vmatpush2.bf16.msra.mxu0 0
      %911 = vmatprep.subr.bf16.mxu0 0
      %912 = vmatpush2.bf16.msra.mxu0 0
      %913 = vmatprep.subr.bf16.mxu0 0
      %914 = vmatpush2.bf16.msra.mxu0 0
      %915 = vmatprep.mubr.bf16.mxu0 0
      %916 = vmatmul.mubr.bf16.gmra.mxu0 %v877
      %v917 = vpop.f32.mrf.mxu0
      %v918 = vadd.f32 0.0, %v917
      %v919 = vpop.f32.mrf.mxu0
      %v920 = vpop.f32.mrf.mxu0
      %v921 = vpop.f32.mrf.mxu0
      %922 = vdwg.mxu0
      %923 = vst.msk [vmem:[#allocation2] sm:$0xff] %vm815, %v918
      %925 = vrot.lane.b32.xlu0 %v810, 120
      %v926 = vpop.permute.xlu0 %925
      %927 = vrot.lane.b32.xlu0 %v811, 88
      %v928 = vpop.permute.xlu0 %927
      %v930 = vsel %vm815, %v926, 0
      %v933 = vsel %vm815, %v928, 0
      %935 = vmatprep.subr.bf16.mxu0 0
      %936 = vmatpush1.bf16.xpose.msra.mxu0 0
      %937 = vmatprep.subr.bf16.mxu0 0
      %938 = vmatpush1.bf16.xpose.msra.mxu0 0
      %939 = vmatprep.subr.bf16.mxu0 0
      %940 = vmatpush1.bf16.xpose.msra.mxu0 0
      %941 = vmatprep.subr.bf16.mxu0 0
      %942 = vmatpush1.bf16.xpose.msra.mxu0 0
      %943 = vmatprep.subr.bf16.mxu0 0
      %944 = vmatpush1.bf16.xpose.msra.mxu0 0
      %945 = vmatprep.subr.bf16.mxu0 0
      %946 = vmatpush1.bf16.xpose.msra.mxu0 0
      %947 = vmatprep.subr.bf16.mxu0 0
      %948 = vmatpush1.bf16.xpose.msra.mxu0 0
      %949 = vmatprep.subr.bf16.mxu0 0
      %950 = vmatpush1.bf16.xpose.msra.mxu0 %v933
      %951 = vmatprep.subr.bf16.mxu0 0
      %952 = vmatpush2.bf16.xpose.msra.mxu0 0
      %953 = vmatprep.subr.bf16.mxu0 0
      %954 = vmatpush2.bf16.xpose.msra.mxu0 0
      %955 = vmatprep.subr.bf16.mxu0 0
      %956 = vmatpush2.bf16.xpose.msra.mxu0 0
      %957 = vmatprep.subr.bf16.mxu0 0
      %958 = vmatpush2.bf16.xpose.msra.mxu0 0
      %959 = vmatprep.subr.bf16.mxu0 0
      %960 = vmatpush2.bf16.xpose.msra.mxu0 0
      %961 = vmatprep.subr.bf16.mxu0 0
      %962 = vmatpush2.bf16.xpose.msra.mxu0 0
      %963 = vmatprep.subr.bf16.mxu0 0
      %964 = vmatpush2.bf16.xpose.msra.mxu0 0
      %965 = vmatprep.subr.bf16.mxu0 0
      %966 = vmatpush2.bf16.xpose.msra.mxu0 0
      %967 = vmatprep.mubr.bf16.mxu0 0
      %968 = vmatmul.mubr.bf16.gmra.mxu0 %v930
      %v969 = vpop.f32.mrf.mxu0
      %v970 = vadd.f32 %v801, %v969
      %v971 = vpop.f32.mrf.mxu0
      %v972 = vpop.f32.mrf.mxu0
      %v973 = vpop.f32.mrf.mxu0
      %974 = vdwg.mxu0
      %v975 = vsel %vm815, %v970, -inf
      %976 = vmax.xlane.f32.xlu0 %v975
      %v977 = vpop.xlane.xlu0 %976
      %v978 = vsub.f32 %v970, %v977
      %v979 = vmul.f32 %v978, 1.442695
      %v980 = vpow.pop %v979
      %v981 = vsel %vm815, %v980, 0.0
      %982 = vadd.xlane.f32.xlu0 %v981
      %v983 = vpop.xlane.xlu0 %982
      %v984 = vrcp.pop %v983
      %v985 = vmul.f32 %v980, %v984
      %v986 = vpack.c.bf16 %v985, %v985
      %987 = vrot.lane.b32.xlu0 %v811, 56
      %v988 = vpop.permute.xlu0 %987
      %v990 = vsel %vm815, %v986, 0
      %v993 = vsel %vm879, %v988, 0
      %995 = vmatprep.subr.bf16.mxu0 0
      %996 = vmatpush1.bf16.msra.mxu0 0
      %997 = vmatprep.subr.bf16.mxu0 0
      %998 = vmatpush1.bf16.msra.mxu0 0
      %999 = vmatprep.subr.bf16.mxu0 0
      %1000 = vmatpush1.bf16.msra.mxu0 0
      %1001 = vmatprep.subr.bf16.mxu0 0
      %1002 = vmatpush1.bf16.msra.mxu0 0
      %1003 = vmatprep.subr.bf16.mxu0 0
      %1004 = vmatpush1.bf16.msra.mxu0 0
      %1005 = vmatprep.subr.bf16.mxu0 0
      %1006 = vmatpush1.bf16.msra.mxu0 0
      %1007 = vmatprep.subr.bf16.mxu0 0
      %1008 = vmatpush1.bf16.msra.mxu0 0
      %1009 = vmatprep.subr.bf16.mxu0 0
      %1010 = vmatpush1.bf16.msra.mxu0 %v993
      %1011 = vmatprep.subr.bf16.mxu0 0
      %1012 = vmatpush2.bf16.msra.mxu0 0
      %1013 = vmatprep.subr.bf16.mxu0 0
      %1014 = vmatpush2.bf16.msra.mxu0 0
      %1015 = vmatprep.subr.bf16.mxu0 0
      %1016 = vmatpush2.bf16.msra.mxu0 0
      %1017 = vmatprep.subr.bf16.mxu0 0
      %1018 = vmatpush2.bf16.msra.mxu0 0
      %1019 = vmatprep.subr.bf16.mxu0 0
      %1020 = vmatpush2.bf16.msra.mxu0 0
      %1021 = vmatprep.subr.bf16.mxu0 0
      %1022 = vmatpush2.bf16.msra.mxu0 0
      %1023 = vmatprep.subr.bf16.mxu0 0
      %1024 = vmatpush2.bf16.msra.mxu0 0
      %1025 = vmatprep.subr.bf16.mxu0 0
      %1026 = vmatpush2.bf16.msra.mxu0 0
      %1027 = vmatprep.mubr.bf16.mxu0 0
      %1028 = vmatmul.mubr.bf16.gmra.mxu0 %v990
      %v1029 = vpop.f32.mrf.mxu0
      %v1030 = vadd.f32 0.0, %v1029
      %v1031 = vpop.f32.mrf.mxu0
      %v1032 = vpop.f32.mrf.mxu0
      %v1033 = vpop.f32.mrf.mxu0
      %1034 = vdwg.mxu0
      %1036 = vrot.lane.b32.xlu0 %v1030, 8
      %v1037 = vpop.permute.xlu0 %1036
      %vm1039 = vcmask 130112
      %1040 = vst.msk [vmem:[#allocation2] sm:$0xff] %vm1039, %v1037
      %1041 = vrot.lane.b32.xlu0 %v810, 112
      %v1042 = vpop.permute.xlu0 %1041
      %1043 = vrot.lane.b32.xlu0 %v811, 80
      %v1044 = vpop.permute.xlu0 %1043
      %v1046 = vsel %vm815, %v1042, 0
      %v1049 = vsel %vm815, %v1044, 0
      %1051 = vmatprep.subr.bf16.mxu0 0
      %1052 = vmatpush1.bf16.xpose.msra.mxu0 0
      %1053 = vmatprep.subr.bf16.mxu0 0
      %1054 = vmatpush1.bf16.xpose.msra.mxu0 0
      %1055 = vmatprep.subr.bf16.mxu0 0
      %1056 = vmatpush1.bf16.xpose.msra.mxu0 0
      %1057 = vmatprep.subr.bf16.mxu0 0
      %1058 = vmatpush1.bf16.xpose.msra.mxu0 0
      %1059 = vmatprep.subr.bf16.mxu0 0
      %1060 = vmatpush1.bf16.xpose.msra.mxu0 0
      %1061 = vmatprep.subr.bf16.mxu0 0
      %1062 = vmatpush1.bf16.xpose.msra.mxu0 0
      %1063 = vmatprep.subr.bf16.mxu0 0
      %1064 = vmatpush1.bf16.xpose.msra.mxu0 0
      %1065 = vmatprep.subr.bf16.mxu0 0
      %1066 = vmatpush1.bf16.xpose.msra.mxu0 %v1049
      %1067 = vmatprep.subr.bf16.mxu0 0
      %1068 = vmatpush2.bf16.xpose.msra.mxu0 0
      %1069 = vmatprep.subr.bf16.mxu0 0
      %1070 = vmatpush2.bf16.xpose.msra.mxu0 0
      %1071 = vmatprep.subr.bf16.mxu0 0
      %1072 = vmatpush2.bf16.xpose.msra.mxu0 0
      %1073 = vmatprep.subr.bf16.mxu0 0
      %1074 = vmatpush2.bf16.xpose.msra.mxu0 0
      %1075 = vmatprep.subr.bf16.mxu0 0
      %1076 = vmatpush2.bf16.xpose.msra.mxu0 0
      %1077 = vmatprep.subr.bf16.mxu0 0
      %1078 = vmatpush2.bf16.xpose.msra.mxu0 0
      %1079 = vmatprep.subr.bf16.mxu0 0
      %1080 = vmatpush2.bf16.xpose.msra.mxu0 0
      %1081 = vmatprep.subr.bf16.mxu0 0
      %1082 = vmatpush2.bf16.xpose.msra.mxu0 0
      %1083 = vmatprep.mubr.bf16.mxu0 0
      %1084 = vmatmul.mubr.bf16.gmra.mxu0 %v1046
      %v1085 = vpop.f32.mrf.mxu0
      %v1086 = vadd.f32 %v801, %v1085
      %v1087 = vpop.f32.mrf.mxu0
      %v1088 = vpop.f32.mrf.mxu0
      %v1089 = vpop.f32.mrf.mxu0
      %1090 = vdwg.mxu0
      %v1091 = vsel %vm815, %v1086, -inf
      %1092 = vmax.xlane.f32.xlu0 %v1091
      %v1093 = vpop.xlane.xlu0 %1092
      %v1094 = vsub.f32 %v1086, %v1093
      %v1095 = vmul.f32 %v1094, 1.442695
      %v1096 = vpow.pop %v1095
      %v1097 = vsel %vm815, %v1096, 0.0
      %1098 = vadd.xlane.f32.xlu0 %v1097
      %v1099 = vpop.xlane.xlu0 %1098
      %v1100 = vrcp.pop %v1099
      %v1101 = vmul.f32 %v1096, %v1100
      %v1102 = vpack.c.bf16 %v1101, %v1101
      %1103 = vrot.lane.b32.xlu0 %v811, 48
      %v1104 = vpop.permute.xlu0 %1103
      %v1106 = vsel %vm815, %v1102, 0
      %v1109 = vsel %vm879, %v1104, 0
      %1111 = vmatprep.subr.bf16.mxu0 0
      %1112 = vmatpush1.bf16.msra.mxu0 0
      %1113 = vmatprep.subr.bf16.mxu0 0
      %1114 = vmatpush1.bf16.msra.mxu0 0
      %1115 = vmatprep.subr.bf16.mxu0 0
      %1116 = vmatpush1.bf16.msra.mxu0 0
      %1117 = vmatprep.subr.bf16.mxu0 0
      %1118 = vmatpush1.bf16.msra.mxu0 0
      %1119 = vmatprep.subr.bf16.mxu0 0
      %1120 = vmatpush1.bf16.msra.mxu0 0
      %1121 = vmatprep.subr.bf16.mxu0 0
      %1122 = vmatpush1.bf16.msra.mxu0 0
      %1123 = vmatprep.subr.bf16.mxu0 0
      %1124 = vmatpush1.bf16.msra.mxu0 0
      %1125 = vmatprep.subr.bf16.mxu0 0
      %1126 = vmatpush1.bf16.msra.mxu0 %v1109
      %1127 = vmatprep.subr.bf16.mxu0 0
      %1128 = vmatpush2.bf16.msra.mxu0 0
      %1129 = vmatprep.subr.bf16.mxu0 0
      %1130 = vmatpush2.bf16.msra.mxu0 0
      %1131 = vmatprep.subr.bf16.mxu0 0
      %1132 = vmatpush2.bf16.msra.mxu0 0
      %1133 = vmatprep.subr.bf16.mxu0 0
      %1134 = vmatpush2.bf16.msra.mxu0 0
      %1135 = vmatprep.subr.bf16.mxu0 0
      %1136 = vmatpush2.bf16.msra.mxu0 0
      %1137 = vmatprep.subr.bf16.mxu0 0
      %1138 = vmatpush2.bf16.msra.mxu0 0
      %1139 = vmatprep.subr.bf16.mxu0 0
      %1140 = vmatpush2.bf16.msra.mxu0 0
      %1141 = vmatprep.subr.bf16.mxu0 0
      %1142 = vmatpush2.bf16.msra.mxu0 0
      %1143 = vmatprep.mubr.bf16.mxu0 0
      %1144 = vmatmul.mubr.bf16.gmra.mxu0 %v1106
      %v1145 = vpop.f32.mrf.mxu0
      %v1146 = vadd.f32 0.0, %v1145
      %v1147 = vpop.f32.mrf.mxu0
      %v1148 = vpop.f32.mrf.mxu0
      %v1149 = vpop.f32.mrf.mxu0
      %1150 = vdwg.mxu0
      %1152 = vrot.lane.b32.xlu0 %v1146, 16
      %v1153 = vpop.permute.xlu0 %1152
      %vm1155 = vcmask 195712
      %1156 = vst.msk [vmem:[#allocation2] sm:$0xff] %vm1155, %v1153
      %1157 = vrot.lane.b32.xlu0 %v810, 104
      %v1158 = vpop.permute.xlu0 %1157
      %1159 = vrot.lane.b32.xlu0 %v811, 72
      %v1160 = vpop.permute.xlu0 %1159
      %v1162 = vsel %vm815, %v1158, 0
      %v1165 = vsel %vm815, %v1160, 0
      %1167 = vmatprep.subr.bf16.mxu0 0
      %1168 = vmatpush1.bf16.xpose.msra.mxu0 0
      %1169 = vmatprep.subr.bf16.mxu0 0
      %1170 = vmatpush1.bf16.xpose.msra.mxu0 0
      %1171 = vmatprep.subr.bf16.mxu0 0
      %1172 = vmatpush1.bf16.xpose.msra.mxu0 0
      %1173 = vmatprep.subr.bf16.mxu0 0
      %1174 = vmatpush1.bf16.xpose.msra.mxu0 0
      %1175 = vmatprep.subr.bf16.mxu0 0
      %1176 = vmatpush1.bf16.xpose.msra.mxu0 0
      %1177 = vmatprep.subr.bf16.mxu0 0
      %1178 = vmatpush1.bf16.xpose.msra.mxu0 0
      %1179 = vmatprep.subr.bf16.mxu0 0
      %1180 = vmatpush1.bf16.xpose.msra.mxu0 0
      %1181 = vmatprep.subr.bf16.mxu0 0
      %1182 = vmatpush1.bf16.xpose.msra.mxu0 %v1165
      %1183 = vmatprep.subr.bf16.mxu0 0
      %1184 = vmatpush2.bf16.xpose.msra.mxu0 0
      %1185 = vmatprep.subr.bf16.mxu0 0
      %1186 = vmatpush2.bf16.xpose.msra.mxu0 0
      %1187 = vmatprep.subr.bf16.mxu0 0
      %1188 = vmatpush2.bf16.xpose.msra.mxu0 0
      %1189 = vmatprep.subr.bf16.mxu0 0
      %1190 = vmatpush2.bf16.xpose.msra.mxu0 0
      %1191 = vmatprep.subr.bf16.mxu0 0
      %1192 = vmatpush2.bf16.xpose.msra.mxu0 0
      %1193 = vmatprep.subr.bf16.mxu0 0
      %1194 = vmatpush2.bf16.xpose.msra.mxu0 0
      %1195 = vmatprep.subr.bf16.mxu0 0
      %1196 = vmatpush2.bf16.xpose.msra.mxu0 0
      %1197 = vmatprep.subr.bf16.mxu0 0
      %1198 = vmatpush2.bf16.xpose.msra.mxu0 0
      %1199 = vmatprep.mubr.bf16.mxu0 0
      %1200 = vmatmul.mubr.bf16.gmra.mxu0 %v1162
      %v1201 = vpop.f32.mrf.mxu0
      %v1202 = vadd.f32 %v801, %v1201
      %v1203 = vpop.f32.mrf.mxu0
      %v1204 = vpop.f32.mrf.mxu0
      %v1205 = vpop.f32.mrf.mxu0
      %1206 = vdwg.mxu0
      %v1207 = vsel %vm815, %v1202, -inf
      %1208 = vmax.xlane.f32.xlu0 %v1207
      %v1209 = vpop.xlane.xlu0 %1208
      %v1210 = vsub.f32 %v1202, %v1209
      %v1211 = vmul.f32 %v1210, 1.442695
      %v1212 = vpow.pop %v1211
      %v1213 = vsel %vm815, %v1212, 0.0
      %1214 = vadd.xlane.f32.xlu0 %v1213
      %v1215 = vpop.xlane.xlu0 %1214
      %v1216 = vrcp.pop %v1215
      %v1217 = vmul.f32 %v1212, %v1216
      %v1218 = vpack.c.bf16 %v1217, %v1217
      %1219 = vrot.lane.b32.xlu0 %v811, 40
      %v1220 = vpop.permute.xlu0 %1219
      %v1222 = vsel %vm815, %v1218, 0
      %v1225 = vsel %vm879, %v1220, 0
      %1227 = vmatprep.subr.bf16.mxu0 0
      %1228 = vmatpush1.bf16.msra.mxu0 0
      %1229 = vmatprep.subr.bf16.mxu0 0
      %1230 = vmatpush1.bf16.msra.mxu0 0
      %1231 = vmatprep.subr.bf16.mxu0 0
      %1232 = vmatpush1.bf16.msra.mxu0 0
      %1233 = vmatprep.subr.bf16.mxu0 0
      %1234 = vmatpush1.bf16.msra.mxu0 0
      %1235 = vmatprep.subr.bf16.mxu0 0
      %1236 = vmatpush1.bf16.msra.mxu0 0
      %1237 = vmatprep.subr.bf16.mxu0 0
      %1238 = vmatpush1.bf16.msra.mxu0 0
      %1239 = vmatprep.subr.bf16.mxu0 0
      %1240 = vmatpush1.bf16.msra.mxu0 0
      %1241 = vmatprep.subr.bf16.mxu0 0
      %1242 = vmatpush1.bf16.msra.mxu0 %v1225
      %1243 = vmatprep.subr.bf16.mxu0 0
      %1244 = vmatpush2.bf16.msra.mxu0 0
      %1245 = vmatprep.subr.bf16.mxu0 0
      %1246 = vmatpush2.bf16.msra.mxu0 0
      %1247 = vmatprep.subr.bf16.mxu0 0
      %1248 = vmatpush2.bf16.msra.mxu0 0
      %1249 = vmatprep.subr.bf16.mxu0 0
      %1250 = vmatpush2.bf16.msra.mxu0 0
      %1251 = vmatprep.subr.bf16.mxu0 0
      %1252 = vmatpush2.bf16.msra.mxu0 0
      %1253 = vmatprep.subr.bf16.mxu0 0
      %1254 = vmatpush2.bf16.msra.mxu0 0
      %1255 = vmatprep.subr.bf16.mxu0 0
      %1256 = vmatpush2.bf16.msra.mxu0 0
      %1257 = vmatprep.subr.bf16.mxu0 0
      %1258 = vmatpush2.bf16.msra.mxu0 0
      %1259 = vmatprep.mubr.bf16.mxu0 0
      %1260 = vmatmul.mubr.bf16.gmra.mxu0 %v1222
      %v1261 = vpop.f32.mrf.mxu0
      %v1262 = vadd.f32 0.0, %v1261
      %v1263 = vpop.f32.mrf.mxu0
      %v1264 = vpop.f32.mrf.mxu0
      %v1265 = vpop.f32.mrf.mxu0
      %1266 = vdwg.mxu0
      %1268 = vrot.lane.b32.xlu0 %v1262, 24
      %v1269 = vpop.permute.xlu0 %1268
      %vm1271 = vcmask 261312
      %1272 = vst.msk [vmem:[#allocation2] sm:$0xff] %vm1271, %v1269
      %v1273 = vld [vmem:[#allocation2] sm:$0xff]
      %v1274 = vpack.c.bf16 %v1273, %v1273
      %v1276 = vlaneseq
      %v1277 = vshrl.u32 %v1276, 7
      %v1278 = vsub.s32 0, %v1277
      %v1279 = vrot.slane %v806, %v1278
      %v1285 = vunpack.c.l.b16 %v802
      %v1286 = vunpack.c.l.b16 %v803
      %v1287 = vunpack.c.l.b16 %v804
      %v1288 = vunpack.c.l.b16 %v805
      %v1289 = vpack.c.b16 %v1286, %v1285
      %v1290 = vpack.c.b16 %v1288, %v1287
      %v1294 = vsel %vm757, %v1274, 0
      %1296 = vmatprep.subr.bf16.mxu0 0
      %1297 = vmatpush1.bf16.msra.mxu0 0
      %1298 = vmatprep.subr.bf16.mxu0 0
      %1299 = vmatpush1.bf16.msra.mxu0 0
      %1300 = vmatprep.subr.bf16.mxu0 0
      %1301 = vmatpush1.bf16.msra.mxu0 0
      %1302 = vmatprep.subr.bf16.mxu0 0
      %1303 = vmatpush1.bf16.msra.mxu0 0
      %1304 = vmatprep.subr.bf16.mxu0 0
      %1305 = vmatpush1.bf16.msra.mxu0 0
      %1306 = vmatprep.subr.bf16.mxu0 0
      %1307 = vmatpush1.bf16.msra.mxu0 0
      %1308 = vmatprep.subr.bf16.mxu0 0
      %1309 = vmatpush1.bf16.msra.mxu0 %v1290
      %1310 = vmatprep.subr.bf16.mxu0 0
      %1311 = vmatpush1.bf16.msra.mxu0 %v1289
      %1312 = vmatprep.subr.bf16.mxu0 0
      %1313 = vmatpush2.bf16.msra.mxu0 0
      %1314 = vmatprep.subr.bf16.mxu0 0
      %1315 = vmatpush2.bf16.msra.mxu0 0
      %1316 = vmatprep.subr.bf16.mxu0 0
      %1317 = vmatpush2.bf16.msra.mxu0 0
      %1318 = vmatprep.subr.bf16.mxu0 0
      %1319 = vmatpush2.bf16.msra.mxu0 0
      %1320 = vmatprep.subr.bf16.mxu0 0
      %1321 = vmatpush2.bf16.msra.mxu0 0
      %1322 = vmatprep.subr.bf16.mxu0 0
      %1323 = vmatpush2.bf16.msra.mxu0 0
      %1324 = vmatprep.subr.bf16.mxu0 0
      %1325 = vmatpush2.bf16.msra.mxu0 0
      %1326 = vmatprep.subr.bf16.mxu0 0
      %1327 = vmatpush2.bf16.msra.mxu0 0
      %1328 = vmatprep.mubr.bf16.mxu0 0
      %1329 = vmatmul.mubr.bf16.gmra.mxu0 %v1294
      %v1330 = vpop.f32.mrf.mxu0
      %v1331 = vadd.f32 %v1279, %v1330
      %v1332 = vpop.f32.mrf.mxu0
      %v1333 = vpop.f32.mrf.mxu0
      %v1334 = vpop.f32.mrf.mxu0
      %1335 = vdwg.mxu0
      %v1336 = vadd.f32 %v1331, %v731
      %v1337 = vsel %vm757, %v1336, 0.0
      %1338 = vadd.xlane.f32.xlu0 %v1337
      %v1339 = vpop.xlane.xlu0 %1338
      %v1340 = vrcp.pop 32.0
      %v1341 = vmul.f32 %v1339, %v1340
      %v1342 = vsub.f32 %v1336, %v1341
      %v1343 = vmul.f32 %v1342, %v1342
      %v1344 = vsel %vm757, %v1343, 0.0
      %1345 = vadd.xlane.f32.xlu0 %v1344
      %v1346 = vpop.xlane.xlu0 %1345
      %v1347 = vmul.f32 %v1346, %v1340
      %v1348 = vadd.f32 %v1347, 1e-05
      %v1349 = vrsqrt.pop %v1348
      %v1350 = vmul.f32 %v1342, %v1349
      %v1352 = vlaneseq
      %v1353 = vshrl.u32 %v1352, 7
      %v1354 = vsub.s32 0, %v1353
      %v1355 = vrot.slane %v807, %v1354
      %v1357 = vmul.f32 %v1350, %v1355
      %v1359 = vlaneseq
      %v1360 = vshrl.u32 %v1359, 7
      %v1361 = vsub.s32 0, %v1360
      %v1362 = vrot.slane %v808, %v1361
      %v1364 = vadd.f32 %v1357, %v1362
      %v1365 = vld [vmem:[%s10] sm:$0xf]
      %v1366 = vld [vmem:[%s10 + $0x4] sm:$0xf]
      %v1367 = vld [vmem:[%s10 + $0x8] sm:$0xf]
      %v1368 = vld [vmem:[%s10 + $0xc] sm:$0xf]
      %v1369 = vld [vmem:[%s11] sm:$0x1]
      %v1370 = vpack.c.bf16 %v1364, %v1364
      %v1372 = vlaneseq
      %v1373 = vshrl.u32 %v1372, 7
      %v1374 = vsub.s32 0, %v1373
      %v1375 = vrot.slane %v1369, %v1374
      %v1381 = vunpack.c.l.b16 %v1365
      %v1382 = vunpack.c.l.b16 %v1366
      %v1383 = vunpack.c.l.b16 %v1367
      %v1384 = vunpack.c.l.b16 %v1368
      %v1385 = vpack.c.b16 %v1382, %v1381
      %v1386 = vpack.c.b16 %v1384, %v1383
      %v1390 = vsel %vm757, %v1370, 0
      %1392 = vmatprep.subr.bf16.mxu0 0
      %1393 = vmatpush1.bf16.msra.mxu0 0
      %1394 = vmatprep.subr.bf16.mxu0 0
      %1395 = vmatpush1.bf16.msra.mxu0 0
      %1396 = vmatprep.subr.bf16.mxu0 0
      %1397 = vmatpush1.bf16.msra.mxu0 0
      %1398 = vmatprep.subr.bf16.mxu0 0
      %1399 = vmatpush1.bf16.msra.mxu0 0
      %1400 = vmatprep.subr.bf16.mxu0 0
      %1401 = vmatpush1.bf16.msra.mxu0 0
      %1402 = vmatprep.subr.bf16.mxu0 0
      %1403 = vmatpush1.bf16.msra.mxu0 0
      %1404 = vmatprep.subr.bf16.mxu0 0
      %1405 = vmatpush1.bf16.msra.mxu0 %v1386
      %1406 = vmatprep.subr.bf16.mxu0 0
      %1407 = vmatpush1.bf16.msra.mxu0 %v1385
      %1408 = vmatprep.subr.bf16.mxu0 0
      %1409 = vmatpush2.bf16.msra.mxu0 0
      %1410 = vmatprep.subr.bf16.mxu0 0
      %1411 = vmatpush2.bf16.msra.mxu0 0
      %1412 = vmatprep.subr.bf16.mxu0 0
      %1413 = vmatpush2.bf16.msra.mxu0 0
      %1414 = vmatprep.subr.bf16.mxu0 0
      %1415 = vmatpush2.bf16.msra.mxu0 0
      %1416 = vmatprep.subr.bf16.mxu0 0
      %1417 = vmatpush2.bf16.msra.mxu0 0
      %1418 = vmatprep.subr.bf16.mxu0 0
      %1419 = vmatpush2.bf16.msra.mxu0 0
      %1420 = vmatprep.subr.bf16.mxu0 0
      %1421 = vmatpush2.bf16.msra.mxu0 0
      %1422 = vmatprep.subr.bf16.mxu0 0
      %1423 = vmatpush2.bf16.msra.mxu0 0
      %1424 = vmatprep.mubr.bf16.mxu0 0
      %1425 = vmatmul.mubr.bf16.gmra.mxu0 %v1390
      %v1426 = vpop.f32.mrf.mxu0
      %v1427 = vadd.f32 %v1375, %v1426
      %v1428 = vpop.f32.mrf.mxu0
      %v1429 = vpop.f32.mrf.mxu0
      %v1430 = vpop.f32.mrf.mxu0
      %1431 = vdwg.mxu0
      %1432 = vrot.lane.b32.xlu0 %v1385, 96
      %v1433 = vpop.permute.xlu0 %1432
      %1434 = vrot.lane.b32.xlu0 %v1386, 96
      %v1435 = vpop.permute.xlu0 %1434
      %1438 = vrot.lane.b32.xlu0 %v1375, 96
      %v1439 = vpop.permute.xlu0 %1438
      %v1442 = vsel %vm757, %v732, 0
      %1444 = vmatprep.subr.bf16.mxu0 0
      %1445 = vmatpush1.bf16.msra.mxu0 0
      %1446 = vmatprep.subr.bf16.mxu0 0
      %1447 = vmatpush1.bf16.msra.mxu0 0
      %1448 = vmatprep.subr.bf16.mxu0 0
      %1449 = vmatpush1.bf16.msra.mxu0 0
      %1450 = vmatprep.subr.bf16.mxu0 0
      %1451 = vmatpush1.bf16.msra.mxu0 0
      %1452 = vmatprep.subr.bf16.mxu0 0
      %1453 = vmatpush1.bf16.msra.mxu0 0
      %1454 = vmatprep.subr.bf16.mxu0 0
      %1455 = vmatpush1.bf16.msra.mxu0 0
      %1456 = vmatprep.subr.bf16.mxu0 0
      %1457 = vmatpush1.bf16.msra.mxu0 %v1435
      %1458 = vmatprep.subr.bf16.mxu0 0
      %1459 = vmatpush1.bf16.msra.mxu0 %v1433
      %1460 = vmatprep.subr.bf16.mxu0 0
      %1461 = vmatpush2.bf16.msra.mxu0 0
      %1462 = vmatprep.subr.bf16.mxu0 0
      %1463 = vmatpush2.bf16.msra.mxu0 0
      %1464 = vmatprep.subr.bf16.mxu0 0
      %1465 = vmatpush2.bf16.msra.mxu0 0
      %1466 = vmatprep.subr.bf16.mxu0 0
      %1467 = vmatpush2.bf16.msra.mxu0 0
      %1468 = vmatprep.subr.bf16.mxu0 0
      %1469 = vmatpush2.bf16.msra.mxu0 0
      %1470 = vmatprep.subr.bf16.mxu0 0
      %1471 = vmatpush2.bf16.msra.mxu0 0
      %1472 = vmatprep.subr.bf16.mxu0 0
      %1473 = vmatpush2.bf16.msra.mxu0 0
      %1474 = vmatprep.subr.bf16.mxu0 0
      %1475 = vmatpush2.bf16.msra.mxu0 0
      %1476 = vmatprep.mubr.bf16.mxu0 0
      %1477 = vmatmul.mubr.bf16.gmra.mxu0 %v1442
      %v1478 = vpop.f32.mrf.mxu0
      %v1479 = vadd.f32 %v1439, %v1478
      %v1480 = vpop.f32.mrf.mxu0
      %v1481 = vpop.f32.mrf.mxu0
      %v1482 = vpop.f32.mrf.mxu0
      %1483 = vdwg.mxu0
      %v1484 = vld [vmem:[%s725] sm:$0xff]
      %v1485 = vld [vmem:[%s12] sm:$0xf]
      %v1486 = vld [vmem:[%s12 + $0x4] sm:$0xf]
      %v1487 = vld [vmem:[%s12 + $0x8] sm:$0xf]
      %v1488 = vld [vmem:[%s12 + $0xc] sm:$0xf]
      %v1489 = vld [vmem:[%s13] sm:$0x1]
      %v1490 = vld [vmem:[%s14] sm:$0x1]
      %v1491 = vld [vmem:[%s15] sm:$0x1]
      %v1492 = vmul.f32 %v1427, 0.35355338
      %v1493 = vpack.c.bf16 %v1492, %v1492
      %v1494 = vpack.c.bf16 %v1479, %v1479
      %v1496 = vsel %vm815, %v1493, 0
      %v1499 = vsel %vm815, %v1494, 0
      %1501 = vmatprep.subr.bf16.mxu0 0
      %1502 = vmatpush1.bf16.xpose.msra.mxu0 0
      %1503 = vmatprep.subr.bf16.mxu0 0
      %1504 = vmatpush1.bf16.xpose.msra.mxu0 0
      %1505 = vmatprep.subr.bf16.mxu0 0
      %1506 = vmatpush1.bf16.xpose.msra.mxu0 0
      %1507 = vmatprep.subr.bf16.mxu0 0
      %1508 = vmatpush1.bf16.xpose.msra.mxu0 0
      %1509 = vmatprep.subr.bf16.mxu0 0
      %1510 = vmatpush1.bf16.xpose.msra.mxu0 0
      %1511 = vmatprep.subr.bf16.mxu0 0
      %1512 = vmatpush1.bf16.xpose.msra.mxu0 0
      %1513 = vmatprep.subr.bf16.mxu0 0
      %1514 = vmatpush1.bf16.xpose.msra.mxu0 0
      %1515 = vmatprep.subr.bf16.mxu0 0
      %1516 = vmatpush1.bf16.xpose.msra.mxu0 %v1499
      %1517 = vmatprep.subr.bf16.mxu0 0
      %1518 = vmatpush2.bf16.xpose.msra.mxu0 0
      %1519 = vmatprep.subr.bf16.mxu0 0
      %1520 = vmatpush2.bf16.xpose.msra.mxu0 0
      %1521 = vmatprep.subr.bf16.mxu0 0
      %1522 = vmatpush2.bf16.xpose.msra.mxu0 0
      %1523 = vmatprep.subr.bf16.mxu0 0
      %1524 = vmatpush2.bf16.xpose.msra.mxu0 0
      %1525 = vmatprep.subr.bf16.mxu0 0
      %1526 = vmatpush2.bf16.xpose.msra.mxu0 0
      %1527 = vmatprep.subr.bf16.mxu0 0
      %1528 = vmatpush2.bf16.xpose.msra.mxu0 0
      %1529 = vmatprep.subr.bf16.mxu0 0
      %1530 = vmatpush2.bf16.xpose.msra.mxu0 0
      %1531 = vmatprep.subr.bf16.mxu0 0
      %1532 = vmatpush2.bf16.xpose.msra.mxu0 0
      %1533 = vmatprep.mubr.bf16.mxu0 0
      %1534 = vmatmul.mubr.bf16.gmra.mxu0 %v1496
      %v1535 = vpop.f32.mrf.mxu0
      %v1536 = vadd.f32 %v1484, %v1535
      %v1537 = vpop.f32.mrf.mxu0
      %v1538 = vpop.f32.mrf.mxu0
      %v1539 = vpop.f32.mrf.mxu0
      %1540 = vdwg.mxu0
      %v1541 = vsel %vm815, %v1536, -inf
      %1542 = vmax.xlane.f32.xlu0 %v1541
      %v1543 = vpop.xlane.xlu0 %1542
      %v1544 = vsub.f32 %v1536, %v1543
      %v1545 = vmul.f32 %v1544, 1.442695
      %v1546 = vpow.pop %v1545
      %v1547 = vsel %vm815, %v1546, 0.0
      %1548 = vadd.xlane.f32.xlu0 %v1547
      %v1549 = vpop.xlane.xlu0 %1548
      %v1550 = vrcp.pop %v1549
      %v1551 = vmul.f32 %v1546, %v1550
      %v1552 = vpack.c.bf16 %v1551, %v1551
      %1554 = vrot.lane.b32.xlu0 %v1494, 96
      %v1555 = vpop.permute.xlu0 %1554
      %v1557 = vsel %vm815, %v1552, 0
      %v1560 = vsel %vm879, %v1555, 0
      %1562 = vmatprep.subr.bf16.mxu0 0
      %1563 = vmatpush1.bf16.msra.mxu0 0
      %1564 = vmatprep.subr.bf16.mxu0 0
      %1565 = vmatpush1.bf16.msra.mxu0 0
      %1566 = vmatprep.subr.bf16.mxu0 0
      %1567 = vmatpush1.bf16.msra.mxu0 0
      %1568 = vmatprep.subr.bf16.mxu0 0
      %1569 = vmatpush1.bf16.msra.mxu0 0
      %1570 = vmatprep.subr.bf16.mxu0 0
      %1571 = vmatpush1.bf16.msra.mxu0 0
      %1572 = vmatprep.subr.bf16.mxu0 0
      %1573 = vmatpush1.bf16.msra.mxu0 0
      %1574 = vmatprep.subr.bf16.mxu0 0
      %1575 = vmatpush1.bf16.msra.mxu0 0
      %1576 = vmatprep.subr.bf16.mxu0 0
      %1577 = vmatpush1.bf16.msra.mxu0 %v1560
      %1578 = vmatprep.subr.bf16.mxu0 0
      %1579 = vmatpush2.bf16.msra.mxu0 0
      %1580 = vmatprep.subr.bf16.mxu0 0
      %1581 = vmatpush2.bf16.msra.mxu0 0
      %1582 = vmatprep.subr.bf16.mxu0 0
      %1583 = vmatpush2.bf16.msra.mxu0 0
      %1584 = vmatprep.subr.bf16.mxu0 0
      %1585 = vmatpush2.bf16.msra.mxu0 0
      %1586 = vmatprep.subr.bf16.mxu0 0
      %1587 = vmatpush2.bf16.msra.mxu0 0
      %1588 = vmatprep.subr.bf16.mxu0 0
      %1589 = vmatpush2.bf16.msra.mxu0 0
      %1590 = vmatprep.subr.bf16.mxu0 0
      %1591 = vmatpush2.bf16.msra.mxu0 0
      %1592 = vmatprep.subr.bf16.mxu0 0
      %1593 = vmatpush2.bf16.msra.mxu0 0
      %1594 = vmatprep.mubr.bf16.mxu0 0
      %1595 = vmatmul.mubr.bf16.gmra.mxu0 %v1557
      %v1596 = vpop.f32.mrf.mxu0
      %v1597 = vadd.f32 0.0, %v1596
      %v1598 = vpop.f32.mrf.mxu0
      %v1599 = vpop.f32.mrf.mxu0
      %v1600 = vpop.f32.mrf.mxu0
      %1601 = vdwg.mxu0
      %1602 = vst.msk [vmem:[#allocation2] sm:$0xff] %vm815, %v1597
      %1604 = vrot.lane.b32.xlu0 %v1493, 120
      %v1605 = vpop.permute.xlu0 %1604
      %1606 = vrot.lane.b32.xlu0 %v1494, 120
      %v1607 = vpop.permute.xlu0 %1606
      %v1609 = vsel %vm815, %v1605, 0
      %v1612 = vsel %vm815, %v1607, 0
      %1614 = vmatprep.subr.bf16.mxu0 0
      %1615 = vmatpush1.bf16.xpose.msra.mxu0 0
      %1616 = vmatprep.subr.bf16.mxu0 0
      %1617 = vmatpush1.bf16.xpose.msra.mxu0 0
      %1618 = vmatprep.subr.bf16.mxu0 0
      %1619 = vmatpush1.bf16.xpose.msra.mxu0 0
      %1620 = vmatprep.subr.bf16.mxu0 0
      %1621 = vmatpush1.bf16.xpose.msra.mxu0 0
      %1622 = vmatprep.subr.bf16.mxu0 0
      %1623 = vmatpush1.bf16.xpose.msra.mxu0 0
      %1624 = vmatprep.subr.bf16.mxu0 0
      %1625 = vmatpush1.bf16.xpose.msra.mxu0 0
      %1626 = vmatprep.subr.bf16.mxu0 0
      %1627 = vmatpush1.bf16.xpose.msra.mxu0 0
      %1628 = vmatprep.subr.bf16.mxu0 0
      %1629 = vmatpush1.bf16.xpose.msra.mxu0 %v1612
      %1630 = vmatprep.subr.bf16.mxu0 0
      %1631 = vmatpush2.bf16.xpose.msra.mxu0 0
      %1632 = vmatprep.subr.bf16.mxu0 0
      %1633 = vmatpush2.bf16.xpose.msra.mxu0 0
      %1634 = vmatprep.subr.bf16.mxu0 0
      %1635 = vmatpush2.bf16.xpose.msra.mxu0 0
      %1636 = vmatprep.subr.bf16.mxu0 0
      %1637 = vmatpush2.bf16.xpose.msra.mxu0 0
      %1638 = vmatprep.subr.bf16.mxu0 0
      %1639 = vmatpush2.bf16.xpose.msra.mxu0 0
      %1640 = vmatprep.subr.bf16.mxu0 0
      %1641 = vmatpush2.bf16.xpose.msra.mxu0 0
      %1642 = vmatprep.subr.bf16.mxu0 0
      %1643 = vmatpush2.bf16.xpose.msra.mxu0 0
      %1644 = vmatprep.subr.bf16.mxu0 0
      %1645 = vmatpush2.bf16.xpose.msra.mxu0 0
      %1646 = vmatprep.mubr.bf16.mxu0 0
      %1647 = vmatmul.mubr.bf16.gmra.mxu0 %v1609
      %v1648 = vpop.f32.mrf.mxu0
      %v1649 = vadd.f32 %v1484, %v1648
      %v1650 = vpop.f32.mrf.mxu0
      %v1651 = vpop.f32.mrf.mxu0
      %v1652 = vpop.f32.mrf.mxu0
      %1653 = vdwg.mxu0
      %v1654 = vsel %vm815, %v1649, -inf
      %1655 = vmax.xlane.f32.xlu0 %v1654
      %v1656 = vpop.xlane.xlu0 %1655
      %v1657 = vsub.f32 %v1649, %v1656
      %v1658 = vmul.f32 %v1657, 1.442695
      %v1659 = vpow.pop %v1658
      %v1660 = vsel %vm815, %v1659, 0.0
      %1661 = vadd.xlane.f32.xlu0 %v1660
      %v1662 = vpop.xlane.xlu0 %1661
      %v1663 = vrcp.pop %v1662
      %v1664 = vmul.f32 %v1659, %v1663
      %v1665 = vpack.c.bf16 %v1664, %v1664
      %1666 = vrot.lane.b32.xlu0 %v1494, 88
      %v1667 = vpop.permute.xlu0 %1666
      %v1669 = vsel %vm815, %v1665, 0
      %v1672 = vsel %vm879, %v1667, 0
      %1674 = vmatprep.subr.bf16.mxu0 0
      %1675 = vmatpush1.bf16.msra.mxu0 0
      %1676 = vmatprep.subr.bf16.mxu0 0
      %1677 = vmatpush1.bf16.msra.mxu0 0
      %1678 = vmatprep.subr.bf16.mxu0 0
      %1679 = vmatpush1.bf16.msra.mxu0 0
      %1680 = vmatprep.subr.bf16.mxu0 0
      %1681 = vmatpush1.bf16.msra.mxu0 0
      %1682 = vmatprep.subr.bf16.mxu0 0
      %1683 = vmatpush1.bf16.msra.mxu0 0
      %1684 = vmatprep.subr.bf16.mxu0 0
      %1685 = vmatpush1.bf16.msra.mxu0 0
      %1686 = vmatprep.subr.bf16.mxu0 0
      %1687 = vmatpush1.bf16.msra.mxu0 0
      %1688 = vmatprep.subr.bf16.mxu0 0
      %1689 = vmatpush1.bf16.msra.mxu0 %v1672
      %1690 = vmatprep.subr.bf16.mxu0 0
      %1691 = vmatpush2.bf16.msra.mxu0 0
      %1692 = vmatprep.subr.bf16.mxu0 0
      %1693 = vmatpush2.bf16.msra.mxu0 0
      %1694 = vmatprep.subr.bf16.mxu0 0
      %1695 = vmatpush2.bf16.msra.mxu0 0
      %1696 = vmatprep.subr.bf16.mxu0 0
      %1697 = vmatpush2.bf16.msra.mxu0 0
      %1698 = vmatprep.subr.bf16.mxu0 0
      %1699 = vmatpush2.bf16.msra.mxu0 0
      %1700 = vmatprep.subr.bf16.mxu0 0
      %1701 = vmatpush2.bf16.msra.mxu0 0
      %1702 = vmatprep.subr.bf16.mxu0 0
      %1703 = vmatpush2.bf16.msra.mxu0 0
      %1704 = vmatprep.subr.bf16.mxu0 0
      %1705 = vmatpush2.bf16.msra.mxu0 0
      %1706 = vmatprep.mubr.bf16.mxu0 0
      %1707 = vmatmul.mubr.bf16.gmra.mxu0 %v1669
      %v1708 = vpop.f32.mrf.mxu0
      %v1709 = vadd.f32 0.0, %v1708
      %v1710 = vpop.f32.mrf.mxu0
      %v1711 = vpop.f32.mrf.mxu0
      %v1712 = vpop.f32.mrf.mxu0
      %1713 = vdwg.mxu0
      %1715 = vrot.lane.b32.xlu0 %v1709, 8
      %v1716 = vpop.permute.xlu0 %1715
      %1718 = vst.msk [vmem:[#allocation2] sm:$0xff] %vm1039, %v1716
      %1719 = vrot.lane.b32.xlu0 %v1493, 112
      %v1720 = vpop.permute.xlu0 %1719
      %1721 = vrot.lane.b32.xlu0 %v1494, 112
      %v1722 = vpop.permute.xlu0 %1721
      %v1724 = vsel %vm815, %v1720, 0
      %v1727 = vsel %vm815, %v1722, 0
      %1729 = vmatprep.subr.bf16.mxu0 0
      %1730 = vmatpush1.bf16.xpose.msra.mxu0 0
      %1731 = vmatprep.subr.bf16.mxu0 0
      %1732 = vmatpush1.bf16.xpose.msra.mxu0 0
      %1733 = vmatprep.subr.bf16.mxu0 0
      %1734 = vmatpush1.bf16.xpose.msra.mxu0 0
      %1735 = vmatprep.subr.bf16.mxu0 0
      %1736 = vmatpush1.bf16.xpose.msra.mxu0 0
      %1737 = vmatprep.subr.bf16.mxu0 0
      %1738 = vmatpush1.bf16.xpose.msra.mxu0 0
      %1739 = vmatprep.subr.bf16.mxu0 0
      %1740 = vmatpush1.bf16.xpose.msra.mxu0 0
      %1741 = vmatprep.subr.bf16.mxu0 0
      %1742 = vmatpush1.bf16.xpose.msra.mxu0 0
      %1743 = vmatprep.subr.bf16.mxu0 0
      %1744 = vmatpush1.bf16.xpose.msra.mxu0 %v1727
      %1745 = vmatprep.subr.bf16.mxu0 0
      %1746 = vmatpush2.bf16.xpose.msra.mxu0 0
      %1747 = vmatprep.subr.bf16.mxu0 0
      %1748 = vmatpush2.bf16.xpose.msra.mxu0 0
      %1749 = vmatprep.subr.bf16.mxu0 0
      %1750 = vmatpush2.bf16.xpose.msra.mxu0 0
      %1751 = vmatprep.subr.bf16.mxu0 0
      %1752 = vmatpush2.bf16.xpose.msra.mxu0 0
      %1753 = vmatprep.subr.bf16.mxu0 0
      %1754 = vmatpush2.bf16.xpose.msra.mxu0 0
      %1755 = vmatprep.subr.bf16.mxu0 0
      %1756 = vmatpush2.bf16.xpose.msra.mxu0 0
      %1757 = vmatprep.subr.bf16.mxu0 0
      %1758 = vmatpush2.bf16.xpose.msra.mxu0 0
      %1759 = vmatprep.subr.bf16.mxu0 0
      %1760 = vmatpush2.bf16.xpose.msra.mxu0 0
      %1761 = vmatprep.mubr.bf16.mxu0 0
      %1762 = vmatmul.mubr.bf16.gmra.mxu0 %v1724
      %v1763 = vpop.f32.mrf.mxu0
      %v1764 = vadd.f32 %v1484, %v1763
      %v1765 = vpop.f32.mrf.mxu0
      %v1766 = vpop.f32.mrf.mxu0
      %v1767 = vpop.f32.mrf.mxu0
      %1768 = vdwg.mxu0
      %v1769 = vsel %vm815, %v1764, -inf
      %1770 = vmax.xlane.f32.xlu0 %v1769
      %v1771 = vpop.xlane.xlu0 %1770
      %v1772 = vsub.f32 %v1764, %v1771
      %v1773 = vmul.f32 %v1772, 1.442695
      %v1774 = vpow.pop %v1773
      %v1775 = vsel %vm815, %v1774, 0.0
      %1776 = vadd.xlane.f32.xlu0 %v1775
      %v1777 = vpop.xlane.xlu0 %1776
      %v1778 = vrcp.pop %v1777
      %v1779 = vmul.f32 %v1774, %v1778
      %v1780 = vpack.c.bf16 %v1779, %v1779
      %1781 = vrot.lane.b32.xlu0 %v1494, 80
      %v1782 = vpop.permute.xlu0 %1781
      %v1784 = vsel %vm815, %v1780, 0
      %v1787 = vsel %vm879, %v1782, 0
      %1789 = vmatprep.subr.bf16.mxu0 0
      %1790 = vmatpush1.bf16.msra.mxu0 0
      %1791 = vmatprep.subr.bf16.mxu0 0
      %1792 = vmatpush1.bf16.msra.mxu0 0
      %1793 = vmatprep.subr.bf16.mxu0 0
      %1794 = vmatpush1.bf16.msra.mxu0 0
      %1795 = vmatprep.subr.bf16.mxu0 0
      %1796 = vmatpush1.bf16.msra.mxu0 0
      %1797 = vmatprep.subr.bf16.mxu0 0
      %1798 = vmatpush1.bf16.msra.mxu0 0
      %1799 = vmatprep.subr.bf16.mxu0 0
      %1800 = vmatpush1.bf16.msra.mxu0 0
      %1801 = vmatprep.subr.bf16.mxu0 0
      %1802 = vmatpush1.bf16.msra.mxu0 0
      %1803 = vmatprep.subr.bf16.mxu0 0
      %1804 = vmatpush1.bf16.msra.mxu0 %v1787
      %1805 = vmatprep.subr.bf16.mxu0 0
      %1806 = vmatpush2.bf16.msra.mxu0 0
      %1807 = vmatprep.subr.bf16.mxu0 0
      %1808 = vmatpush2.bf16.msra.mxu0 0
      %1809 = vmatprep.subr.bf16.mxu0 0
      %1810 = vmatpush2.bf16.msra.mxu0 0
      %1811 = vmatprep.subr.bf16.mxu0 0
      %1812 = vmatpush2.bf16.msra.mxu0 0
      %1813 = vmatprep.subr.bf16.mxu0 0
      %1814 = vmatpush2.bf16.msra.mxu0 0
      %1815 = vmatprep.subr.bf16.mxu0 0
      %1816 = vmatpush2.bf16.msra.mxu0 0
      %1817 = vmatprep.subr.bf16.mxu0 0
      %1818 = vmatpush2.bf16.msra.mxu0 0
      %1819 = vmatprep.subr.bf16.mxu0 0
      %1820 = vmatpush2.bf16.msra.mxu0 0
      %1821 = vmatprep.mubr.bf16.mxu0 0
      %1822 = vmatmul.mubr.bf16.gmra.mxu0 %v1784
      %v1823 = vpop.f32.mrf.mxu0
      %v1824 = vadd.f32 0.0, %v1823
      %v1825 = vpop.f32.mrf.mxu0
      %v1826 = vpop.f32.mrf.mxu0
      %v1827 = vpop.f32.mrf.mxu0
      %1828 = vdwg.mxu0
      %1830 = vrot.lane.b32.xlu0 %v1824, 16
      %v1831 = vpop.permute.xlu0 %1830
      %1833 = vst.msk [vmem:[#allocation2] sm:$0xff] %vm1155, %v1831
      %1834 = vrot.lane.b32.xlu0 %v1493, 104
      %v1835 = vpop.permute.xlu0 %1834
      %1836 = vrot.lane.b32.xlu0 %v1494, 104
      %v1837 = vpop.permute.xlu0 %1836
      %v1839 = vsel %vm815, %v1835, 0
      %v1842 = vsel %vm815, %v1837, 0
      %1844 = vmatprep.subr.bf16.mxu0 0
      %1845 = vmatpush1.bf16.xpose.msra.mxu0 0
      %1846 = vmatprep.subr.bf16.mxu0 0
      %1847 = vmatpush1.bf16.xpose.msra.mxu0 0
      %1848 = vmatprep.subr.bf16.mxu0 0
      %1849 = vmatpush1.bf16.xpose.msra.mxu0 0
      %1850 = vmatprep.subr.bf16.mxu0 0
      %1851 = vmatpush1.bf16.xpose.msra.mxu0 0
      %1852 = vmatprep.subr.bf16.mxu0 0
      %1853 = vmatpush1.bf16.xpose.msra.mxu0 0
      %1854 = vmatprep.subr.bf16.mxu0 0
      %1855 = vmatpush1.bf16.xpose.msra.mxu0 0
      %1856 = vmatprep.subr.bf16.mxu0 0
      %1857 = vmatpush1.bf16.xpose.msra.mxu0 0
      %1858 = vmatprep.subr.bf16.mxu0 0
      %1859 = vmatpush1.bf16.xpose.msra.mxu0 %v1842
      %1860 = vmatprep.subr.bf16.mxu0 0
      %1861 = vmatpush2.bf16.xpose.msra.mxu0 0
      %1862 = vmatprep.subr.bf16.mxu0 0
      %1863 = vmatpush2.bf16.xpose.msra.mxu0 0
      %1864 = vmatprep.subr.bf16.mxu0 0
      %1865 = vmatpush2.bf16.xpose.msra.mxu0 0
      %1866 = vmatprep.subr.bf16.mxu0 0
      %1867 = vmatpush2.bf16.xpose.msra.mxu0 0
      %1868 = vmatprep.subr.bf16.mxu0 0
      %1869 = vmatpush2.bf16.xpose.msra.mxu0 0
      %1870 = vmatprep.subr.bf16.mxu0 0
      %1871 = vmatpush2.bf16.xpose.msra.mxu0 0
      %1872 = vmatprep.subr.bf16.mxu0 0
      %1873 = vmatpush2.bf16.xpose.msra.mxu0 0
      %1874 = vmatprep.subr.bf16.mxu0 0
      %1875 = vmatpush2.bf16.xpose.msra.mxu0 0
      %1876 = vmatprep.mubr.bf16.mxu0 0
      %1877 = vmatmul.mubr.bf16.gmra.mxu0 %v1839
      %v1878 = vpop.f32.mrf.mxu0
      %v1879 = vadd.f32 %v1484, %v1878
      %v1880 = vpop.f32.mrf.mxu0
      %v1881 = vpop.f32.mrf.mxu0
      %v1882 = vpop.f32.mrf.mxu0
      %1883 = vdwg.mxu0
      %v1884 = vsel %vm815, %v1879, -inf
      %1885 = vmax.xlane.f32.xlu0 %v1884
      %v1886 = vpop.xlane.xlu0 %1885
      %v1887 = vsub.f32 %v1879, %v1886
      %v1888 = vmul.f32 %v1887, 1.442695
      %v1889 = vpow.pop %v1888
      %v1890 = vsel %vm815, %v1889, 0.0
      %1891 = vadd.xlane.f32.xlu0 %v1890
      %v1892 = vpop.xlane.xlu0 %1891
      %v1893 = vrcp.pop %v1892
      %v1894 = vmul.f32 %v1889, %v1893
      %v1895 = vpack.c.bf16 %v1894, %v1894
      %1896 = vrot.lane.b32.xlu0 %v1494, 72
      %v1897 = vpop.permute.xlu0 %1896
      %v1899 = vsel %vm815, %v1895, 0
      %v1902 = vsel %vm879, %v1897, 0
      %1904 = vmatprep.subr.bf16.mxu0 0
      %1905 = vmatpush1.bf16.msra.mxu0 0
      %1906 = vmatprep.subr.bf16.mxu0 0
      %1907 = vmatpush1.bf16.msra.mxu0 0
      %1908 = vmatprep.subr.bf16.mxu0 0
      %1909 = vmatpush1.bf16.msra.mxu0 0
      %1910 = vmatprep.subr.bf16.mxu0 0
      %1911 = vmatpush1.bf16.msra.mxu0 0
      %1912 = vmatprep.subr.bf16.mxu0 0
      %1913 = vmatpush1.bf16.msra.mxu0 0
      %1914 = vmatprep.subr.bf16.mxu0 0
      %1915 = vmatpush1.bf16.msra.mxu0 0
      %1916 = vmatprep.subr.bf16.mxu0 0
      %1917 = vmatpush1.bf16.msra.mxu0 0
      %1918 = vmatprep.subr.bf16.mxu0 0
      %1919 = vmatpush1.bf16.msra.mxu0 %v1902
      %1920 = vmatprep.subr.bf16.mxu0 0
      %1921 = vmatpush2.bf16.msra.mxu0 0
      %1922 = vmatprep.subr.bf16.mxu0 0
      %1923 = vmatpush2.bf16.msra.mxu0 0
      %1924 = vmatprep.subr.bf16.mxu0 0
      %1925 = vmatpush2.bf16.msra.mxu0 0
      %1926 = vmatprep.subr.bf16.mxu0 0
      %1927 = vmatpush2.bf16.msra.mxu0 0
      %1928 = vmatprep.subr.bf16.mxu0 0
      %1929 = vmatpush2.bf16.msra.mxu0 0
      %1930 = vmatprep.subr.bf16.mxu0 0
      %1931 = vmatpush2.bf16.msra.mxu0 0
      %1932 = vmatprep.subr.bf16.mxu0 0
      %1933 = vmatpush2.bf16.msra.mxu0 0
      %1934 = vmatprep.subr.bf16.mxu0 0
      %1935 = vmatpush2.bf16.msra.mxu0 0
      %1936 = vmatprep.mubr.bf16.mxu0 0
      %1937 = vmatmul.mubr.bf16.gmra.mxu0 %v1899
      %v1938 = vpop.f32.mrf.mxu0
      %v1939 = vadd.f32 0.0, %v1938
      %v1940 = vpop.f32.mrf.mxu0
      %v1941 = vpop.f32.mrf.mxu0
      %v1942 = vpop.f32.mrf.mxu0
      %1943 = vdwg.mxu0
      %1945 = vrot.lane.b32.xlu0 %v1939, 24
      %v1946 = vpop.permute.xlu0 %1945
      %1948 = vst.msk [vmem:[#allocation2] sm:$0xff] %vm1271, %v1946
      %v1949 = vld [vmem:[#allocation2] sm:$0xff]
      %v1950 = vpack.c.bf16 %v1949, %v1949
      %v1952 = vlaneseq
      %v1953 = vshrl.u32 %v1952, 7
      %v1954 = vsub.s32 0, %v1953
      %v1955 = vrot.slane %v1489, %v1954
      %v1961 = vunpack.c.l.b16 %v1485
      %v1962 = vunpack.c.l.b16 %v1486
      %v1963 = vunpack.c.l.b16 %v1487
      %v1964 = vunpack.c.l.b16 %v1488
      %v1965 = vpack.c.b16 %v1962, %v1961
      %v1966 = vpack.c.b16 %v1964, %v1963
      %v1970 = vsel %vm757, %v1950, 0
      %1972 = vmatprep.subr.bf16.mxu0 0
      %1973 = vmatpush1.bf16.msra.mxu0 0
      %1974 = vmatprep.subr.bf16.mxu0 0
      %1975 = vmatpush1.bf16.msra.mxu0 0
      %1976 = vmatprep.subr.bf16.mxu0 0
      %1977 = vmatpush1.bf16.msra.mxu0 0
      %1978 = vmatprep.subr.bf16.mxu0 0
      %1979 = vmatpush1.bf16.msra.mxu0 0
      %1980 = vmatprep.subr.bf16.mxu0 0
      %1981 = vmatpush1.bf16.msra.mxu0 0
      %1982 = vmatprep.subr.bf16.mxu0 0
      %1983 = vmatpush1.bf16.msra.mxu0 0
      %1984 = vmatprep.subr.bf16.mxu0 0
      %1985 = vmatpush1.bf16.msra.mxu0 %v1966
      %1986 = vmatprep.subr.bf16.mxu0 0
      %1987 = vmatpush1.bf16.msra.mxu0 %v1965
      %1988 = vmatprep.subr.bf16.mxu0 0
      %1989 = vmatpush2.bf16.msra.mxu0 0
      %1990 = vmatprep.subr.bf16.mxu0 0
      %1991 = vmatpush2.bf16.msra.mxu0 0
      %1992 = vmatprep.subr.bf16.mxu0 0
      %1993 = vmatpush2.bf16.msra.mxu0 0
      %1994 = vmatprep.subr.bf16.mxu0 0
      %1995 = vmatpush2.bf16.msra.mxu0 0
      %1996 = vmatprep.subr.bf16.mxu0 0
      %1997 = vmatpush2.bf16.msra.mxu0 0
      %1998 = vmatprep.subr.bf16.mxu0 0
      %1999 = vmatpush2.bf16.msra.mxu0 0
      %2000 = vmatprep.subr.bf16.mxu0 0
      %2001 = vmatpush2.bf16.msra.mxu0 0
      %2002 = vmatprep.subr.bf16.mxu0 0
      %2003 = vmatpush2.bf16.msra.mxu0 0
      %2004 = vmatprep.mubr.bf16.mxu0 0
      %2005 = vmatmul.mubr.bf16.gmra.mxu0 %v1970
      %v2006 = vpop.f32.mrf.mxu0
      %v2007 = vadd.f32 %v1955, %v2006
      %v2008 = vpop.f32.mrf.mxu0
      %v2009 = vpop.f32.mrf.mxu0
      %v2010 = vpop.f32.mrf.mxu0
      %2011 = vdwg.mxu0
      %v2012 = vadd.f32 %v2007, %v1364
      %v2013 = vsel %vm757, %v2012, 0.0
      %2014 = vadd.xlane.f32.xlu0 %v2013
      %v2015 = vpop.xlane.xlu0 %2014
      %v2016 = vmul.f32 %v2015, %v1340
      %v2017 = vsub.f32 %v2012, %v2016
      %v2018 = vmul.f32 %v2017, %v2017
      %v2019 = vsel %vm757, %v2018, 0.0
      %2020 = vadd.xlane.f32.xlu0 %v2019
      %v2021 = vpop.xlane.xlu0 %2020
      %v2022 = vmul.f32 %v2021, %v1340
      %v2023 = vadd.f32 %v2022, 1e-05
      %v2024 = vrsqrt.pop %v2023
      %v2025 = vmul.f32 %v2017, %v2024
      %v2027 = vlaneseq
      %v2028 = vshrl.u32 %v2027, 7
      %v2029 = vsub.s32 0, %v2028
      %v2030 = vrot.slane %v1490, %v2029
      %v2032 = vmul.f32 %v2025, %v2030
      %v2034 = vlaneseq
      %v2035 = vshrl.u32 %v2034, 7
      %v2036 = vsub.s32 0, %v2035
      %v2037 = vrot.slane %v1491, %v2036
      %v2039 = vadd.f32 %v2032, %v2037
      %v2040 = vpack.c.bf16 %v2039, %v2039
      %v2041 = vld [vmem:[%s16] sm:$0xf]
      %v2042 = vld [vmem:[%s16 + $0x4] sm:$0xf]
      %v2043 = vld [vmem:[%s16 + $0x8] sm:$0xf]
      %v2044 = vld [vmem:[%s16 + $0xc] sm:$0xf]
      %v2045 = vld [vmem:[%s17] sm:$0x1]
      %v2047 = vlaneseq
      %v2048 = vshrl.u32 %v2047, 7
      %v2049 = vsub.s32 0, %v2048
      %v2050 = vrot.slane %v2045, %v2049
      %v2056 = vunpack.c.l.b16 %v2041
      %v2057 = vunpack.c.l.b16 %v2042
      %v2058 = vunpack.c.l.b16 %v2043
      %v2059 = vunpack.c.l.b16 %v2044
      %v2060 = vpack.c.b16 %v2057, %v2056
      %v2061 = vpack.c.b16 %v2059, %v2058
      %v2065 = vsel %vm757, %v2040, 0
      %2067 = vmatprep.subr.bf16.mxu0 0
      %2068 = vmatpush1.bf16.msra.mxu0 0
      %2069 = vmatprep.subr.bf16.mxu0 0
      %2070 = vmatpush1.bf16.msra.mxu0 0
      %2071 = vmatprep.subr.bf16.mxu0 0
      %2072 = vmatpush1.bf16.msra.mxu0 0
      %2073 = vmatprep.subr.bf16.mxu0 0
      %2074 = vmatpush1.bf16.msra.mxu0 0
      %2075 = vmatprep.subr.bf16.mxu0 0
      %2076 = vmatpush1.bf16.msra.mxu0 0
      %2077 = vmatprep.subr.bf16.mxu0 0
      %2078 = vmatpush1.bf16.msra.mxu0 0
      %2079 = vmatprep.subr.bf16.mxu0 0
      %2080 = vmatpush1.bf16.msra.mxu0 %v2061
      %2081 = vmatprep.subr.bf16.mxu0 0
      %2082 = vmatpush1.bf16.msra.mxu0 %v2060
      %2083 = vmatprep.subr.bf16.mxu0 0
      %2084 = vmatpush2.bf16.msra.mxu0 0
      %2085 = vmatprep.subr.bf16.mxu0 0
      %2086 = vmatpush2.bf16.msra.mxu0 0
      %2087 = vmatprep.subr.bf16.mxu0 0
      %2088 = vmatpush2.bf16.msra.mxu0 0
      %2089 = vmatprep.subr.bf16.mxu0 0
      %2090 = vmatpush2.bf16.msra.mxu0 0
      %2091 = vmatprep.subr.bf16.mxu0 0
      %2092 = vmatpush2.bf16.msra.mxu0 0
      %2093 = vmatprep.subr.bf16.mxu0 0
      %2094 = vmatpush2.bf16.msra.mxu0 0
      %2095 = vmatprep.subr.bf16.mxu0 0
      %2096 = vmatpush2.bf16.msra.mxu0 0
      %2097 = vmatprep.subr.bf16.mxu0 0
      %2098 = vmatpush2.bf16.msra.mxu0 0
      %2099 = vmatprep.mubr.bf16.mxu0 0
      %2100 = vmatmul.mubr.bf16.gmra.mxu0 %v2065
      %v2101 = vpop.f32.mrf.mxu0
      %v2102 = vadd.f32 %v2050, %v2101
      %v2103 = vpop.f32.mrf.mxu0
      %v2104 = vpop.f32.mrf.mxu0
      %v2105 = vpop.f32.mrf.mxu0
      %2106 = vdwg.mxu0
      %v2107 = vmax.f32 %v2102, 0.0
      %v2108 = vpack.c.bf16 %v2107, %v2107
      %v2109 = vld [vmem:[%s18] sm:$0xf]
      %v2110 = vld [vmem:[%s18 + $0x4] sm:$0xf]
      %v2111 = vld [vmem:[%s18 + $0x8] sm:$0xf]
      %v2112 = vld [vmem:[%s18 + $0xc] sm:$0xf]
      %v2113 = vld [vmem:[%s18 + $0x10] sm:$0xf]
      %v2114 = vld [vmem:[%s18 + $0x14] sm:$0xf]
      %v2115 = vld [vmem:[%s18 + $0x18] sm:$0xf]
      %v2116 = vld [vmem:[%s18 + $0x1c] sm:$0xf]
      %v2117 = vld [vmem:[%s19] sm:$0x1]
      %v2119 = vlaneseq
      %v2120 = vshrl.u32 %v2119, 7
      %v2121 = vsub.s32 0, %v2120
      %v2122 = vrot.slane %v2117, %v2121
      %v2132 = vunpack.c.l.b16 %v2109
      %v2133 = vunpack.c.l.b16 %v2110
      %v2134 = vunpack.c.l.b16 %v2111
      %v2135 = vunpack.c.l.b16 %v2112
      %v2136 = vunpack.c.l.b16 %v2113
      %v2137 = vunpack.c.l.b16 %v2114
      %v2138 = vunpack.c.l.b16 %v2115
      %v2139 = vunpack.c.l.b16 %v2116
      %v2140 = vpack.c.b16 %v2133, %v2132
      %v2141 = vpack.c.b16 %v2135, %v2134
      %v2142 = vpack.c.b16 %v2137, %v2136
      %v2143 = vpack.c.b16 %v2139, %v2138
      %vm2148 = vcmask 523264
      %v2150 = vsel %vm2148, %v2108, 0
      %2152 = vmatprep.subr.bf16.mxu0 0
      %2153 = vmatpush1.bf16.msra.mxu0 0
      %2154 = vmatprep.subr.bf16.mxu0 0
      %2155 = vmatpush1.bf16.msra.mxu0 0
      %2156 = vmatprep.subr.bf16.mxu0 0
      %2157 = vmatpush1.bf16.msra.mxu0 0
      %2158 = vmatprep.subr.bf16.mxu0 0
      %2159 = vmatpush1.bf16.msra.mxu0 0
      %2160 = vmatprep.subr.bf16.mxu0 0
      %2161 = vmatpush1.bf16.msra.mxu0 %v2143
      %2162 = vmatprep.subr.bf16.mxu0 0
      %2163 = vmatpush1.bf16.msra.mxu0 %v2142
      %2164 = vmatprep.subr.bf16.mxu0 0
      %2165 = vmatpush1.bf16.msra.mxu0 %v2141
      %2166 = vmatprep.subr.bf16.mxu0 0
      %2167 = vmatpush1.bf16.msra.mxu0 %v2140
      %2168 = vmatprep.subr.bf16.mxu0 0
      %2169 = vmatpush2.bf16.msra.mxu0 0
      %2170 = vmatprep.subr.bf16.mxu0 0
      %2171 = vmatpush2.bf16.msra.mxu0 0
      %2172 = vmatprep.subr.bf16.mxu0 0
      %2173 = vmatpush2.bf16.msra.mxu0 0
      %2174 = vmatprep.subr.bf16.mxu0 0
      %2175 = vmatpush2.bf16.msra.mxu0 0
      %2176 = vmatprep.subr.bf16.mxu0 0
      %2177 = vmatpush2.bf16.msra.mxu0 0
      %2178 = vmatprep.subr.bf16.mxu0 0
      %2179 = vmatpush2.bf16.msra.mxu0 0
      %2180 = vmatprep.subr.bf16.mxu0 0
      %2181 = vmatpush2.bf16.msra.mxu0 0
      %2182 = vmatprep.subr.bf16.mxu0 0
      %2183 = vmatpush2.bf16.msra.mxu0 0
      %2184 = vmatprep.mubr.bf16.mxu0 0
      %2185 = vmatmul.mubr.bf16.gmra.mxu0 %v2150
      %v2186 = vpop.f32.mrf.mxu0
      %v2187 = vadd.f32 %v2122, %v2186
      %v2188 = vpop.f32.mrf.mxu0
      %v2189 = vpop.f32.mrf.mxu0
      %v2190 = vpop.f32.mrf.mxu0
      %2191 = vdwg.mxu0
      %v2192 = vadd.f32 %v2187, %v2039
      %v2193 = vld [vmem:[%s20] sm:$0x1]
      %v2194 = vld [vmem:[%s21] sm:$0x1]
      %v2195 = vsel %vm757, %v2192, 0.0
      %2196 = vadd.xlane.f32.xlu0 %v2195
      %v2197 = vpop.xlane.xlu0 %2196
      %v2198 = vmul.f32 %v2197, %v1340
      %v2199 = vsub.f32 %v2192, %v2198
      %v2200 = vmul.f32 %v2199, %v2199
      %v2201 = vsel %vm757, %v2200, 0.0
      %2202 = vadd.xlane.f32.xlu0 %v2201
      %v2203 = vpop.xlane.xlu0 %2202
      %v2204 = vmul.f32 %v2203, %v1340
      %v2205 = vadd.f32 %v2204, 1e-05
      %v2206 = vrsqrt.pop %v2205
      %v2207 = vmul.f32 %v2199, %v2206
      %v2209 = vlaneseq
      %v2210 = vshrl.u32 %v2209, 7
      %v2211 = vsub.s32 0, %v2210
      %v2212 = vrot.slane %v2193, %v2211
      %v2214 = vmul.f32 %v2207, %v2212
      %v2216 = vlaneseq
      %v2217 = vshrl.u32 %v2216, 7
      %v2218 = vsub.s32 0, %v2217
      %v2219 = vrot.slane %v2194, %v2218
      %v2221 = vadd.f32 %v2214, %v2219
      %2222 = vst.msk [vmem:[%s729] sm:$0xff] %vm757, %v2221
      %p2223 = scmp.lt.s32.totalorder %s33, 1
      %s2224 = scalar_select %p2223, %s33, 1
      %s2225 = smul.addr %s2224, 8
      %s2226 = scalar_lea.vmem %s22, %s2225
      // Predicated region
      $region109: #{decoder_forward.2} parent=107 // pred_check
        %p2227 = pneg %p533
      $region110: #{decoder_forward.2} parent=107 // pred_check_branch
        %2229 = sbr.rel (%p2227) target = $region112
      $region111: #{decoder_forward.2} parent=107 // pred_region
        _
      $region112: #{decoder_forward.2} parent=107 // pred_fallthru
        _
    $region108: #{decoder_forward.2} parent=5 // pred_fallthru
      _
    %p2230 = scmp.le.s32.totalorder 2, %s28
    // Predicated region
    $region113: #{decoder_forward.2} parent=5 // pred_check
      %p2231 = pneg %p2230
    $region114: #{decoder_forward.2} parent=5 // pred_check_branch
      %2233 = sbr.rel (%p2231) target = $region116
    $region115: #{decoder_forward.2} parent=5 // pred_region
      %s2234 = ssub.s32 %s28, 2
      // Predicated region
      $region117: #{decoder_forward.2} parent=115 // pred_check
        %p2235 = pneg %p539
      $region118: #{decoder_forward.2} parent=115 // pred_check_branch
        %2237 = sbr.rel (%p2235) target = $region120
      $region119: #{decoder_forward.2} parent=115 // pred_region
        %p2238 = scmp.lt.s32.totalorder %s34, 1
        %s2239 = scalar_select %p2238, %s34, 1
        %s2240 = smul.addr %s2239, 8
        %s2241 = scalar_lea.vmem %s22, %s2240
      $region120: #{decoder_forward.2} parent=115 // pred_fallthru
        _
    $region116: #{decoder_forward.2} parent=5 // pred_fallthru
      _
  $region6: #{decoder_forward.2} parent=0 // loop_footer
    %s32 = sadd.s32 1, %s28
  $region7: #{decoder_forward.2} parent=0 // loop_footer_branch
    %27 = sbr.rel target = $region3
  $region8: #{decoder_forward.2} parent=0 // loop_exit
    _

</llo_original>
